<compile_context>
chip_gen: v7x
topology: tpu7x:2x2x1
jax: 0.10.0
libtpu: 0.0.40
codegen_flags: <defaults>
</compile_context>

<pallas_src>
import jax
import jax.numpy as jnp
from jax.experimental import pallas as pl
from jax.experimental.pallas import tpu as pltpu

INPUT_LEN = 16
SHARED = [32, 32]
POLICY_HEAD = [32]
VALUE_HEAD = [32]
N_ACTIONS = 6

HID = 64       # fused (policy | value) head width == padded trunk width
OUT_W = 8      # merged output rows: 6 policy + 1 value + 1 pad
IN_ROWS = 24   # fused input slab rows: 16 features + 6 mask + 1 one + 1 pad
WM_ROWS = 136  # packed main weight slab rows: 64 (trunk1) + 64 (head hidden) + 8 (head out)
NB = 8         # bias slab lane width


def _pvff_kernel(in_ref, w0_ref, wm_ref, b_ref, out_ref):
    # --- fused input slab: features + mask, batch on the lane axis -----------
    x = in_ref[0:INPUT_LEN, :]                       # (16, TB)
    mask8 = in_ref[INPUT_LEN:INPUT_LEN + OUT_W, :]   # (8, TB): rows 0:6 mask, row 6 = 1, row 7 = 0

    # --- static, 8-row-aligned views into the packed (pre-transposed) weights -
    w0t = w0_ref[...]              # (64, 16)  trunk layer 0   (rows 0:32 live)
    w1t = wm_ref[0:64, :]          # (64, 64)  trunk layer 1   (rows/cols 0:32 live)
    wht = wm_ref[64:128, :]        # (64, 64)  fused head hidden (policy rows 0:32 | value rows 32:64)
    wot = wm_ref[128:136, :]       # (8, 64)   fused head output (policy rows 0:6 | value row 6)
    b0 = b_ref[:, 0:1]             # (64, 1)
    b1 = b_ref[:, 1:2]             # (64, 1)
    bh = b_ref[:, 2:3]             # (64, 1)
    bo = b_ref[0:OUT_W, 3:4]       # (8, 1)

    dot = lambda a, b: jnp.dot(a, b, precision=jax.lax.Precision.HIGHEST,
                               preferred_element_type=jnp.float32)

    # --- shared trunk (padded rows stay exactly 0) ----------------------------
    h = jnp.maximum(dot(w0t, x) + b0, 0.0)           # (64, TB)
    h = jnp.maximum(dot(w1t, h) + b1, 0.0)           # (64, TB)
    # --- fused policy/value head hidden: rows 0:32 policy, rows 32:64 value ---
    hh = jnp.maximum(dot(wht, h) + bh, 0.0)          # (64, TB)
    # --- fused head output: rows 0:6 policy logits, row 6 value pre-act -------
    out8 = dot(wot, hh) + bo                         # (8, TB)

    # Mask logits BEFORE softmax, exactly like the PyTorch module (logits * mask).
    # mask8 row 6 == 1 leaves the value pre-activation untouched.
    masked = out8 * mask8

    row = jax.lax.broadcasted_iota(jnp.int32, masked.shape, 0)
    is_pol = row < N_ACTIONS
    is_val = row == N_ACTIONS

    # Softmax over the 6 policy rows only (branch-free; non-policy rows get
    # -1e30 logits so exp() is exactly 0 and never pollutes the denominator).
    logits = jnp.where(is_pol, masked, jnp.float32(-1e30))
    m = jnp.max(logits, axis=0, keepdims=True)       # (1, TB)
    e = jnp.exp(logits - m)                          # rows 6,7 -> 0
    denom = jnp.sum(e, axis=0, keepdims=True)        # (1, TB)
    pol = e * pl.reciprocal(denom)                   # exact reciprocal (keeps 1e-5 tolerance)

    val = jnp.tanh(masked)                           # only row 6 is kept

    out_ref[...] = jnp.where(is_pol, pol, jnp.where(is_val, val, jnp.float32(0.0)))


def init_params(key):
    """Deterministic parameter init. Weights stored as (in, out), biases as (1, out)."""
    dims_shared = [INPUT_LEN, *SHARED]
    dims_policy = [SHARED[-1], *POLICY_HEAD, N_ACTIONS]
    dims_value = [SHARED[-1], *VALUE_HEAD, 1]

    params = []
    for dims in (dims_shared, dims_policy, dims_value):
        for fan_in, fan_out in zip(dims, dims[1:]):
            key, kw, kb = jax.random.split(key, 3)
            bound = 1.0 / jnp.sqrt(fan_in)
            w = jax.random.uniform(kw, (fan_in, fan_out), jnp.float32, -bound, bound)
            b = jax.random.uniform(kb, (1, fan_out), jnp.float32, -bound, bound)
            params += [w, b]
    return params


def pack_params(params):
    """Pack the 12 raw tensors into three pre-transposed (out, in) f32 slabs."""
    (w0, b0, w1, b1, wp0, bp0, wp1, bp1, wv0, bv0, wv1, bv1) = params
    S = SHARED[-1]   # 32

    w0t = jnp.zeros((HID, INPUT_LEN), jnp.float32).at[0:S, :].set(w0.T)

    wmain = jnp.zeros((WM_ROWS, HID), jnp.float32)
    wmain = wmain.at[0:S, 0:S].set(w1.T)                        # trunk layer 1
    wmain = wmain.at[64:64 + S, 0:S].set(wp0.T)                 # policy head hidden
    wmain = wmain.at[96:96 + S, 0:S].set(wv0.T)                 # value head hidden
    wmain = wmain.at[128:128 + N_ACTIONS, 0:S].set(wp1.T)       # policy logits rows
    wmain = wmain.at[128 + N_ACTIONS, S:2 * S].set(wv1[:, 0])   # value output row

    bslab = jnp.zeros((HID, NB), jnp.float32)
    bslab = bslab.at[0:S, 0].set(b0[0])
    bslab = bslab.at[0:S, 1].set(b1[0])
    bslab = bslab.at[0:S, 2].set(bp0[0])
    bslab = bslab.at[S:2 * S, 2].set(bv0[0])
    bslab = bslab.at[0:N_ACTIONS, 3].set(bp1[0])
    bslab = bslab.at[N_ACTIONS, 3].set(bv1[0, 0])
    return w0t, wmain, bslab


def _round_up(n, m):
    return ((n + m - 1) // m) * m


def policy_value_forward(representation, legal_moves_mask, packed, *, tile_b=None):
    w0t, wmain, bslab = packed
    B = representation.shape[0]

    # Batch tile sits on the lane axis -> multiple of 128.  One big tile whenever
    # the batch fits (best for single-TC v5e/v6e); batches > 4096 naturally split
    # into >=2 "parallel" grid steps, which v7x shards across its two TensorCores.
    if tile_b is None:
        tile_b = min(4096, _round_up(B, 128))
    tile_b = _round_up(tile_b, 128)
    Bp = _round_up(B, tile_b)

    # Fused feature-major input slab (features + mask), batch on the lane axis.
    xin = jnp.zeros((IN_ROWS, Bp), jnp.float32)
    xin = xin.at[0:INPUT_LEN, 0:B].set(representation.astype(jnp.float32).T)
    xin = xin.at[INPUT_LEN:INPUT_LEN + N_ACTIONS, 0:B].set(
        legal_moves_mask.astype(jnp.float32).T)
    xin = xin.at[INPUT_LEN + N_ACTIONS, 0:B].set(1.0)   # value pass-through lane

    grid = (Bp // tile_b,)
    out = pl.pallas_call(
        _pvff_kernel,
        out_shape=jax.ShapeDtypeStruct((OUT_W, Bp), jnp.float32),
        grid_spec=pltpu.PrefetchScalarGridSpec(
            num_scalar_prefetch=0,
            grid=grid,
            in_specs=[
                pl.BlockSpec((IN_ROWS, tile_b), lambda i: (0, i)),   # pipelined stream
                pl.BlockSpec((HID, INPUT_LEN), lambda i: (0, 0)),    # VMEM-resident weights
                pl.BlockSpec((WM_ROWS, HID), lambda i: (0, 0)),      # VMEM-resident weights
                pl.BlockSpec((HID, NB), lambda i: (0, 0)),           # VMEM-resident biases
            ],
            out_specs=pl.BlockSpec((OUT_W, tile_b), lambda i: (0, i)),
        ),
        compiler_params=pltpu.CompilerParams(
            dimension_semantics=("parallel",)),   # lets v7x shard batch tiles over 2 TCs
    )(xin, w0t, wmain, bslab)

    policy = out[0:N_ACTIONS, 0:B].T
    value = out[N_ACTIONS:N_ACTIONS + 1, 0:B].T
    return policy, value


def _reference(representation, legal_moves_mask, params):
    """Pure-JAX reference mirroring the PyTorch forward."""
    (w0, b0, w1, b1, wp0, bp0, wp1, bp1, wv0, bv0, wv1, bv1) = params
    h = jax.nn.relu(representation @ w0 + b0)
    h = jax.nn.relu(h @ w1 + b1)
    p = jax.nn.relu(h @ wp0 + bp0)
    p = (p @ wp1 + bp1) * legal_moves_mask
    policy = jax.nn.softmax(p, axis=-1)
    v = jax.nn.relu(h @ wv0 + bv0)
    value = jnp.tanh(v @ wv1 + bv1)
    return policy, value


if __name__ == "__main__":
    key = jax.random.PRNGKey(0)
    key, kx, km = jax.random.split(key, 3)

    B = 8
    representation = jax.random.normal(kx, (B, INPUT_LEN), jnp.float32)
    # binary legal-move mask (at least one move legal per row)
    legal_moves_mask = (jax.random.uniform(km, (B, N_ACTIONS)) > 0.3).astype(jnp.float32)
    legal_moves_mask = legal_moves_mask.at[:, 0].set(1.0)

    params = init_params(key)
    packed = pack_params(params)

    policy, value = policy_value_forward(representation, legal_moves_mask, packed)
    jax.block_until_ready((policy, value))

    ref_policy, ref_value = _reference(representation, legal_moves_mask, params)
    assert policy.shape == (B, N_ACTIONS) and value.shape == (B, 1)
    assert jnp.allclose(policy, ref_policy, atol=1e-5, rtol=1e-5)
    assert jnp.allclose(value, ref_value, atol=1e-5, rtol=1e-5)

    # Second check: ragged batch exercising the multi-step batch grid + padding.
    B2 = 300
    key, kx2, km2 = jax.random.split(key, 3)
    rep2 = jax.random.normal(kx2, (B2, INPUT_LEN), jnp.float32)
    mask2 = (jax.random.uniform(km2, (B2, N_ACTIONS)) > 0.3).astype(jnp.float32)
    mask2 = mask2.at[:, 0].set(1.0)
    p2, v2 = policy_value_forward(rep2, mask2, packed, tile_b=128)
    jax.block_until_ready((p2, v2))
    rp2, rv2 = _reference(rep2, mask2, params)
    assert jnp.allclose(p2, rp2, atol=1e-5, rtol=1e-5)
    assert jnp.allclose(v2, rv2, atol=1e-5, rtol=1e-5)

    print("KERNEL_OK")
</pallas_src>

<mosaic_0001>
module attributes {stable_mosaic.version = 11 : i64} {
  func.func @_pvff_kernel(%arg0: i32, %arg1: memref<24x128xf32, #tpu.memory_space<vmem>>, %arg2: memref<64x16xf32, #tpu.memory_space<vmem>>, %arg3: memref<136x64xf32, #tpu.memory_space<vmem>>, %arg4: memref<64x8xf32, #tpu.memory_space<vmem>>, %arg5: memref<8x128xf32, #tpu.memory_space<vmem>>) attributes {dimension_semantics = [#tpu.dimension_semantics<parallel>], iteration_bounds = array<i64: 1>, scalar_prefetch = 0 : i64, scratch_operands = 0 : i64, tpu.core_type = #tpu.core_type<tc>, window_params = [{transform_indices = @transform_0, window_bounds = array<i64: 24, 128>}, {pipeline_mode = #tpu.pipeline_mode<synchronous>, transform_indices = @transform_1, window_bounds = array<i64: 64, 16>}, {pipeline_mode = #tpu.pipeline_mode<synchronous>, transform_indices = @transform_2, window_bounds = array<i64: 136, 64>}, {pipeline_mode = #tpu.pipeline_mode<synchronous>, transform_indices = @transform_3, window_bounds = array<i64: 64, 8>}, {transform_indices = @transform_4, window_bounds = array<i64: 8, 128>}]} {
    %c0 = arith.constant 0 : index
    %c0_0 = arith.constant 0 : index
    %0 = vector.load %arg1[%c0, %c0_0] : memref<24x128xf32, #tpu.memory_space<vmem>>, vector<16x128xf32>
    %c16 = arith.constant 16 : index
    %c0_1 = arith.constant 0 : index
    %1 = vector.load %arg1[%c16, %c0_1] : memref<24x128xf32, #tpu.memory_space<vmem>>, vector<8x128xf32>
    %c0_2 = arith.constant 0 : index
    %c0_3 = arith.constant 0 : index
    %2 = vector.load %arg2[%c0_2, %c0_3] : memref<64x16xf32, #tpu.memory_space<vmem>>, vector<64x16xf32>
    %c0_4 = arith.constant 0 : index
    %c0_5 = arith.constant 0 : index
    %3 = vector.load %arg3[%c0_4, %c0_5] : memref<136x64xf32, #tpu.memory_space<vmem>>, vector<64x64xf32>
    %c64 = arith.constant 64 : index
    %c0_6 = arith.constant 0 : index
    %4 = vector.load %arg3[%c64, %c0_6] : memref<136x64xf32, #tpu.memory_space<vmem>>, vector<64x64xf32>
    %c128 = arith.constant 128 : index
    %c0_7 = arith.constant 0 : index
    %5 = vector.load %arg3[%c128, %c0_7] : memref<136x64xf32, #tpu.memory_space<vmem>>, vector<8x64xf32>
    %c0_8 = arith.constant 0 : index
    %c0_9 = arith.constant 0 : index
    %6 = vector.load %arg4[%c0_8, %c0_9] : memref<64x8xf32, #tpu.memory_space<vmem>>, vector<64x1xf32>
    %c0_10 = arith.constant 0 : index
    %c1 = arith.constant 1 : index
    %7 = vector.load %arg4[%c0_10, %c1] : memref<64x8xf32, #tpu.memory_space<vmem>>, vector<64x1xf32>
    %c0_11 = arith.constant 0 : index
    %c2 = arith.constant 2 : index
    %8 = vector.load %arg4[%c0_11, %c2] : memref<64x8xf32, #tpu.memory_space<vmem>>, vector<64x1xf32>
    %c0_12 = arith.constant 0 : index
    %c3 = arith.constant 3 : index
    %9 = vector.load %arg4[%c0_12, %c3] : memref<64x8xf32, #tpu.memory_space<vmem>>, vector<8x1xf32>
    %cst = arith.constant dense<0.000000e+00> : vector<64x128xf32>
    %10 = tpu.matmul %2, %0, %cst {dimension_numbers = #tpu.dot_dimension_numbers<[1], [0], [0], [1], [0, 0, 1, 1], [], []>, precision = #tpu.contract_precision<fp32>} : vector<64x16xf32>, vector<16x128xf32>, vector<64x128xf32> -> vector<64x128xf32>
    %11 = vector.broadcast %6 : vector<64x1xf32> to vector<64x128xf32>
    %12 = arith.addf %10, %11 : vector<64x128xf32>
    %cst_13 = arith.constant 0.000000e+00 : f32
    %13 = vector.broadcast %cst_13 : f32 to vector<64x128xf32>
    %14 = arith.maximumf %12, %13 : vector<64x128xf32>
    %cst_14 = arith.constant dense<0.000000e+00> : vector<64x128xf32>
    %15 = tpu.matmul %3, %14, %cst_14 {dimension_numbers = #tpu.dot_dimension_numbers<[1], [0], [0], [1], [0, 0, 1, 1], [], []>, precision = #tpu.contract_precision<fp32>} : vector<64x64xf32>, vector<64x128xf32>, vector<64x128xf32> -> vector<64x128xf32>
    %16 = vector.broadcast %7 : vector<64x1xf32> to vector<64x128xf32>
    %17 = arith.addf %15, %16 : vector<64x128xf32>
    %cst_15 = arith.constant 0.000000e+00 : f32
    %18 = vector.broadcast %cst_15 : f32 to vector<64x128xf32>
    %19 = arith.maximumf %17, %18 : vector<64x128xf32>
    %cst_16 = arith.constant dense<0.000000e+00> : vector<64x128xf32>
    %20 = tpu.matmul %4, %19, %cst_16 {dimension_numbers = #tpu.dot_dimension_numbers<[1], [0], [0], [1], [0, 0, 1, 1], [], []>, precision = #tpu.contract_precision<fp32>} : vector<64x64xf32>, vector<64x128xf32>, vector<64x128xf32> -> vector<64x128xf32>
    %21 = vector.broadcast %8 : vector<64x1xf32> to vector<64x128xf32>
    %22 = arith.addf %20, %21 : vector<64x128xf32>
    %cst_17 = arith.constant 0.000000e+00 : f32
    %23 = vector.broadcast %cst_17 : f32 to vector<64x128xf32>
    %24 = arith.maximumf %22, %23 : vector<64x128xf32>
    %cst_18 = arith.constant dense<0.000000e+00> : vector<8x128xf32>
    %25 = tpu.matmul %5, %24, %cst_18 {dimension_numbers = #tpu.dot_dimension_numbers<[1], [0], [0], [1], [0, 0, 1, 1], [], []>, precision = #tpu.contract_precision<fp32>} : vector<8x64xf32>, vector<64x128xf32>, vector<8x128xf32> -> vector<8x128xf32>
    %26 = vector.broadcast %9 : vector<8x1xf32> to vector<8x128xf32>
    %27 = arith.addf %25, %26 : vector<8x128xf32>
    %28 = arith.mulf %27, %1 : vector<8x128xf32>
    %29 = tpu.iota {dimensions = array<i32: 0>} : vector<8x128xi32>
    %c6_i32 = arith.constant 6 : i32
    %30 = vector.broadcast %c6_i32 : i32 to vector<8x128xi32>
    %31 = arith.cmpi slt, %29, %30 : vector<8x128xi32>
    %c6_i32_19 = arith.constant 6 : i32
    %32 = vector.broadcast %c6_i32_19 : i32 to vector<8x128xi32>
    %33 = arith.cmpi eq, %29, %32 : vector<8x128xi32>
    %cst_20 = arith.constant -1.000000e+30 : f32
    %34 = vector.broadcast %cst_20 : f32 to vector<8x128xf32>
    %35 = arith.select %31, %28, %34 : vector<8x128xi1>, vector<8x128xf32>
    %cst_21 = arith.constant dense<0xFF800000> : vector<128xf32>
    %36 = vector.multi_reduction <maximumf>, %35, %cst_21 [0] : vector<8x128xf32> to vector<128xf32>
    %37 = vector.shape_cast %36 : vector<128xf32> to vector<1x128xf32>
    %38 = vector.broadcast %37 : vector<1x128xf32> to vector<8x128xf32>
    %39 = arith.subf %35, %38 : vector<8x128xf32>
    %40 = math.exp %39 : vector<8x128xf32>
    %cst_22 = arith.constant dense<0.000000e+00> : vector<128xf32>
    %41 = vector.multi_reduction <add>, %40, %cst_22 [0] : vector<8x128xf32> to vector<128xf32>
    %42 = vector.shape_cast %41 : vector<128xf32> to vector<1x128xf32>
    %43 = tpu.reciprocal %42 : vector<1x128xf32> -> vector<1x128xf32>
    %44 = vector.broadcast %43 : vector<1x128xf32> to vector<8x128xf32>
    %45 = arith.mulf %40, %44 : vector<8x128xf32>
    %46 = math.tanh %28 : vector<8x128xf32>
    %cst_23 = arith.constant 0.000000e+00 : f32
    %47 = vector.broadcast %cst_23 : f32 to vector<8x128xf32>
    %48 = arith.select %33, %46, %47 : vector<8x128xi1>, vector<8x128xf32>
    %49 = arith.select %31, %45, %48 : vector<8x128xi1>, vector<8x128xf32>
    %c0_24 = arith.constant 0 : index
    %c0_25 = arith.constant 0 : index
    %50 = vector.load %arg5[%c0_24, %c0_25] : memref<8x128xf32, #tpu.memory_space<vmem>>, vector<8x128xf32>
    tpu.vector_store %arg5[%c0_24, %c0_25], %49 {strides = array<i32>} : memref<8x128xf32, #tpu.memory_space<vmem>>, vector<8x128xf32>,
    return
  }
  func.func @transform_0(%arg0: i32) -> (i32, i32) {
    %c0_i32 = arith.constant 0 : i32
    %c0_i32_0 = arith.constant 0 : i32
    return %c0_i32, %arg0 : i32, i32
  }
  func.func @transform_1(%arg0: i32) -> (i32, i32) {
    %c0_i32 = arith.constant 0 : i32
    %c0_i32_0 = arith.constant 0 : i32
    %c0_i32_1 = arith.constant 0 : i32
    return %c0_i32, %c0_i32_0 : i32, i32
  }
  func.func @transform_2(%arg0: i32) -> (i32, i32) {
    %c0_i32 = arith.constant 0 : i32
    %c0_i32_0 = arith.constant 0 : i32
    %c0_i32_1 = arith.constant 0 : i32
    return %c0_i32, %c0_i32_0 : i32, i32
  }
  func.func @transform_3(%arg0: i32) -> (i32, i32) {
    %c0_i32 = arith.constant 0 : i32
    %c0_i32_0 = arith.constant 0 : i32
    %c0_i32_1 = arith.constant 0 : i32
    return %c0_i32, %c0_i32_0 : i32, i32
  }
  func.func @transform_4(%arg0: i32) -> (i32, i32) {
    %c0_i32 = arith.constant 0 : i32
    %c0_i32_0 = arith.constant 0 : i32
    return %c0_i32, %arg0 : i32, i32
  }
}

</mosaic_0001>

<llo_original>
// kernel: tpu_custom_call.1
$region0: #{tpu_custom_call.1}
  #allocation0 [shape = 'u32[]', space=smem, size = 0x4, offset = 0x4, fixed_abs, tag = 'smem constant byte address 0x4 - core index']
  #allocation1 [shape = 'u32[144,128]{1,0:T(1,128)}', space=vmem, size = 0x12000, scoped, tag = 'internal scratch']
  %s0 = inlined_call_operand.vmem [shape: f32[24,128], index: 0, kind: input, shape index: {}]
  %s1 = inlined_call_operand.vmem [shape: f32[64,16], index: 1, kind: input, shape index: {}]
  %s2 = inlined_call_operand.vmem [shape: f32[136,64], index: 2, kind: input, shape index: {}]
  %s3 = inlined_call_operand.vmem [shape: f32[64,8], index: 3, kind: input, shape index: {}]
  %s4 = inlined_call_operand.hbm [shape: f32[8,128], index: 4, kind: output, shape index: {}]
  %s5 = sld [smem:[#allocation0]]
  $region26: #{tpu_custom_call.1} parent=0
    _
  %s7 = ssub.s32 1, %s5
  %s8 = scalar_select 0, %s7, %s5
  $region1: #{tpu_custom_call.1} parent=0
    #allocation2 [shape = 'u8[4096]{0}', space=vmem, size = 0x1000, scoped, tag = 'output window, operand 0, single buffered']
    #allocation3 [shape = 's32[1]{0}', space=sflag, size = 0x4, scoped, tag = 'scoped memory for tpu_custom_call.1']
    %9 = vsyncpa [#allocation3], 0
    // Predicated region
    $region2: #{tpu_custom_call.1} parent=1 // pred_check
      _
    $region3: #{tpu_custom_call.1} parent=1 // pred_check_branch
      %11 = sbr.rel (0) target = $region5
    $region4: #{tpu_custom_call.1} parent=1 // pred_region
      _
    $region5: #{tpu_custom_call.1} parent=1 // pred_fallthru
      _
    // Predicated region
    $region6: #{tpu_custom_call.1} parent=1 // pred_check
      _
    $region7: #{tpu_custom_call.1} parent=1 // pred_check_branch
      %13 = sbr.rel (0) target = $region9
    $region8: #{tpu_custom_call.1} parent=1 // pred_region
      _
    $region9: #{tpu_custom_call.1} parent=1 // pred_fallthru
      _
    // Predicated region
    $region10: #{tpu_custom_call.1} parent=1 // pred_check
      _
    $region11: #{tpu_custom_call.1} parent=1 // pred_check_branch
      %15 = sbr.rel (0) target = $region13
    $region12: #{tpu_custom_call.1} parent=1 // pred_region
      _
    $region13: #{tpu_custom_call.1} parent=1 // pred_fallthru
      _
    // Predicated region
    $region14: #{tpu_custom_call.1} parent=1 // pred_check
      _
    $region15: #{tpu_custom_call.1} parent=1 // pred_check_branch
      %17 = sbr.rel (0) target = $region17
    $region16: #{tpu_custom_call.1} parent=1 // pred_region
      _
    $region17: #{tpu_custom_call.1} parent=1 // pred_fallthru
      _
    %v18 = vld [vmem:[%s0] sm:$0xff]
    %v19 = vld [vmem:[%s0 + $0x8] sm:$0xff]
    %v20 = vld [vmem:[%s0 + $0x10] sm:$0xff]
    %v21 = vld [vmem:[%s1] sm:$0xff]
    %v22 = vld [vmem:[%s1 + $0x8] sm:$0xff]
    %v23 = vld [vmem:[%s1 + $0x10] sm:$0xff]
    %v24 = vld [vmem:[%s1 + $0x18] sm:$0xff]
    %v25 = vld [vmem:[%s1 + $0x20] sm:$0xff]
    %v26 = vld [vmem:[%s1 + $0x28] sm:$0xff]
    %v27 = vld [vmem:[%s1 + $0x30] sm:$0xff]
    %v28 = vld [vmem:[%s1 + $0x38] sm:$0xff]
    %v29 = vld [vmem:[%s2] sm:$0xff]
    %v30 = vld [vmem:[%s2 + $0x8] sm:$0xff]
    %v31 = vld [vmem:[%s2 + $0x10] sm:$0xff]
    %v32 = vld [vmem:[%s2 + $0x18] sm:$0xff]
    %v33 = vld [vmem:[%s2 + $0x20] sm:$0xff]
    %v34 = vld [vmem:[%s2 + $0x28] sm:$0xff]
    %v35 = vld [vmem:[%s2 + $0x30] sm:$0xff]
    %v36 = vld [vmem:[%s2 + $0x38] sm:$0xff]
    %v37 = vld [vmem:[%s2 + $0x40] sm:$0xff]
    %v38 = vld [vmem:[%s2 + $0x48] sm:$0xff]
    %v39 = vld [vmem:[%s2 + $0x50] sm:$0xff]
    %v40 = vld [vmem:[%s2 + $0x58] sm:$0xff]
    %v41 = vld [vmem:[%s2 + $0x60] sm:$0xff]
    %v42 = vld [vmem:[%s2 + $0x68] sm:$0xff]
    %v43 = vld [vmem:[%s2 + $0x70] sm:$0xff]
    %v44 = vld [vmem:[%s2 + $0x78] sm:$0xff]
    %v45 = vld [vmem:[%s2 + $0x80] sm:$0xff]
    %v46 = vld [vmem:[%s3] sm:$0xff]
    %v47 = vld [vmem:[%s3 + $0x8] sm:$0xff]
    %v48 = vld [vmem:[%s3 + $0x10] sm:$0xff]
    %v49 = vld [vmem:[%s3 + $0x18] sm:$0xff]
    %v50 = vld [vmem:[%s3 + $0x20] sm:$0xff]
    %v51 = vld [vmem:[%s3 + $0x28] sm:$0xff]
    %v52 = vld [vmem:[%s3 + $0x30] sm:$0xff]
    %v53 = vld [vmem:[%s3 + $0x38] sm:$0xff]
    %55 = vset.pattern.permute.xlu0 0
    %56 = vperm.xlu0 %55, %v46
    %v57 = vpop.permute.xlu0 %56
    %60 = vset.pattern.permute.xlu0 0
    %61 = vperm.xlu0 %60, %v47
    %v62 = vpop.permute.xlu0 %61
    %65 = vset.pattern.permute.xlu0 0
    %66 = vperm.xlu0 %65, %v48
    %v67 = vpop.permute.xlu0 %66
    %70 = vset.pattern.permute.xlu0 0
    %71 = vperm.xlu0 %70, %v49
    %v72 = vpop.permute.xlu0 %71
    %75 = vset.pattern.permute.xlu0 0
    %76 = vperm.xlu0 %75, %v50
    %v77 = vpop.permute.xlu0 %76
    %80 = vset.pattern.permute.xlu0 0
    %81 = vperm.xlu0 %80, %v51
    %v82 = vpop.permute.xlu0 %81
    %85 = vset.pattern.permute.xlu0 0
    %86 = vperm.xlu0 %85, %v52
    %v87 = vpop.permute.xlu0 %86
    %90 = vset.pattern.permute.xlu0 0
    %91 = vperm.xlu0 %90, %v53
    %v92 = vpop.permute.xlu0 %91
    %vm94 = vcmask 130048
    %v96 = vsel %vm94, %v21, 0
    %v99 = vsel %vm94, %v22, 0
    %v102 = vsel %vm94, %v23, 0
    %v105 = vsel %vm94, %v24, 0
    %v108 = vsel %vm94, %v25, 0
    %v111 = vsel %vm94, %v26, 0
    %v114 = vsel %vm94, %v27, 0
    %v117 = vsel %vm94, %v28, 0
    %119 = vmatprep.subr.mxu0 0.0
    %v120 = vand.u32 %v18, 4294901760
    %121 = vmatpush1.msra.mxu0 %v120
    %122 = vmatprep.subr.mxu0 0.0
    %v123 = vand.u32 %v19, 4294901760
    %124 = vmatpush1.msra.mxu0 %v123
    %125 = vmatprep.subr.mxu0 0.0
    %126 = vmatpush1.msra.mxu0 0.0
    %127 = vmatprep.subr.mxu0 0.0
    %128 = vmatpush1.msra.mxu0 0.0
    %129 = vmatprep.subr.mxu0 0.0
    %130 = vmatpush1.msra.mxu0 0.0
    %131 = vmatprep.subr.mxu0 0.0
    %132 = vmatpush1.msra.mxu0 0.0
    %133 = vmatprep.subr.mxu0 0.0
    %134 = vmatpush1.msra.mxu0 0.0
    %135 = vmatprep.subr.mxu0 0.0
    %136 = vmatpush1.msra.mxu0 0.0
    %137 = vmatprep.subr.mxu0 0.0
    %138 = vmatpush1.msra.mxu0 0.0
    %139 = vmatprep.subr.mxu0 0.0
    %140 = vmatpush1.msra.mxu0 0.0
    %141 = vmatprep.subr.mxu0 0.0
    %142 = vmatpush1.msra.mxu0 0.0
    %143 = vmatprep.subr.mxu0 0.0
    %144 = vmatpush1.msra.mxu0 0.0
    %145 = vmatprep.subr.mxu0 0.0
    %146 = vmatpush1.msra.mxu0 0.0
    %147 = vmatprep.subr.mxu0 0.0
    %148 = vmatpush1.msra.mxu0 0.0
    %149 = vmatprep.subr.mxu0 0.0
    %150 = vmatpush1.msra.mxu0 0.0
    %151 = vmatprep.subr.mxu0 0.0
    %152 = vmatpush1.msra.mxu0 0.0
    %153 = vmatprep.subr.mxu0 0.0
    %154 = vmatpush1.msra.mxu0 0.0
    %155 = vmatprep.subr.mxu0 0.0
    %156 = vmatpush1.msra.mxu0 0.0
    %157 = vmatprep.subr.mxu0 0.0
    %158 = vmatpush1.msra.mxu0 0.0
    %159 = vmatprep.subr.mxu0 0.0
    %160 = vmatpush1.msra.mxu0 0.0
    %161 = vmatprep.subr.mxu0 0.0
    %162 = vmatpush1.msra.mxu0 0.0
    %163 = vmatprep.subr.mxu0 0.0
    %164 = vmatpush1.msra.mxu0 0.0
    %165 = vmatprep.subr.mxu0 0.0
    %166 = vmatpush1.msra.mxu0 0.0
    %167 = vmatprep.subr.mxu0 0.0
    %168 = vmatpush1.msra.mxu0 0.0
    %169 = vmatprep.subr.mxu0 0.0
    %170 = vmatpush1.msra.mxu0 0.0
    %171 = vmatprep.subr.mxu0 0.0
    %172 = vmatpush1.msra.mxu0 0.0
    %173 = vmatprep.subr.mxu0 0.0
    %174 = vmatpush1.msra.mxu0 0.0
    %175 = vmatprep.subr.mxu0 0.0
    %176 = vmatpush1.msra.mxu0 0.0
    %177 = vmatprep.subr.mxu0 0.0
    %178 = vmatpush1.msra.mxu0 0.0
    %179 = vmatprep.subr.mxu0 0.0
    %180 = vmatpush1.msra.mxu0 0.0
    %181 = vmatprep.subr.mxu0 0.0
    %182 = vmatpush1.msra.mxu0 0.0
    %183 = vmatprep.subr.mxu0 0.0
    %184 = vmatpush1.msra.mxu0 0.0
    %185 = vmatprep.mubr.f32.mxu0 0.0
    %v186 = vand.u32 %v96, 4294901760
    %v187 = vsub.f32 %v96, %v186
    %v188 = vand.u32 %v187, 4294901760
    %v189 = vsub.f32 %v187, %v188
    %v190 = vand.u32 %v189, 4294901760
    %191 = vmatmul.mubr.f32.gmra.mrb[0].mxu0 %v190
    %v192 = vpop.f32.mrb[0].mxu0
    %v193 = vadd.f32 %v57, %v192
    %v194 = vpop.f32.mrb[0].mxu0
    %195 = vmatprep.mubr.f32.mxu0 0.0
    %v196 = vand.u32 %v99, 4294901760
    %v197 = vsub.f32 %v99, %v196
    %v198 = vand.u32 %v197, 4294901760
    %v199 = vsub.f32 %v197, %v198
    %v200 = vand.u32 %v199, 4294901760
    %201 = vmatmul.mubr.f32.gmra.mrb[0].mxu0 %v200
    %v202 = vpop.f32.mrb[0].mxu0
    %v203 = vadd.f32 %v62, %v202
    %v204 = vpop.f32.mrb[0].mxu0
    %205 = vmatprep.mubr.f32.mxu0 0.0
    %v206 = vand.u32 %v102, 4294901760
    %v207 = vsub.f32 %v102, %v206
    %v208 = vand.u32 %v207, 4294901760
    %v209 = vsub.f32 %v207, %v208
    %v210 = vand.u32 %v209, 4294901760
    %211 = vmatmul.mubr.f32.gmra.mrb[0].mxu0 %v210
    %v212 = vpop.f32.mrb[0].mxu0
    %v213 = vadd.f32 %v67, %v212
    %v214 = vpop.f32.mrb[0].mxu0
    %215 = vmatprep.mubr.f32.mxu0 0.0
    %v216 = vand.u32 %v105, 4294901760
    %v217 = vsub.f32 %v105, %v216
    %v218 = vand.u32 %v217, 4294901760
    %v219 = vsub.f32 %v217, %v218
    %v220 = vand.u32 %v219, 4294901760
    %221 = vmatmul.mubr.f32.gmra.mrb[0].mxu0 %v220
    %v222 = vpop.f32.mrb[0].mxu0
    %v223 = vadd.f32 %v72, %v222
    %v224 = vpop.f32.mrb[0].mxu0
    %225 = vmatprep.mubr.f32.mxu0 0.0
    %v226 = vand.u32 %v108, 4294901760
    %v227 = vsub.f32 %v108, %v226
    %v228 = vand.u32 %v227, 4294901760
    %v229 = vsub.f32 %v227, %v228
    %v230 = vand.u32 %v229, 4294901760
    %231 = vmatmul.mubr.f32.gmra.mrb[0].mxu0 %v230
    %v232 = vpop.f32.mrb[0].mxu0
    %v233 = vadd.f32 %v77, %v232
    %v234 = vpop.f32.mrb[0].mxu0
    %235 = vmatprep.mubr.f32.mxu0 0.0
    %v236 = vand.u32 %v111, 4294901760
    %v237 = vsub.f32 %v111, %v236
    %v238 = vand.u32 %v237, 4294901760
    %v239 = vsub.f32 %v237, %v238
    %v240 = vand.u32 %v239, 4294901760
    %241 = vmatmul.mubr.f32.gmra.mrb[0].mxu0 %v240
    %v242 = vpop.f32.mrb[0].mxu0
    %v243 = vadd.f32 %v82, %v242
    %v244 = vpop.f32.mrb[0].mxu0
    %245 = vmatprep.mubr.f32.mxu0 0.0
    %v246 = vand.u32 %v114, 4294901760
    %v247 = vsub.f32 %v114, %v246
    %v248 = vand.u32 %v247, 4294901760
    %v249 = vsub.f32 %v247, %v248
    %v250 = vand.u32 %v249, 4294901760
    %251 = vmatmul.mubr.f32.gmra.mrb[0].mxu0 %v250
    %v252 = vpop.f32.mrb[0].mxu0
    %v253 = vadd.f32 %v87, %v252
    %v254 = vpop.f32.mrb[0].mxu0
    %255 = vmatprep.mubr.f32.mxu0 0.0
    %v256 = vand.u32 %v117, 4294901760
    %v257 = vsub.f32 %v117, %v256
    %v258 = vand.u32 %v257, 4294901760
    %v259 = vsub.f32 %v257, %v258
    %v260 = vand.u32 %v259, 4294901760
    %261 = vmatmul.mubr.f32.gmra.mrb[0].mxu0 %v260
    %v262 = vpop.f32.mrb[0].mxu0
    %v263 = vadd.f32 %v92, %v262
    %v264 = vpop.f32.mrb[0].mxu0
    %265 = vdwg.mxu0
    %266 = vmatprep.subr.mxu0 0.0
    %v267 = vand.u32 %v18, 4294901760
    %v268 = vsub.f32 %v18, %v267
    %v269 = vand.u32 %v268, 4294901760
    %v270 = vsub.f32 %v268, %v269
    %v271 = vand.u32 %v270, 4294901760
    %272 = vmatpush1.msra.mxu0 %v271
    %273 = vmatprep.subr.mxu0 0.0
    %v274 = vand.u32 %v19, 4294901760
    %v275 = vsub.f32 %v19, %v274
    %v276 = vand.u32 %v275, 4294901760
    %v277 = vsub.f32 %v275, %v276
    %v278 = vand.u32 %v277, 4294901760
    %279 = vmatpush1.msra.mxu0 %v278
    %280 = vmatprep.subr.mxu0 0.0
    %281 = vmatpush1.msra.mxu0 0.0
    %282 = vmatprep.subr.mxu0 0.0
    %283 = vmatpush1.msra.mxu0 0.0
    %284 = vmatprep.subr.mxu0 0.0
    %285 = vmatpush1.msra.mxu0 0.0
    %286 = vmatprep.subr.mxu0 0.0
    %287 = vmatpush1.msra.mxu0 0.0
    %288 = vmatprep.subr.mxu0 0.0
    %289 = vmatpush1.msra.mxu0 0.0
    %290 = vmatprep.subr.mxu0 0.0
    %291 = vmatpush1.msra.mxu0 0.0
    %292 = vmatprep.subr.mxu0 0.0
    %293 = vmatpush1.msra.mxu0 0.0
    %294 = vmatprep.subr.mxu0 0.0
    %295 = vmatpush1.msra.mxu0 0.0
    %296 = vmatprep.subr.mxu0 0.0
    %297 = vmatpush1.msra.mxu0 0.0
    %298 = vmatprep.subr.mxu0 0.0
    %299 = vmatpush1.msra.mxu0 0.0
    %300 = vmatprep.subr.mxu0 0.0
    %301 = vmatpush1.msra.mxu0 0.0
    %302 = vmatprep.subr.mxu0 0.0
    %303 = vmatpush1.msra.mxu0 0.0
    %304 = vmatprep.subr.mxu0 0.0
    %305 = vmatpush1.msra.mxu0 0.0
    %306 = vmatprep.subr.mxu0 0.0
    %307 = vmatpush1.msra.mxu0 0.0
    %308 = vmatprep.subr.mxu0 0.0
    %309 = vmatpush1.msra.mxu0 0.0
    %310 = vmatprep.subr.mxu0 0.0
    %311 = vmatpush1.msra.mxu0 0.0
    %312 = vmatprep.subr.mxu0 0.0
    %313 = vmatpush1.msra.mxu0 0.0
    %314 = vmatprep.subr.mxu0 0.0
    %315 = vmatpush1.msra.mxu0 0.0
    %316 = vmatprep.subr.mxu0 0.0
    %317 = vmatpush1.msra.mxu0 0.0
    %318 = vmatprep.subr.mxu0 0.0
    %319 = vmatpush1.msra.mxu0 0.0
    %320 = vmatprep.subr.mxu0 0.0
    %321 = vmatpush1.msra.mxu0 0.0
    %322 = vmatprep.subr.mxu0 0.0
    %323 = vmatpush1.msra.mxu0 0.0
    %324 = vmatprep.subr.mxu0 0.0
    %325 = vmatpush1.msra.mxu0 0.0
    %326 = vmatprep.subr.mxu0 0.0
    %327 = vmatpush1.msra.mxu0 0.0
    %328 = vmatprep.subr.mxu0 0.0
    %329 = vmatpush1.msra.mxu0 0.0
    %330 = vmatprep.subr.mxu0 0.0
    %331 = vmatpush1.msra.mxu0 0.0
    %332 = vmatprep.subr.mxu0 0.0
    %333 = vmatpush1.msra.mxu0 0.0
    %334 = vmatprep.subr.mxu0 0.0
    %335 = vmatpush1.msra.mxu0 0.0
    %336 = vmatprep.subr.mxu0 0.0
    %337 = vmatpush1.msra.mxu0 0.0
    %338 = vmatprep.subr.mxu0 0.0
    %339 = vmatpush1.msra.mxu0 0.0
    %340 = vmatprep.mubr.f32.mxu0 0.0
    %v341 = vand.u32 %v96, 4294901760
    %342 = vmatmul.mubr.f32.gmra.mrb[0].mxu0 %v341
    %v343 = vpop.f32.mrb[0].mxu0
    %v344 = vadd.f32 %v193, %v343
    %v345 = vpop.f32.mrb[0].mxu0
    %346 = vmatprep.mubr.f32.mxu0 0.0
    %v347 = vand.u32 %v99, 4294901760
    %348 = vmatmul.mubr.f32.gmra.mrb[0].mxu0 %v347
    %v349 = vpop.f32.mrb[0].mxu0
    %v350 = vadd.f32 %v203, %v349
    %v351 = vpop.f32.mrb[0].mxu0
    %352 = vmatprep.mubr.f32.mxu0 0.0
    %v353 = vand.u32 %v102, 4294901760
    %354 = vmatmul.mubr.f32.gmra.mrb[0].mxu0 %v353
    %v355 = vpop.f32.mrb[0].mxu0
    %v356 = vadd.f32 %v213, %v355
    %v357 = vpop.f32.mrb[0].mxu0
    %358 = vmatprep.mubr.f32.mxu0 0.0
    %v359 = vand.u32 %v105, 4294901760
    %360 = vmatmul.mubr.f32.gmra.mrb[0].mxu0 %v359
    %v361 = vpop.f32.mrb[0].mxu0
    %v362 = vadd.f32 %v223, %v361
    %v363 = vpop.f32.mrb[0].mxu0
    %364 = vmatprep.mubr.f32.mxu0 0.0
    %v365 = vand.u32 %v108, 4294901760
    %366 = vmatmul.mubr.f32.gmra.mrb[0].mxu0 %v365
    %v367 = vpop.f32.mrb[0].mxu0
    %v368 = vadd.f32 %v233, %v367
    %v369 = vpop.f32.mrb[0].mxu0
    %370 = vmatprep.mubr.f32.mxu0 0.0
    %v371 = vand.u32 %v111, 4294901760
    %372 = vmatmul.mubr.f32.gmra.mrb[0].mxu0 %v371
    %v373 = vpop.f32.mrb[0].mxu0
    %v374 = vadd.f32 %v243, %v373
    %v375 = vpop.f32.mrb[0].mxu0
    %376 = vmatprep.mubr.f32.mxu0 0.0
    %v377 = vand.u32 %v114, 4294901760
    %378 = vmatmul.mubr.f32.gmra.mrb[0].mxu0 %v377
    %v379 = vpop.f32.mrb[0].mxu0
    %v380 = vadd.f32 %v253, %v379
    %v381 = vpop.f32.mrb[0].mxu0
    %382 = vmatprep.mubr.f32.mxu0 0.0
    %v383 = vand.u32 %v117, 4294901760
    %384 = vmatmul.mubr.f32.gmra.mrb[0].mxu0 %v383
    %v385 = vpop.f32.mrb[0].mxu0
    %v386 = vadd.f32 %v263, %v385
    %v387 = vpop.f32.mrb[0].mxu0
    %388 = vdwg.mxu0
    %389 = vmatprep.subr.mxu0 0.0
    %v390 = vand.u32 %v18, 4294901760
    %v391 = vsub.f32 %v18, %v390
    %392 = vmatpush1.msra.mxu0 %v391
    %393 = vmatprep.subr.mxu0 0.0
    %v394 = vand.u32 %v19, 4294901760
    %v395 = vsub.f32 %v19, %v394
    %396 = vmatpush1.msra.mxu0 %v395
    %397 = vmatprep.subr.mxu0 0.0
    %398 = vmatpush1.msra.mxu0 0.0
    %399 = vmatprep.subr.mxu0 0.0
    %400 = vmatpush1.msra.mxu0 0.0
    %401 = vmatprep.subr.mxu0 0.0
    %402 = vmatpush1.msra.mxu0 0.0
    %403 = vmatprep.subr.mxu0 0.0
    %404 = vmatpush1.msra.mxu0 0.0
    %405 = vmatprep.subr.mxu0 0.0
    %406 = vmatpush1.msra.mxu0 0.0
    %407 = vmatprep.subr.mxu0 0.0
    %408 = vmatpush1.msra.mxu0 0.0
    %409 = vmatprep.subr.mxu0 0.0
    %410 = vmatpush1.msra.mxu0 0.0
    %411 = vmatprep.subr.mxu0 0.0
    %412 = vmatpush1.msra.mxu0 0.0
    %413 = vmatprep.subr.mxu0 0.0
    %414 = vmatpush1.msra.mxu0 0.0
    %415 = vmatprep.subr.mxu0 0.0
    %416 = vmatpush1.msra.mxu0 0.0
    %417 = vmatprep.subr.mxu0 0.0
    %418 = vmatpush1.msra.mxu0 0.0
    %419 = vmatprep.subr.mxu0 0.0
    %420 = vmatpush1.msra.mxu0 0.0
    %421 = vmatprep.subr.mxu0 0.0
    %422 = vmatpush1.msra.mxu0 0.0
    %423 = vmatprep.subr.mxu0 0.0
    %424 = vmatpush1.msra.mxu0 0.0
    %425 = vmatprep.subr.mxu0 0.0
    %426 = vmatpush1.msra.mxu0 0.0
    %427 = vmatprep.subr.mxu0 0.0
    %428 = vmatpush1.msra.mxu0 0.0
    %429 = vmatprep.subr.mxu0 0.0
    %430 = vmatpush1.msra.mxu0 0.0
    %431 = vmatprep.subr.mxu0 0.0
    %432 = vmatpush1.msra.mxu0 0.0
    %433 = vmatprep.subr.mxu0 0.0
    %434 = vmatpush1.msra.mxu0 0.0
    %435 = vmatprep.subr.mxu0 0.0
    %436 = vmatpush1.msra.mxu0 0.0
    %437 = vmatprep.subr.mxu0 0.0
    %438 = vmatpush1.msra.mxu0 0.0
    %439 = vmatprep.subr.mxu0 0.0
    %440 = vmatpush1.msra.mxu0 0.0
    %441 = vmatprep.subr.mxu0 0.0
    %442 = vmatpush1.msra.mxu0 0.0
    %443 = vmatprep.subr.mxu0 0.0
    %444 = vmatpush1.msra.mxu0 0.0
    %445 = vmatprep.subr.mxu0 0.0
    %446 = vmatpush1.msra.mxu0 0.0
    %447 = vmatprep.subr.mxu0 0.0
    %448 = vmatpush1.msra.mxu0 0.0
    %449 = vmatprep.subr.mxu0 0.0
    %450 = vmatpush1.msra.mxu0 0.0
    %451 = vmatprep.subr.mxu0 0.0
    %452 = vmatpush1.msra.mxu0 0.0
    %453 = vmatprep.subr.mxu0 0.0
    %454 = vmatpush1.msra.mxu0 0.0
    %455 = vmatprep.subr.mxu0 0.0
    %456 = vmatpush1.msra.mxu0 0.0
    %457 = vmatprep.mubr.f32.mxu0 0.0
    %v458 = vand.u32 %v96, 4294901760
    %v459 = vsub.f32 %v96, %v458
    %460 = vmatmul.mubr.f32.gmra.mrb[0].mxu0 %v459
    %v461 = vpop.f32.mrb[0].mxu0
    %v462 = vadd.f32 %v344, %v461
    %v463 = vpop.f32.mrb[0].mxu0
    %464 = vmatprep.mubr.f32.mxu0 0.0
    %v465 = vand.u32 %v99, 4294901760
    %v466 = vsub.f32 %v99, %v465
    %467 = vmatmul.mubr.f32.gmra.mrb[0].mxu0 %v466
    %v468 = vpop.f32.mrb[0].mxu0
    %v469 = vadd.f32 %v350, %v468
    %v470 = vpop.f32.mrb[0].mxu0
    %471 = vmatprep.mubr.f32.mxu0 0.0
    %v472 = vand.u32 %v102, 4294901760
    %v473 = vsub.f32 %v102, %v472
    %474 = vmatmul.mubr.f32.gmra.mrb[0].mxu0 %v473
    %v475 = vpop.f32.mrb[0].mxu0
    %v476 = vadd.f32 %v356, %v475
    %v477 = vpop.f32.mrb[0].mxu0
    %478 = vmatprep.mubr.f32.mxu0 0.0
    %v479 = vand.u32 %v105, 4294901760
    %v480 = vsub.f32 %v105, %v479
    %481 = vmatmul.mubr.f32.gmra.mrb[0].mxu0 %v480
    %v482 = vpop.f32.mrb[0].mxu0
    %v483 = vadd.f32 %v362, %v482
    %v484 = vpop.f32.mrb[0].mxu0
    %485 = vmatprep.mubr.f32.mxu0 0.0
    %v486 = vand.u32 %v108, 4294901760
    %v487 = vsub.f32 %v108, %v486
    %488 = vmatmul.mubr.f32.gmra.mrb[0].mxu0 %v487
    %v489 = vpop.f32.mrb[0].mxu0
    %v490 = vadd.f32 %v368, %v489
    %v491 = vpop.f32.mrb[0].mxu0
    %492 = vmatprep.mubr.f32.mxu0 0.0
    %v493 = vand.u32 %v111, 4294901760
    %v494 = vsub.f32 %v111, %v493
    %495 = vmatmul.mubr.f32.gmra.mrb[0].mxu0 %v494
    %v496 = vpop.f32.mrb[0].mxu0
    %v497 = vadd.f32 %v374, %v496
    %v498 = vpop.f32.mrb[0].mxu0
    %499 = vmatprep.mubr.f32.mxu0 0.0
    %v500 = vand.u32 %v114, 4294901760
    %v501 = vsub.f32 %v114, %v500
    %502 = vmatmul.mubr.f32.gmra.mrb[0].mxu0 %v501
    %v503 = vpop.f32.mrb[0].mxu0
    %v504 = vadd.f32 %v380, %v503
    %v505 = vpop.f32.mrb[0].mxu0
    %506 = vmatprep.mubr.f32.mxu0 0.0
    %v507 = vand.u32 %v117, 4294901760
    %v508 = vsub.f32 %v117, %v507
    %509 = vmatmul.mubr.f32.gmra.mrb[0].mxu0 %v508
    %v510 = vpop.f32.mrb[0].mxu0
    %v511 = vadd.f32 %v386, %v510
    %v512 = vpop.f32.mrb[0].mxu0
    %513 = vdwg.mxu0
    %514 = vmatprep.subr.mxu0 0.0
    %v515 = vand.u32 %v18, 4294901760
    %516 = vmatpush1.msra.mxu0 %v515
    %517 = vmatprep.subr.mxu0 0.0
    %v518 = vand.u32 %v19, 4294901760
    %519 = vmatpush1.msra.mxu0 %v518
    %520 = vmatprep.subr.mxu0 0.0
    %521 = vmatpush1.msra.mxu0 0.0
    %522 = vmatprep.subr.mxu0 0.0
    %523 = vmatpush1.msra.mxu0 0.0
    %524 = vmatprep.subr.mxu0 0.0
    %525 = vmatpush1.msra.mxu0 0.0
    %526 = vmatprep.subr.mxu0 0.0
    %527 = vmatpush1.msra.mxu0 0.0
    %528 = vmatprep.subr.mxu0 0.0
    %529 = vmatpush1.msra.mxu0 0.0
    %530 = vmatprep.subr.mxu0 0.0
    %531 = vmatpush1.msra.mxu0 0.0
    %532 = vmatprep.subr.mxu0 0.0
    %533 = vmatpush1.msra.mxu0 0.0
    %534 = vmatprep.subr.mxu0 0.0
    %535 = vmatpush1.msra.mxu0 0.0
    %536 = vmatprep.subr.mxu0 0.0
    %537 = vmatpush1.msra.mxu0 0.0
    %538 = vmatprep.subr.mxu0 0.0
    %539 = vmatpush1.msra.mxu0 0.0
    %540 = vmatprep.subr.mxu0 0.0
    %541 = vmatpush1.msra.mxu0 0.0
    %542 = vmatprep.subr.mxu0 0.0
    %543 = vmatpush1.msra.mxu0 0.0
    %544 = vmatprep.subr.mxu0 0.0
    %545 = vmatpush1.msra.mxu0 0.0
    %546 = vmatprep.subr.mxu0 0.0
    %547 = vmatpush1.msra.mxu0 0.0
    %548 = vmatprep.subr.mxu0 0.0
    %549 = vmatpush1.msra.mxu0 0.0
    %550 = vmatprep.subr.mxu0 0.0
    %551 = vmatpush1.msra.mxu0 0.0
    %552 = vmatprep.subr.mxu0 0.0
    %553 = vmatpush1.msra.mxu0 0.0
    %554 = vmatprep.subr.mxu0 0.0
    %555 = vmatpush1.msra.mxu0 0.0
    %556 = vmatprep.subr.mxu0 0.0
    %557 = vmatpush1.msra.mxu0 0.0
    %558 = vmatprep.subr.mxu0 0.0
    %559 = vmatpush1.msra.mxu0 0.0
    %560 = vmatprep.subr.mxu0 0.0
    %561 = vmatpush1.msra.mxu0 0.0
    %562 = vmatprep.subr.mxu0 0.0
    %563 = vmatpush1.msra.mxu0 0.0
    %564 = vmatprep.subr.mxu0 0.0
    %565 = vmatpush1.msra.mxu0 0.0
    %566 = vmatprep.subr.mxu0 0.0
    %567 = vmatpush1.msra.mxu0 0.0
    %568 = vmatprep.subr.mxu0 0.0
    %569 = vmatpush1.msra.mxu0 0.0
    %570 = vmatprep.subr.mxu0 0.0
    %571 = vmatpush1.msra.mxu0 0.0
    %572 = vmatprep.subr.mxu0 0.0
    %573 = vmatpush1.msra.mxu0 0.0
    %574 = vmatprep.subr.mxu0 0.0
    %575 = vmatpush1.msra.mxu0 0.0
    %576 = vmatprep.subr.mxu0 0.0
    %577 = vmatpush1.msra.mxu0 0.0
    %578 = vmatprep.subr.mxu0 0.0
    %579 = vmatpush1.msra.mxu0 0.0
    %580 = vmatprep.mubr.f32.mxu0 0.0
    %v581 = vand.u32 %v96, 4294901760
    %v582 = vsub.f32 %v96, %v581
    %v583 = vand.u32 %v582, 4294901760
    %584 = vmatmul.mubr.f32.gmra.mrb[0].mxu0 %v583
    %v585 = vpop.f32.mrb[0].mxu0
    %v586 = vadd.f32 %v462, %v585
    %v587 = vpop.f32.mrb[0].mxu0
    %588 = vmatprep.mubr.f32.mxu0 0.0
    %v589 = vand.u32 %v99, 4294901760
    %v590 = vsub.f32 %v99, %v589
    %v591 = vand.u32 %v590, 4294901760
    %592 = vmatmul.mubr.f32.gmra.mrb[0].mxu0 %v591
    %v593 = vpop.f32.mrb[0].mxu0
    %v594 = vadd.f32 %v469, %v593
    %v595 = vpop.f32.mrb[0].mxu0
    %596 = vmatprep.mubr.f32.mxu0 0.0
    %v597 = vand.u32 %v102, 4294901760
    %v598 = vsub.f32 %v102, %v597
    %v599 = vand.u32 %v598, 4294901760
    %600 = vmatmul.mubr.f32.gmra.mrb[0].mxu0 %v599
    %v601 = vpop.f32.mrb[0].mxu0
    %v602 = vadd.f32 %v476, %v601
    %v603 = vpop.f32.mrb[0].mxu0
    %604 = vmatprep.mubr.f32.mxu0 0.0
    %v605 = vand.u32 %v105, 4294901760
    %v606 = vsub.f32 %v105, %v605
    %v607 = vand.u32 %v606, 4294901760
    %608 = vmatmul.mubr.f32.gmra.mrb[0].mxu0 %v607
    %v609 = vpop.f32.mrb[0].mxu0
    %v610 = vadd.f32 %v483, %v609
    %v611 = vpop.f32.mrb[0].mxu0
    %612 = vmatprep.mubr.f32.mxu0 0.0
    %v613 = vand.u32 %v108, 4294901760
    %v614 = vsub.f32 %v108, %v613
    %v615 = vand.u32 %v614, 4294901760
    %616 = vmatmul.mubr.f32.gmra.mrb[0].mxu0 %v615
    %v617 = vpop.f32.mrb[0].mxu0
    %v618 = vadd.f32 %v490, %v617
    %v619 = vpop.f32.mrb[0].mxu0
    %620 = vmatprep.mubr.f32.mxu0 0.0
    %v621 = vand.u32 %v111, 4294901760
    %v622 = vsub.f32 %v111, %v621
    %v623 = vand.u32 %v622, 4294901760
    %624 = vmatmul.mubr.f32.gmra.mrb[0].mxu0 %v623
    %v625 = vpop.f32.mrb[0].mxu0
    %v626 = vadd.f32 %v497, %v625
    %v627 = vpop.f32.mrb[0].mxu0
    %628 = vmatprep.mubr.f32.mxu0 0.0
    %v629 = vand.u32 %v114, 4294901760
    %v630 = vsub.f32 %v114, %v629
    %v631 = vand.u32 %v630, 4294901760
    %632 = vmatmul.mubr.f32.gmra.mrb[0].mxu0 %v631
    %v633 = vpop.f32.mrb[0].mxu0
    %v634 = vadd.f32 %v504, %v633
    %v635 = vpop.f32.mrb[0].mxu0
    %636 = vmatprep.mubr.f32.mxu0 0.0
    %v637 = vand.u32 %v117, 4294901760
    %v638 = vsub.f32 %v117, %v637
    %v639 = vand.u32 %v638, 4294901760
    %640 = vmatmul.mubr.f32.gmra.mrb[0].mxu0 %v639
    %v641 = vpop.f32.mrb[0].mxu0
    %v642 = vadd.f32 %v511, %v641
    %v643 = vpop.f32.mrb[0].mxu0
    %644 = vdwg.mxu0
    %645 = vmatprep.subr.mxu0 0.0
    %v646 = vand.u32 %v18, 4294901760
    %v647 = vsub.f32 %v18, %v646
    %v648 = vand.u32 %v647, 4294901760
    %649 = vmatpush1.msra.mxu0 %v648
    %650 = vmatprep.subr.mxu0 0.0
    %v651 = vand.u32 %v19, 4294901760
    %v652 = vsub.f32 %v19, %v651
    %v653 = vand.u32 %v652, 4294901760
    %654 = vmatpush1.msra.mxu0 %v653
    %655 = vmatprep.subr.mxu0 0.0
    %656 = vmatpush1.msra.mxu0 0.0
    %657 = vmatprep.subr.mxu0 0.0
    %658 = vmatpush1.msra.mxu0 0.0
    %659 = vmatprep.subr.mxu0 0.0
    %660 = vmatpush1.msra.mxu0 0.0
    %661 = vmatprep.subr.mxu0 0.0
    %662 = vmatpush1.msra.mxu0 0.0
    %663 = vmatprep.subr.mxu0 0.0
    %664 = vmatpush1.msra.mxu0 0.0
    %665 = vmatprep.subr.mxu0 0.0
    %666 = vmatpush1.msra.mxu0 0.0
    %667 = vmatprep.subr.mxu0 0.0
    %668 = vmatpush1.msra.mxu0 0.0
    %669 = vmatprep.subr.mxu0 0.0
    %670 = vmatpush1.msra.mxu0 0.0
    %671 = vmatprep.subr.mxu0 0.0
    %672 = vmatpush1.msra.mxu0 0.0
    %673 = vmatprep.subr.mxu0 0.0
    %674 = vmatpush1.msra.mxu0 0.0
    %675 = vmatprep.subr.mxu0 0.0
    %676 = vmatpush1.msra.mxu0 0.0
    %677 = vmatprep.subr.mxu0 0.0
    %678 = vmatpush1.msra.mxu0 0.0
    %679 = vmatprep.subr.mxu0 0.0
    %680 = vmatpush1.msra.mxu0 0.0
    %681 = vmatprep.subr.mxu0 0.0
    %682 = vmatpush1.msra.mxu0 0.0
    %683 = vmatprep.subr.mxu0 0.0
    %684 = vmatpush1.msra.mxu0 0.0
    %685 = vmatprep.subr.mxu0 0.0
    %686 = vmatpush1.msra.mxu0 0.0
    %687 = vmatprep.subr.mxu0 0.0
    %688 = vmatpush1.msra.mxu0 0.0
    %689 = vmatprep.subr.mxu0 0.0
    %690 = vmatpush1.msra.mxu0 0.0
    %691 = vmatprep.subr.mxu0 0.0
    %692 = vmatpush1.msra.mxu0 0.0
    %693 = vmatprep.subr.mxu0 0.0
    %694 = vmatpush1.msra.mxu0 0.0
    %695 = vmatprep.subr.mxu0 0.0
    %696 = vmatpush1.msra.mxu0 0.0
    %697 = vmatprep.subr.mxu0 0.0
    %698 = vmatpush1.msra.mxu0 0.0
    %699 = vmatprep.subr.mxu0 0.0
    %700 = vmatpush1.msra.mxu0 0.0
    %701 = vmatprep.subr.mxu0 0.0
    %702 = vmatpush1.msra.mxu0 0.0
    %703 = vmatprep.subr.mxu0 0.0
    %704 = vmatpush1.msra.mxu0 0.0
    %705 = vmatprep.subr.mxu0 0.0
    %706 = vmatpush1.msra.mxu0 0.0
    %707 = vmatprep.subr.mxu0 0.0
    %708 = vmatpush1.msra.mxu0 0.0
    %709 = vmatprep.subr.mxu0 0.0
    %710 = vmatpush1.msra.mxu0 0.0
    %711 = vmatprep.subr.mxu0 0.0
    %712 = vmatpush1.msra.mxu0 0.0
    %713 = vmatprep.subr.mxu0 0.0
    %714 = vmatpush1.msra.mxu0 0.0
    %715 = vmatprep.mubr.f32.mxu0 0.0
    %v716 = vand.u32 %v96, 4294901760
    %717 = vmatmul.mubr.f32.gmra.mrb[0].mxu0 %v716
    %v718 = vpop.f32.mrb[0].mxu0
    %v719 = vadd.f32 %v586, %v718
    %v720 = vpop.f32.mrb[0].mxu0
    %721 = vmatprep.mubr.f32.mxu0 0.0
    %v722 = vand.u32 %v99, 4294901760
    %723 = vmatmul.mubr.f32.gmra.mrb[0].mxu0 %v722
    %v724 = vpop.f32.mrb[0].mxu0
    %v725 = vadd.f32 %v594, %v724
    %v726 = vpop.f32.mrb[0].mxu0
    %727 = vmatprep.mubr.f32.mxu0 0.0
    %v728 = vand.u32 %v102, 4294901760
    %729 = vmatmul.mubr.f32.gmra.mrb[0].mxu0 %v728
    %v730 = vpop.f32.mrb[0].mxu0
    %v731 = vadd.f32 %v602, %v730
    %v732 = vpop.f32.mrb[0].mxu0
    %733 = vmatprep.mubr.f32.mxu0 0.0
    %v734 = vand.u32 %v105, 4294901760
    %735 = vmatmul.mubr.f32.gmra.mrb[0].mxu0 %v734
    %v736 = vpop.f32.mrb[0].mxu0
    %v737 = vadd.f32 %v610, %v736
    %v738 = vpop.f32.mrb[0].mxu0
    %739 = vmatprep.mubr.f32.mxu0 0.0
    %v740 = vand.u32 %v108, 4294901760
    %741 = vmatmul.mubr.f32.gmra.mrb[0].mxu0 %v740
    %v742 = vpop.f32.mrb[0].mxu0
    %v743 = vadd.f32 %v618, %v742
    %v744 = vpop.f32.mrb[0].mxu0
    %745 = vmatprep.mubr.f32.mxu0 0.0
    %v746 = vand.u32 %v111, 4294901760
    %747 = vmatmul.mubr.f32.gmra.mrb[0].mxu0 %v746
    %v748 = vpop.f32.mrb[0].mxu0
    %v749 = vadd.f32 %v626, %v748
    %v750 = vpop.f32.mrb[0].mxu0
    %751 = vmatprep.mubr.f32.mxu0 0.0
    %v752 = vand.u32 %v114, 4294901760
    %753 = vmatmul.mubr.f32.gmra.mrb[0].mxu0 %v752
    %v754 = vpop.f32.mrb[0].mxu0
    %v755 = vadd.f32 %v634, %v754
    %v756 = vpop.f32.mrb[0].mxu0
    %757 = vmatprep.mubr.f32.mxu0 0.0
    %v758 = vand.u32 %v117, 4294901760
    %759 = vmatmul.mubr.f32.gmra.mrb[0].mxu0 %v758
    %v760 = vpop.f32.mrb[0].mxu0
    %v761 = vadd.f32 %v642, %v760
    %v762 = vpop.f32.mrb[0].mxu0
    %763 = vdwg.mxu0
    %764 = vmatprep.subr.mxu0 0.0
    %v765 = vand.u32 %v18, 4294901760
    %766 = vmatpush1.msra.mxu0 %v765
    %767 = vmatprep.subr.mxu0 0.0
    %v768 = vand.u32 %v19, 4294901760
    %769 = vmatpush1.msra.mxu0 %v768
    %770 = vmatprep.subr.mxu0 0.0
    %771 = vmatpush1.msra.mxu0 0.0
    %772 = vmatprep.subr.mxu0 0.0
    %773 = vmatpush1.msra.mxu0 0.0
    %774 = vmatprep.subr.mxu0 0.0
    %775 = vmatpush1.msra.mxu0 0.0
    %776 = vmatprep.subr.mxu0 0.0
    %777 = vmatpush1.msra.mxu0 0.0
    %778 = vmatprep.subr.mxu0 0.0
    %779 = vmatpush1.msra.mxu0 0.0
    %780 = vmatprep.subr.mxu0 0.0
    %781 = vmatpush1.msra.mxu0 0.0
    %782 = vmatprep.subr.mxu0 0.0
    %783 = vmatpush1.msra.mxu0 0.0
    %784 = vmatprep.subr.mxu0 0.0
    %785 = vmatpush1.msra.mxu0 0.0
    %786 = vmatprep.subr.mxu0 0.0
    %787 = vmatpush1.msra.mxu0 0.0
    %788 = vmatprep.subr.mxu0 0.0
    %789 = vmatpush1.msra.mxu0 0.0
    %790 = vmatprep.subr.mxu0 0.0
    %791 = vmatpush1.msra.mxu0 0.0
    %792 = vmatprep.subr.mxu0 0.0
    %793 = vmatpush1.msra.mxu0 0.0
    %794 = vmatprep.subr.mxu0 0.0
    %795 = vmatpush1.msra.mxu0 0.0
    %796 = vmatprep.subr.mxu0 0.0
    %797 = vmatpush1.msra.mxu0 0.0
    %798 = vmatprep.subr.mxu0 0.0
    %799 = vmatpush1.msra.mxu0 0.0
    %800 = vmatprep.subr.mxu0 0.0
    %801 = vmatpush1.msra.mxu0 0.0
    %802 = vmatprep.subr.mxu0 0.0
    %803 = vmatpush1.msra.mxu0 0.0
    %804 = vmatprep.subr.mxu0 0.0
    %805 = vmatpush1.msra.mxu0 0.0
    %806 = vmatprep.subr.mxu0 0.0
    %807 = vmatpush1.msra.mxu0 0.0
    %808 = vmatprep.subr.mxu0 0.0
    %809 = vmatpush1.msra.mxu0 0.0
    %810 = vmatprep.subr.mxu0 0.0
    %811 = vmatpush1.msra.mxu0 0.0
    %812 = vmatprep.subr.mxu0 0.0
    %813 = vmatpush1.msra.mxu0 0.0
    %814 = vmatprep.subr.mxu0 0.0
    %815 = vmatpush1.msra.mxu0 0.0
    %816 = vmatprep.subr.mxu0 0.0
    %817 = vmatpush1.msra.mxu0 0.0
    %818 = vmatprep.subr.mxu0 0.0
    %819 = vmatpush1.msra.mxu0 0.0
    %820 = vmatprep.subr.mxu0 0.0
    %821 = vmatpush1.msra.mxu0 0.0
    %822 = vmatprep.subr.mxu0 0.0
    %823 = vmatpush1.msra.mxu0 0.0
    %824 = vmatprep.subr.mxu0 0.0
    %825 = vmatpush1.msra.mxu0 0.0
    %826 = vmatprep.subr.mxu0 0.0
    %827 = vmatpush1.msra.mxu0 0.0
    %828 = vmatprep.subr.mxu0 0.0
    %829 = vmatpush1.msra.mxu0 0.0
    %830 = vmatprep.mubr.f32.mxu0 0.0
    %v831 = vand.u32 %v96, 4294901760
    %832 = vmatmul.mubr.f32.gmra.mrb[0].mxu0 %v831
    %v833 = vpop.f32.mrb[0].mxu0
    %v834 = vadd.f32 %v719, %v833
    %v835 = vpop.f32.mrb[0].mxu0
    %836 = vmatprep.mubr.f32.mxu0 0.0
    %v837 = vand.u32 %v99, 4294901760
    %838 = vmatmul.mubr.f32.gmra.mrb[0].mxu0 %v837
    %v839 = vpop.f32.mrb[0].mxu0
    %v840 = vadd.f32 %v725, %v839
    %v841 = vpop.f32.mrb[0].mxu0
    %842 = vmatprep.mubr.f32.mxu0 0.0
    %v843 = vand.u32 %v102, 4294901760
    %844 = vmatmul.mubr.f32.gmra.mrb[0].mxu0 %v843
    %v845 = vpop.f32.mrb[0].mxu0
    %v846 = vadd.f32 %v731, %v845
    %v847 = vpop.f32.mrb[0].mxu0
    %848 = vmatprep.mubr.f32.mxu0 0.0
    %v849 = vand.u32 %v105, 4294901760
    %850 = vmatmul.mubr.f32.gmra.mrb[0].mxu0 %v849
    %v851 = vpop.f32.mrb[0].mxu0
    %v852 = vadd.f32 %v737, %v851
    %v853 = vpop.f32.mrb[0].mxu0
    %854 = vmatprep.mubr.f32.mxu0 0.0
    %v855 = vand.u32 %v108, 4294901760
    %856 = vmatmul.mubr.f32.gmra.mrb[0].mxu0 %v855
    %v857 = vpop.f32.mrb[0].mxu0
    %v858 = vadd.f32 %v743, %v857
    %v859 = vpop.f32.mrb[0].mxu0
    %860 = vmatprep.mubr.f32.mxu0 0.0
    %v861 = vand.u32 %v111, 4294901760
    %862 = vmatmul.mubr.f32.gmra.mrb[0].mxu0 %v861
    %v863 = vpop.f32.mrb[0].mxu0
    %v864 = vadd.f32 %v749, %v863
    %v865 = vpop.f32.mrb[0].mxu0
    %866 = vmatprep.mubr.f32.mxu0 0.0
    %v867 = vand.u32 %v114, 4294901760
    %868 = vmatmul.mubr.f32.gmra.mrb[0].mxu0 %v867
    %v869 = vpop.f32.mrb[0].mxu0
    %v870 = vadd.f32 %v755, %v869
    %v871 = vpop.f32.mrb[0].mxu0
    %872 = vmatprep.mubr.f32.mxu0 0.0
    %v873 = vand.u32 %v117, 4294901760
    %874 = vmatmul.mubr.f32.gmra.mrb[0].mxu0 %v873
    %v875 = vpop.f32.mrb[0].mxu0
    %v876 = vadd.f32 %v761, %v875
    %v877 = vpop.f32.mrb[0].mxu0
    %878 = vdwg.mxu0
    %v879 = vmax.f32 %v834, 0.0
    %v880 = vmax.f32 %v840, 0.0
    %v881 = vmax.f32 %v846, 0.0
    %v882 = vmax.f32 %v852, 0.0
    %v883 = vmax.f32 %v858, 0.0
    %v884 = vmax.f32 %v864, 0.0
    %v885 = vmax.f32 %v870, 0.0
    %v886 = vmax.f32 %v876, 0.0
    %887 = vset.pattern.permute.xlu0 1
    %888 = vperm.xlu0 %887, %v46
    %v889 = vpop.permute.xlu0 %888
    %891 = vset.pattern.permute.xlu0 1
    %892 = vperm.xlu0 %891, %v47
    %v893 = vpop.permute.xlu0 %892
    %895 = vset.pattern.permute.xlu0 1
    %896 = vperm.xlu0 %895, %v48
    %v897 = vpop.permute.xlu0 %896
    %899 = vset.pattern.permute.xlu0 1
    %900 = vperm.xlu0 %899, %v49
    %v901 = vpop.permute.xlu0 %900
    %903 = vset.pattern.permute.xlu0 1
    %904 = vperm.xlu0 %903, %v50
    %v905 = vpop.permute.xlu0 %904
    %907 = vset.pattern.permute.xlu0 1
    %908 = vperm.xlu0 %907, %v51
    %v909 = vpop.permute.xlu0 %908
    %911 = vset.pattern.permute.xlu0 1
    %912 = vperm.xlu0 %911, %v52
    %v913 = vpop.permute.xlu0 %912
    %915 = vset.pattern.permute.xlu0 1
    %916 = vperm.xlu0 %915, %v53
    %v917 = vpop.permute.xlu0 %916
    %vm919 = vcmask 523264
    %v921 = vsel %vm919, %v29, 0
    %v924 = vsel %vm919, %v30, 0
    %v927 = vsel %vm919, %v31, 0
    %v930 = vsel %vm919, %v32, 0
    %v933 = vsel %vm919, %v33, 0
    %v936 = vsel %vm919, %v34, 0
    %v939 = vsel %vm919, %v35, 0
    %v942 = vsel %vm919, %v36, 0
    %944 = vmatprep.subr.mxu0 0.0
    %v945 = vand.u32 %v879, 4294901760
    %946 = vmatpush1.msra.mxu0 %v945
    %947 = vmatprep.subr.mxu0 0.0
    %v948 = vand.u32 %v880, 4294901760
    %949 = vmatpush1.msra.mxu0 %v948
    %950 = vmatprep.subr.mxu0 0.0
    %v951 = vand.u32 %v881, 4294901760
    %952 = vmatpush1.msra.mxu0 %v951
    %953 = vmatprep.subr.mxu0 0.0
    %v954 = vand.u32 %v882, 4294901760
    %955 = vmatpush1.msra.mxu0 %v954
    %956 = vmatprep.subr.mxu0 0.0
    %v957 = vand.u32 %v883, 4294901760
    %958 = vmatpush1.msra.mxu0 %v957
    %959 = vmatprep.subr.mxu0 0.0
    %v960 = vand.u32 %v884, 4294901760
    %961 = vmatpush1.msra.mxu0 %v960
    %962 = vmatprep.subr.mxu0 0.0
    %v963 = vand.u32 %v885, 4294901760
    %964 = vmatpush1.msra.mxu0 %v963
    %965 = vmatprep.subr.mxu0 0.0
    %v966 = vand.u32 %v886, 4294901760
    %967 = vmatpush1.msra.mxu0 %v966
    %968 = vmatprep.subr.mxu0 0.0
    %969 = vmatpush1.msra.mxu0 0.0
    %970 = vmatprep.subr.mxu0 0.0
    %971 = vmatpush1.msra.mxu0 0.0
    %972 = vmatprep.subr.mxu0 0.0
    %973 = vmatpush1.msra.mxu0 0.0
    %974 = vmatprep.subr.mxu0 0.0
    %975 = vmatpush1.msra.mxu0 0.0
    %976 = vmatprep.subr.mxu0 0.0
    %977 = vmatpush1.msra.mxu0 0.0
    %978 = vmatprep.subr.mxu0 0.0
    %979 = vmatpush1.msra.mxu0 0.0
    %980 = vmatprep.subr.mxu0 0.0
    %981 = vmatpush1.msra.mxu0 0.0
    %982 = vmatprep.subr.mxu0 0.0
    %983 = vmatpush1.msra.mxu0 0.0
    %984 = vmatprep.subr.mxu0 0.0
    %985 = vmatpush1.msra.mxu0 0.0
    %986 = vmatprep.subr.mxu0 0.0
    %987 = vmatpush1.msra.mxu0 0.0
    %988 = vmatprep.subr.mxu0 0.0
    %989 = vmatpush1.msra.mxu0 0.0
    %990 = vmatprep.subr.mxu0 0.0
    %991 = vmatpush1.msra.mxu0 0.0
    %992 = vmatprep.subr.mxu0 0.0
    %993 = vmatpush1.msra.mxu0 0.0
    %994 = vmatprep.subr.mxu0 0.0
    %995 = vmatpush1.msra.mxu0 0.0
    %996 = vmatprep.subr.mxu0 0.0
    %997 = vmatpush1.msra.mxu0 0.0
    %998 = vmatprep.subr.mxu0 0.0
    %999 = vmatpush1.msra.mxu0 0.0
    %1000 = vmatprep.subr.mxu0 0.0
    %1001 = vmatpush1.msra.mxu0 0.0
    %1002 = vmatprep.subr.mxu0 0.0
    %1003 = vmatpush1.msra.mxu0 0.0
    %1004 = vmatprep.subr.mxu0 0.0
    %1005 = vmatpush1.msra.mxu0 0.0
    %1006 = vmatprep.subr.mxu0 0.0
    %1007 = vmatpush1.msra.mxu0 0.0
    %1008 = vmatprep.subr.mxu0 0.0
    %1009 = vmatpush1.msra.mxu0 0.0
    %1010 = vmatprep.subr.mxu0 0.0
    %1011 = vmatpush1.msra.mxu0 0.0
    %1012 = vmatprep.subr.mxu0 0.0
    %1013 = vmatpush1.msra.mxu0 0.0
    %1014 = vmatprep.subr.mxu0 0.0
    %1015 = vmatpush1.msra.mxu0 0.0
    %1016 = vmatprep.mubr.f32.mxu0 0.0
    %v1017 = vand.u32 %v921, 4294901760
    %v1018 = vsub.f32 %v921, %v1017
    %v1019 = vand.u32 %v1018, 4294901760
    %v1020 = vsub.f32 %v1018, %v1019
    %v1021 = vand.u32 %v1020, 4294901760
    %1022 = vmatmul.mubr.f32.gmra.mrb[0].mxu0 %v1021
    %v1023 = vpop.f32.mrb[0].mxu0
    %v1024 = vadd.f32 %v889, %v1023
    %v1025 = vpop.f32.mrb[0].mxu0
    %1026 = vmatprep.mubr.f32.mxu0 0.0
    %v1027 = vand.u32 %v924, 4294901760
    %v1028 = vsub.f32 %v924, %v1027
    %v1029 = vand.u32 %v1028, 4294901760
    %v1030 = vsub.f32 %v1028, %v1029
    %v1031 = vand.u32 %v1030, 4294901760
    %1032 = vmatmul.mubr.f32.gmra.mrb[0].mxu0 %v1031
    %v1033 = vpop.f32.mrb[0].mxu0
    %v1034 = vadd.f32 %v893, %v1033
    %v1035 = vpop.f32.mrb[0].mxu0
    %1036 = vmatprep.mubr.f32.mxu0 0.0
    %v1037 = vand.u32 %v927, 4294901760
    %v1038 = vsub.f32 %v927, %v1037
    %v1039 = vand.u32 %v1038, 4294901760
    %v1040 = vsub.f32 %v1038, %v1039
    %v1041 = vand.u32 %v1040, 4294901760
    %1042 = vmatmul.mubr.f32.gmra.mrb[0].mxu0 %v1041
    %v1043 = vpop.f32.mrb[0].mxu0
    %v1044 = vadd.f32 %v897, %v1043
    %v1045 = vpop.f32.mrb[0].mxu0
    %1046 = vmatprep.mubr.f32.mxu0 0.0
    %v1047 = vand.u32 %v930, 4294901760
    %v1048 = vsub.f32 %v930, %v1047
    %v1049 = vand.u32 %v1048, 4294901760
    %v1050 = vsub.f32 %v1048, %v1049
    %v1051 = vand.u32 %v1050, 4294901760
    %1052 = vmatmul.mubr.f32.gmra.mrb[0].mxu0 %v1051
    %v1053 = vpop.f32.mrb[0].mxu0
    %v1054 = vadd.f32 %v901, %v1053
    %v1055 = vpop.f32.mrb[0].mxu0
    %1056 = vmatprep.mubr.f32.mxu0 0.0
    %v1057 = vand.u32 %v933, 4294901760
    %v1058 = vsub.f32 %v933, %v1057
    %v1059 = vand.u32 %v1058, 4294901760
    %v1060 = vsub.f32 %v1058, %v1059
    %v1061 = vand.u32 %v1060, 4294901760
    %1062 = vmatmul.mubr.f32.gmra.mrb[0].mxu0 %v1061
    %v1063 = vpop.f32.mrb[0].mxu0
    %v1064 = vadd.f32 %v905, %v1063
    %v1065 = vpop.f32.mrb[0].mxu0
    %1066 = vmatprep.mubr.f32.mxu0 0.0
    %v1067 = vand.u32 %v936, 4294901760
    %v1068 = vsub.f32 %v936, %v1067
    %v1069 = vand.u32 %v1068, 4294901760
    %v1070 = vsub.f32 %v1068, %v1069
    %v1071 = vand.u32 %v1070, 4294901760
    %1072 = vmatmul.mubr.f32.gmra.mrb[0].mxu0 %v1071
    %v1073 = vpop.f32.mrb[0].mxu0
    %v1074 = vadd.f32 %v909, %v1073
    %v1075 = vpop.f32.mrb[0].mxu0
    %1076 = vmatprep.mubr.f32.mxu0 0.0
    %v1077 = vand.u32 %v939, 4294901760
    %v1078 = vsub.f32 %v939, %v1077
    %v1079 = vand.u32 %v1078, 4294901760
    %v1080 = vsub.f32 %v1078, %v1079
    %v1081 = vand.u32 %v1080, 4294901760
    %1082 = vmatmul.mubr.f32.gmra.mrb[0].mxu0 %v1081
    %v1083 = vpop.f32.mrb[0].mxu0
    %v1084 = vadd.f32 %v913, %v1083
    %v1085 = vpop.f32.mrb[0].mxu0
    %1086 = vmatprep.mubr.f32.mxu0 0.0
    %v1087 = vand.u32 %v942, 4294901760
    %v1088 = vsub.f32 %v942, %v1087
    %v1089 = vand.u32 %v1088, 4294901760
    %v1090 = vsub.f32 %v1088, %v1089
    %v1091 = vand.u32 %v1090, 4294901760
    %1092 = vmatmul.mubr.f32.gmra.mrb[0].mxu0 %v1091
    %v1093 = vpop.f32.mrb[0].mxu0
    %v1094 = vadd.f32 %v917, %v1093
    %v1095 = vpop.f32.mrb[0].mxu0
    %1096 = vdwg.mxu0
    %1097 = vmatprep.subr.mxu0 0.0
    %v1098 = vand.u32 %v879, 4294901760
    %v1099 = vsub.f32 %v879, %v1098
    %v1100 = vand.u32 %v1099, 4294901760
    %v1101 = vsub.f32 %v1099, %v1100
    %v1102 = vand.u32 %v1101, 4294901760
    %1103 = vmatpush1.msra.mxu0 %v1102
    %1104 = vmatprep.subr.mxu0 0.0
    %v1105 = vand.u32 %v880, 4294901760
    %v1106 = vsub.f32 %v880, %v1105
    %v1107 = vand.u32 %v1106, 4294901760
    %v1108 = vsub.f32 %v1106, %v1107
    %v1109 = vand.u32 %v1108, 4294901760
    %1110 = vmatpush1.msra.mxu0 %v1109
    %1111 = vmatprep.subr.mxu0 0.0
    %v1112 = vand.u32 %v881, 4294901760
    %v1113 = vsub.f32 %v881, %v1112
    %v1114 = vand.u32 %v1113, 4294901760
    %v1115 = vsub.f32 %v1113, %v1114
    %v1116 = vand.u32 %v1115, 4294901760
    %1117 = vmatpush1.msra.mxu0 %v1116
    %1118 = vmatprep.subr.mxu0 0.0
    %v1119 = vand.u32 %v882, 4294901760
    %v1120 = vsub.f32 %v882, %v1119
    %v1121 = vand.u32 %v1120, 4294901760
    %v1122 = vsub.f32 %v1120, %v1121
    %v1123 = vand.u32 %v1122, 4294901760
    %1124 = vmatpush1.msra.mxu0 %v1123
    %1125 = vmatprep.subr.mxu0 0.0
    %v1126 = vand.u32 %v883, 4294901760
    %v1127 = vsub.f32 %v883, %v1126
    %v1128 = vand.u32 %v1127, 4294901760
    %v1129 = vsub.f32 %v1127, %v1128
    %v1130 = vand.u32 %v1129, 4294901760
    %1131 = vmatpush1.msra.mxu0 %v1130
    %1132 = vmatprep.subr.mxu0 0.0
    %v1133 = vand.u32 %v884, 4294901760
    %v1134 = vsub.f32 %v884, %v1133
    %v1135 = vand.u32 %v1134, 4294901760
    %v1136 = vsub.f32 %v1134, %v1135
    %v1137 = vand.u32 %v1136, 4294901760
    %1138 = vmatpush1.msra.mxu0 %v1137
    %1139 = vmatprep.subr.mxu0 0.0
    %v1140 = vand.u32 %v885, 4294901760
    %v1141 = vsub.f32 %v885, %v1140
    %v1142 = vand.u32 %v1141, 4294901760
    %v1143 = vsub.f32 %v1141, %v1142
    %v1144 = vand.u32 %v1143, 4294901760
    %1145 = vmatpush1.msra.mxu0 %v1144
    %1146 = vmatprep.subr.mxu0 0.0
    %v1147 = vand.u32 %v886, 4294901760
    %v1148 = vsub.f32 %v886, %v1147
    %v1149 = vand.u32 %v1148, 4294901760
    %v1150 = vsub.f32 %v1148, %v1149
    %v1151 = vand.u32 %v1150, 4294901760
    %1152 = vmatpush1.msra.mxu0 %v1151
    %1153 = vmatprep.subr.mxu0 0.0
    %1154 = vmatpush1.msra.mxu0 0.0
    %1155 = vmatprep.subr.mxu0 0.0
    %1156 = vmatpush1.msra.mxu0 0.0
    %1157 = vmatprep.subr.mxu0 0.0
    %1158 = vmatpush1.msra.mxu0 0.0
    %1159 = vmatprep.subr.mxu0 0.0
    %1160 = vmatpush1.msra.mxu0 0.0
    %1161 = vmatprep.subr.mxu0 0.0
    %1162 = vmatpush1.msra.mxu0 0.0
    %1163 = vmatprep.subr.mxu0 0.0
    %1164 = vmatpush1.msra.mxu0 0.0
    %1165 = vmatprep.subr.mxu0 0.0
    %1166 = vmatpush1.msra.mxu0 0.0
    %1167 = vmatprep.subr.mxu0 0.0
    %1168 = vmatpush1.msra.mxu0 0.0
    %1169 = vmatprep.subr.mxu0 0.0
    %1170 = vmatpush1.msra.mxu0 0.0
    %1171 = vmatprep.subr.mxu0 0.0
    %1172 = vmatpush1.msra.mxu0 0.0
    %1173 = vmatprep.subr.mxu0 0.0
    %1174 = vmatpush1.msra.mxu0 0.0
    %1175 = vmatprep.subr.mxu0 0.0
    %1176 = vmatpush1.msra.mxu0 0.0
    %1177 = vmatprep.subr.mxu0 0.0
    %1178 = vmatpush1.msra.mxu0 0.0
    %1179 = vmatprep.subr.mxu0 0.0
    %1180 = vmatpush1.msra.mxu0 0.0
    %1181 = vmatprep.subr.mxu0 0.0
    %1182 = vmatpush1.msra.mxu0 0.0
    %1183 = vmatprep.subr.mxu0 0.0
    %1184 = vmatpush1.msra.mxu0 0.0
    %1185 = vmatprep.subr.mxu0 0.0
    %1186 = vmatpush1.msra.mxu0 0.0
    %1187 = vmatprep.subr.mxu0 0.0
    %1188 = vmatpush1.msra.mxu0 0.0
    %1189 = vmatprep.subr.mxu0 0.0
    %1190 = vmatpush1.msra.mxu0 0.0
    %1191 = vmatprep.subr.mxu0 0.0
    %1192 = vmatpush1.msra.mxu0 0.0
    %1193 = vmatprep.subr.mxu0 0.0
    %1194 = vmatpush1.msra.mxu0 0.0
    %1195 = vmatprep.subr.mxu0 0.0
    %1196 = vmatpush1.msra.mxu0 0.0
    %1197 = vmatprep.subr.mxu0 0.0
    %1198 = vmatpush1.msra.mxu0 0.0
    %1199 = vmatprep.subr.mxu0 0.0
    %1200 = vmatpush1.msra.mxu0 0.0
    %1201 = vmatprep.mubr.f32.mxu0 0.0
    %v1202 = vand.u32 %v921, 4294901760
    %1203 = vmatmul.mubr.f32.gmra.mrb[0].mxu0 %v1202
    %v1204 = vpop.f32.mrb[0].mxu0
    %v1205 = vadd.f32 %v1024, %v1204
    %v1206 = vpop.f32.mrb[0].mxu0
    %1207 = vmatprep.mubr.f32.mxu0 0.0
    %v1208 = vand.u32 %v924, 4294901760
    %1209 = vmatmul.mubr.f32.gmra.mrb[0].mxu0 %v1208
    %v1210 = vpop.f32.mrb[0].mxu0
    %v1211 = vadd.f32 %v1034, %v1210
    %v1212 = vpop.f32.mrb[0].mxu0
    %1213 = vmatprep.mubr.f32.mxu0 0.0
    %v1214 = vand.u32 %v927, 4294901760
    %1215 = vmatmul.mubr.f32.gmra.mrb[0].mxu0 %v1214
    %v1216 = vpop.f32.mrb[0].mxu0
    %v1217 = vadd.f32 %v1044, %v1216
    %v1218 = vpop.f32.mrb[0].mxu0
    %1219 = vmatprep.mubr.f32.mxu0 0.0
    %v1220 = vand.u32 %v930, 4294901760
    %1221 = vmatmul.mubr.f32.gmra.mrb[0].mxu0 %v1220
    %v1222 = vpop.f32.mrb[0].mxu0
    %v1223 = vadd.f32 %v1054, %v1222
    %v1224 = vpop.f32.mrb[0].mxu0
    %1225 = vmatprep.mubr.f32.mxu0 0.0
    %v1226 = vand.u32 %v933, 4294901760
    %1227 = vmatmul.mubr.f32.gmra.mrb[0].mxu0 %v1226
    %v1228 = vpop.f32.mrb[0].mxu0
    %v1229 = vadd.f32 %v1064, %v1228
    %v1230 = vpop.f32.mrb[0].mxu0
    %1231 = vmatprep.mubr.f32.mxu0 0.0
    %v1232 = vand.u32 %v936, 4294901760
    %1233 = vmatmul.mubr.f32.gmra.mrb[0].mxu0 %v1232
    %v1234 = vpop.f32.mrb[0].mxu0
    %v1235 = vadd.f32 %v1074, %v1234
    %v1236 = vpop.f32.mrb[0].mxu0
    %1237 = vmatprep.mubr.f32.mxu0 0.0
    %v1238 = vand.u32 %v939, 4294901760
    %1239 = vmatmul.mubr.f32.gmra.mrb[0].mxu0 %v1238
    %v1240 = vpop.f32.mrb[0].mxu0
    %v1241 = vadd.f32 %v1084, %v1240
    %v1242 = vpop.f32.mrb[0].mxu0
    %1243 = vmatprep.mubr.f32.mxu0 0.0
    %v1244 = vand.u32 %v942, 4294901760
    %1245 = vmatmul.mubr.f32.gmra.mrb[0].mxu0 %v1244
    %v1246 = vpop.f32.mrb[0].mxu0
    %v1247 = vadd.f32 %v1094, %v1246
    %v1248 = vpop.f32.mrb[0].mxu0
    %1249 = vdwg.mxu0
    %1250 = vmatprep.subr.mxu0 0.0
    %v1251 = vand.u32 %v879, 4294901760
    %v1252 = vsub.f32 %v879, %v1251
    %1253 = vmatpush1.msra.mxu0 %v1252
    %1254 = vmatprep.subr.mxu0 0.0
    %v1255 = vand.u32 %v880, 4294901760
    %v1256 = vsub.f32 %v880, %v1255
    %1257 = vmatpush1.msra.mxu0 %v1256
    %1258 = vmatprep.subr.mxu0 0.0
    %v1259 = vand.u32 %v881, 4294901760
    %v1260 = vsub.f32 %v881, %v1259
    %1261 = vmatpush1.msra.mxu0 %v1260
    %1262 = vmatprep.subr.mxu0 0.0
    %v1263 = vand.u32 %v882, 4294901760
    %v1264 = vsub.f32 %v882, %v1263
    %1265 = vmatpush1.msra.mxu0 %v1264
    %1266 = vmatprep.subr.mxu0 0.0
    %v1267 = vand.u32 %v883, 4294901760
    %v1268 = vsub.f32 %v883, %v1267
    %1269 = vmatpush1.msra.mxu0 %v1268
    %1270 = vmatprep.subr.mxu0 0.0
    %v1271 = vand.u32 %v884, 4294901760
    %v1272 = vsub.f32 %v884, %v1271
    %1273 = vmatpush1.msra.mxu0 %v1272
    %1274 = vmatprep.subr.mxu0 0.0
    %v1275 = vand.u32 %v885, 4294901760
    %v1276 = vsub.f32 %v885, %v1275
    %1277 = vmatpush1.msra.mxu0 %v1276
    %1278 = vmatprep.subr.mxu0 0.0
    %v1279 = vand.u32 %v886, 4294901760
    %v1280 = vsub.f32 %v886, %v1279
    %1281 = vmatpush1.msra.mxu0 %v1280
    %1282 = vmatprep.subr.mxu0 0.0
    %1283 = vmatpush1.msra.mxu0 0.0
    %1284 = vmatprep.subr.mxu0 0.0
    %1285 = vmatpush1.msra.mxu0 0.0
    %1286 = vmatprep.subr.mxu0 0.0
    %1287 = vmatpush1.msra.mxu0 0.0
    %1288 = vmatprep.subr.mxu0 0.0
    %1289 = vmatpush1.msra.mxu0 0.0
    %1290 = vmatprep.subr.mxu0 0.0
    %1291 = vmatpush1.msra.mxu0 0.0
    %1292 = vmatprep.subr.mxu0 0.0
    %1293 = vmatpush1.msra.mxu0 0.0
    %1294 = vmatprep.subr.mxu0 0.0
    %1295 = vmatpush1.msra.mxu0 0.0
    %1296 = vmatprep.subr.mxu0 0.0
    %1297 = vmatpush1.msra.mxu0 0.0
    %1298 = vmatprep.subr.mxu0 0.0
    %1299 = vmatpush1.msra.mxu0 0.0
    %1300 = vmatprep.subr.mxu0 0.0
    %1301 = vmatpush1.msra.mxu0 0.0
    %1302 = vmatprep.subr.mxu0 0.0
    %1303 = vmatpush1.msra.mxu0 0.0
    %1304 = vmatprep.subr.mxu0 0.0
    %1305 = vmatpush1.msra.mxu0 0.0
    %1306 = vmatprep.subr.mxu0 0.0
    %1307 = vmatpush1.msra.mxu0 0.0
    %1308 = vmatprep.subr.mxu0 0.0
    %1309 = vmatpush1.msra.mxu0 0.0
    %1310 = vmatprep.subr.mxu0 0.0
    %1311 = vmatpush1.msra.mxu0 0.0
    %1312 = vmatprep.subr.mxu0 0.0
    %1313 = vmatpush1.msra.mxu0 0.0
    %1314 = vmatprep.subr.mxu0 0.0
    %1315 = vmatpush1.msra.mxu0 0.0
    %1316 = vmatprep.subr.mxu0 0.0
    %1317 = vmatpush1.msra.mxu0 0.0
    %1318 = vmatprep.subr.mxu0 0.0
    %1319 = vmatpush1.msra.mxu0 0.0
    %1320 = vmatprep.subr.mxu0 0.0
    %1321 = vmatpush1.msra.mxu0 0.0
    %1322 = vmatprep.subr.mxu0 0.0
    %1323 = vmatpush1.msra.mxu0 0.0
    %1324 = vmatprep.subr.mxu0 0.0
    %1325 = vmatpush1.msra.mxu0 0.0
    %1326 = vmatprep.subr.mxu0 0.0
    %1327 = vmatpush1.msra.mxu0 0.0
    %1328 = vmatprep.subr.mxu0 0.0
    %1329 = vmatpush1.msra.mxu0 0.0
    %1330 = vmatprep.mubr.f32.mxu0 0.0
    %v1331 = vand.u32 %v921, 4294901760
    %v1332 = vsub.f32 %v921, %v1331
    %1333 = vmatmul.mubr.f32.gmra.mrb[0].mxu0 %v1332
    %v1334 = vpop.f32.mrb[0].mxu0
    %v1335 = vadd.f32 %v1205, %v1334
    %v1336 = vpop.f32.mrb[0].mxu0
    %1337 = vmatprep.mubr.f32.mxu0 0.0
    %v1338 = vand.u32 %v924, 4294901760
    %v1339 = vsub.f32 %v924, %v1338
    %1340 = vmatmul.mubr.f32.gmra.mrb[0].mxu0 %v1339
    %v1341 = vpop.f32.mrb[0].mxu0
    %v1342 = vadd.f32 %v1211, %v1341
    %v1343 = vpop.f32.mrb[0].mxu0
    %1344 = vmatprep.mubr.f32.mxu0 0.0
    %v1345 = vand.u32 %v927, 4294901760
    %v1346 = vsub.f32 %v927, %v1345
    %1347 = vmatmul.mubr.f32.gmra.mrb[0].mxu0 %v1346
    %v1348 = vpop.f32.mrb[0].mxu0
    %v1349 = vadd.f32 %v1217, %v1348
    %v1350 = vpop.f32.mrb[0].mxu0
    %1351 = vmatprep.mubr.f32.mxu0 0.0
    %v1352 = vand.u32 %v930, 4294901760
    %v1353 = vsub.f32 %v930, %v1352
    %1354 = vmatmul.mubr.f32.gmra.mrb[0].mxu0 %v1353
    %v1355 = vpop.f32.mrb[0].mxu0
    %v1356 = vadd.f32 %v1223, %v1355
    %v1357 = vpop.f32.mrb[0].mxu0
    %1358 = vmatprep.mubr.f32.mxu0 0.0
    %v1359 = vand.u32 %v933, 4294901760
    %v1360 = vsub.f32 %v933, %v1359
    %1361 = vmatmul.mubr.f32.gmra.mrb[0].mxu0 %v1360
    %v1362 = vpop.f32.mrb[0].mxu0
    %v1363 = vadd.f32 %v1229, %v1362
    %v1364 = vpop.f32.mrb[0].mxu0
    %1365 = vmatprep.mubr.f32.mxu0 0.0
    %v1366 = vand.u32 %v936, 4294901760
    %v1367 = vsub.f32 %v936, %v1366
    %1368 = vmatmul.mubr.f32.gmra.mrb[0].mxu0 %v1367
    %v1369 = vpop.f32.mrb[0].mxu0
    %v1370 = vadd.f32 %v1235, %v1369
    %v1371 = vpop.f32.mrb[0].mxu0
    %1372 = vmatprep.mubr.f32.mxu0 0.0
    %v1373 = vand.u32 %v939, 4294901760
    %v1374 = vsub.f32 %v939, %v1373
    %1375 = vmatmul.mubr.f32.gmra.mrb[0].mxu0 %v1374
    %v1376 = vpop.f32.mrb[0].mxu0
    %v1377 = vadd.f32 %v1241, %v1376
    %v1378 = vpop.f32.mrb[0].mxu0
    %1379 = vmatprep.mubr.f32.mxu0 0.0
    %v1380 = vand.u32 %v942, 4294901760
    %v1381 = vsub.f32 %v942, %v1380
    %1382 = vmatmul.mubr.f32.gmra.mrb[0].mxu0 %v1381
    %v1383 = vpop.f32.mrb[0].mxu0
    %v1384 = vadd.f32 %v1247, %v1383
    %v1385 = vpop.f32.mrb[0].mxu0
    %1386 = vdwg.mxu0
    %1387 = vmatprep.subr.mxu0 0.0
    %v1388 = vand.u32 %v879, 4294901760
    %1389 = vmatpush1.msra.mxu0 %v1388
    %1390 = vmatprep.subr.mxu0 0.0
    %v1391 = vand.u32 %v880, 4294901760
    %1392 = vmatpush1.msra.mxu0 %v1391
    %1393 = vmatprep.subr.mxu0 0.0
    %v1394 = vand.u32 %v881, 4294901760
    %1395 = vmatpush1.msra.mxu0 %v1394
    %1396 = vmatprep.subr.mxu0 0.0
    %v1397 = vand.u32 %v882, 4294901760
    %1398 = vmatpush1.msra.mxu0 %v1397
    %1399 = vmatprep.subr.mxu0 0.0
    %v1400 = vand.u32 %v883, 4294901760
    %1401 = vmatpush1.msra.mxu0 %v1400
    %1402 = vmatprep.subr.mxu0 0.0
    %v1403 = vand.u32 %v884, 4294901760
    %1404 = vmatpush1.msra.mxu0 %v1403
    %1405 = vmatprep.subr.mxu0 0.0
    %v1406 = vand.u32 %v885, 4294901760
    %1407 = vmatpush1.msra.mxu0 %v1406
    %1408 = vmatprep.subr.mxu0 0.0
    %v1409 = vand.u32 %v886, 4294901760
    %1410 = vmatpush1.msra.mxu0 %v1409
    %1411 = vmatprep.subr.mxu0 0.0
    %1412 = vmatpush1.msra.mxu0 0.0
    %1413 = vmatprep.subr.mxu0 0.0
    %1414 = vmatpush1.msra.mxu0 0.0
    %1415 = vmatprep.subr.mxu0 0.0
    %1416 = vmatpush1.msra.mxu0 0.0
    %1417 = vmatprep.subr.mxu0 0.0
    %1418 = vmatpush1.msra.mxu0 0.0
    %1419 = vmatprep.subr.mxu0 0.0
    %1420 = vmatpush1.msra.mxu0 0.0
    %1421 = vmatprep.subr.mxu0 0.0
    %1422 = vmatpush1.msra.mxu0 0.0
    %1423 = vmatprep.subr.mxu0 0.0
    %1424 = vmatpush1.msra.mxu0 0.0
    %1425 = vmatprep.subr.mxu0 0.0
    %1426 = vmatpush1.msra.mxu0 0.0
    %1427 = vmatprep.subr.mxu0 0.0
    %1428 = vmatpush1.msra.mxu0 0.0
    %1429 = vmatprep.subr.mxu0 0.0
    %1430 = vmatpush1.msra.mxu0 0.0
    %1431 = vmatprep.subr.mxu0 0.0
    %1432 = vmatpush1.msra.mxu0 0.0
    %1433 = vmatprep.subr.mxu0 0.0
    %1434 = vmatpush1.msra.mxu0 0.0
    %1435 = vmatprep.subr.mxu0 0.0
    %1436 = vmatpush1.msra.mxu0 0.0
    %1437 = vmatprep.subr.mxu0 0.0
    %1438 = vmatpush1.msra.mxu0 0.0
    %1439 = vmatprep.subr.mxu0 0.0
    %1440 = vmatpush1.msra.mxu0 0.0
    %1441 = vmatprep.subr.mxu0 0.0
    %1442 = vmatpush1.msra.mxu0 0.0
    %1443 = vmatprep.subr.mxu0 0.0
    %1444 = vmatpush1.msra.mxu0 0.0
    %1445 = vmatprep.subr.mxu0 0.0
    %1446 = vmatpush1.msra.mxu0 0.0
    %1447 = vmatprep.subr.mxu0 0.0
    %1448 = vmatpush1.msra.mxu0 0.0
    %1449 = vmatprep.subr.mxu0 0.0
    %1450 = vmatpush1.msra.mxu0 0.0
    %1451 = vmatprep.subr.mxu0 0.0
    %1452 = vmatpush1.msra.mxu0 0.0
    %1453 = vmatprep.subr.mxu0 0.0
    %1454 = vmatpush1.msra.mxu0 0.0
    %1455 = vmatprep.subr.mxu0 0.0
    %1456 = vmatpush1.msra.mxu0 0.0
    %1457 = vmatprep.subr.mxu0 0.0
    %1458 = vmatpush1.msra.mxu0 0.0
    %1459 = vmatprep.mubr.f32.mxu0 0.0
    %v1460 = vand.u32 %v921, 4294901760
    %v1461 = vsub.f32 %v921, %v1460
    %v1462 = vand.u32 %v1461, 4294901760
    %1463 = vmatmul.mubr.f32.gmra.mrb[0].mxu0 %v1462
    %v1464 = vpop.f32.mrb[0].mxu0
    %v1465 = vadd.f32 %v1335, %v1464
    %v1466 = vpop.f32.mrb[0].mxu0
    %1467 = vmatprep.mubr.f32.mxu0 0.0
    %v1468 = vand.u32 %v924, 4294901760
    %v1469 = vsub.f32 %v924, %v1468
    %v1470 = vand.u32 %v1469, 4294901760
    %1471 = vmatmul.mubr.f32.gmra.mrb[0].mxu0 %v1470
    %v1472 = vpop.f32.mrb[0].mxu0
    %v1473 = vadd.f32 %v1342, %v1472
    %v1474 = vpop.f32.mrb[0].mxu0
    %1475 = vmatprep.mubr.f32.mxu0 0.0
    %v1476 = vand.u32 %v927, 4294901760
    %v1477 = vsub.f32 %v927, %v1476
    %v1478 = vand.u32 %v1477, 4294901760
    %1479 = vmatmul.mubr.f32.gmra.mrb[0].mxu0 %v1478
    %v1480 = vpop.f32.mrb[0].mxu0
    %v1481 = vadd.f32 %v1349, %v1480
    %v1482 = vpop.f32.mrb[0].mxu0
    %1483 = vmatprep.mubr.f32.mxu0 0.0
    %v1484 = vand.u32 %v930, 4294901760
    %v1485 = vsub.f32 %v930, %v1484
    %v1486 = vand.u32 %v1485, 4294901760
    %1487 = vmatmul.mubr.f32.gmra.mrb[0].mxu0 %v1486
    %v1488 = vpop.f32.mrb[0].mxu0
    %v1489 = vadd.f32 %v1356, %v1488
    %v1490 = vpop.f32.mrb[0].mxu0
    %1491 = vmatprep.mubr.f32.mxu0 0.0
    %v1492 = vand.u32 %v933, 4294901760
    %v1493 = vsub.f32 %v933, %v1492
    %v1494 = vand.u32 %v1493, 4294901760
    %1495 = vmatmul.mubr.f32.gmra.mrb[0].mxu0 %v1494
    %v1496 = vpop.f32.mrb[0].mxu0
    %v1497 = vadd.f32 %v1363, %v1496
    %v1498 = vpop.f32.mrb[0].mxu0
    %1499 = vmatprep.mubr.f32.mxu0 0.0
    %v1500 = vand.u32 %v936, 4294901760
    %v1501 = vsub.f32 %v936, %v1500
    %v1502 = vand.u32 %v1501, 4294901760
    %1503 = vmatmul.mubr.f32.gmra.mrb[0].mxu0 %v1502
    %v1504 = vpop.f32.mrb[0].mxu0
    %v1505 = vadd.f32 %v1370, %v1504
    %v1506 = vpop.f32.mrb[0].mxu0
    %1507 = vmatprep.mubr.f32.mxu0 0.0
    %v1508 = vand.u32 %v939, 4294901760
    %v1509 = vsub.f32 %v939, %v1508
    %v1510 = vand.u32 %v1509, 4294901760
    %1511 = vmatmul.mubr.f32.gmra.mrb[0].mxu0 %v1510
    %v1512 = vpop.f32.mrb[0].mxu0
    %v1513 = vadd.f32 %v1377, %v1512
    %v1514 = vpop.f32.mrb[0].mxu0
    %1515 = vmatprep.mubr.f32.mxu0 0.0
    %v1516 = vand.u32 %v942, 4294901760
    %v1517 = vsub.f32 %v942, %v1516
    %v1518 = vand.u32 %v1517, 4294901760
    %1519 = vmatmul.mubr.f32.gmra.mrb[0].mxu0 %v1518
    %v1520 = vpop.f32.mrb[0].mxu0
    %v1521 = vadd.f32 %v1384, %v1520
    %v1522 = vpop.f32.mrb[0].mxu0
    %1523 = vdwg.mxu0
    %1524 = vmatprep.subr.mxu0 0.0
    %v1525 = vand.u32 %v879, 4294901760
    %v1526 = vsub.f32 %v879, %v1525
    %v1527 = vand.u32 %v1526, 4294901760
    %1528 = vmatpush1.msra.mxu0 %v1527
    %1529 = vmatprep.subr.mxu0 0.0
    %v1530 = vand.u32 %v880, 4294901760
    %v1531 = vsub.f32 %v880, %v1530
    %v1532 = vand.u32 %v1531, 4294901760
    %1533 = vmatpush1.msra.mxu0 %v1532
    %1534 = vmatprep.subr.mxu0 0.0
    %v1535 = vand.u32 %v881, 4294901760
    %v1536 = vsub.f32 %v881, %v1535
    %v1537 = vand.u32 %v1536, 4294901760
    %1538 = vmatpush1.msra.mxu0 %v1537
    %1539 = vmatprep.subr.mxu0 0.0
    %v1540 = vand.u32 %v882, 4294901760
    %v1541 = vsub.f32 %v882, %v1540
    %v1542 = vand.u32 %v1541, 4294901760
    %1543 = vmatpush1.msra.mxu0 %v1542
    %1544 = vmatprep.subr.mxu0 0.0
    %v1545 = vand.u32 %v883, 4294901760
    %v1546 = vsub.f32 %v883, %v1545
    %v1547 = vand.u32 %v1546, 4294901760
    %1548 = vmatpush1.msra.mxu0 %v1547
    %1549 = vmatprep.subr.mxu0 0.0
    %v1550 = vand.u32 %v884, 4294901760
    %v1551 = vsub.f32 %v884, %v1550
    %v1552 = vand.u32 %v1551, 4294901760
    %1553 = vmatpush1.msra.mxu0 %v1552
    %1554 = vmatprep.subr.mxu0 0.0
    %v1555 = vand.u32 %v885, 4294901760
    %v1556 = vsub.f32 %v885, %v1555
    %v1557 = vand.u32 %v1556, 4294901760
    %1558 = vmatpush1.msra.mxu0 %v1557
    %1559 = vmatprep.subr.mxu0 0.0
    %v1560 = vand.u32 %v886, 4294901760
    %v1561 = vsub.f32 %v886, %v1560
    %v1562 = vand.u32 %v1561, 4294901760
    %1563 = vmatpush1.msra.mxu0 %v1562
    %1564 = vmatprep.subr.mxu0 0.0
    %1565 = vmatpush1.msra.mxu0 0.0
    %1566 = vmatprep.subr.mxu0 0.0
    %1567 = vmatpush1.msra.mxu0 0.0
    %1568 = vmatprep.subr.mxu0 0.0
    %1569 = vmatpush1.msra.mxu0 0.0
    %1570 = vmatprep.subr.mxu0 0.0
    %1571 = vmatpush1.msra.mxu0 0.0
    %1572 = vmatprep.subr.mxu0 0.0
    %1573 = vmatpush1.msra.mxu0 0.0
    %1574 = vmatprep.subr.mxu0 0.0
    %1575 = vmatpush1.msra.mxu0 0.0
    %1576 = vmatprep.subr.mxu0 0.0
    %1577 = vmatpush1.msra.mxu0 0.0
    %1578 = vmatprep.subr.mxu0 0.0
    %1579 = vmatpush1.msra.mxu0 0.0
    %1580 = vmatprep.subr.mxu0 0.0
    %1581 = vmatpush1.msra.mxu0 0.0
    %1582 = vmatprep.subr.mxu0 0.0
    %1583 = vmatpush1.msra.mxu0 0.0
    %1584 = vmatprep.subr.mxu0 0.0
    %1585 = vmatpush1.msra.mxu0 0.0
    %1586 = vmatprep.subr.mxu0 0.0
    %1587 = vmatpush1.msra.mxu0 0.0
    %1588 = vmatprep.subr.mxu0 0.0
    %1589 = vmatpush1.msra.mxu0 0.0
    %1590 = vmatprep.subr.mxu0 0.0
    %1591 = vmatpush1.msra.mxu0 0.0
    %1592 = vmatprep.subr.mxu0 0.0
    %1593 = vmatpush1.msra.mxu0 0.0
    %1594 = vmatprep.subr.mxu0 0.0
    %1595 = vmatpush1.msra.mxu0 0.0
    %1596 = vmatprep.subr.mxu0 0.0
    %1597 = vmatpush1.msra.mxu0 0.0
    %1598 = vmatprep.subr.mxu0 0.0
    %1599 = vmatpush1.msra.mxu0 0.0
    %1600 = vmatprep.subr.mxu0 0.0
    %1601 = vmatpush1.msra.mxu0 0.0
    %1602 = vmatprep.subr.mxu0 0.0
    %1603 = vmatpush1.msra.mxu0 0.0
    %1604 = vmatprep.subr.mxu0 0.0
    %1605 = vmatpush1.msra.mxu0 0.0
    %1606 = vmatprep.subr.mxu0 0.0
    %1607 = vmatpush1.msra.mxu0 0.0
    %1608 = vmatprep.subr.mxu0 0.0
    %1609 = vmatpush1.msra.mxu0 0.0
    %1610 = vmatprep.subr.mxu0 0.0
    %1611 = vmatpush1.msra.mxu0 0.0
    %1612 = vmatprep.mubr.f32.mxu0 0.0
    %v1613 = vand.u32 %v921, 4294901760
    %1614 = vmatmul.mubr.f32.gmra.mrb[0].mxu0 %v1613
    %v1615 = vpop.f32.mrb[0].mxu0
    %v1616 = vadd.f32 %v1465, %v1615
    %v1617 = vpop.f32.mrb[0].mxu0
    %1618 = vmatprep.mubr.f32.mxu0 0.0
    %v1619 = vand.u32 %v924, 4294901760
    %1620 = vmatmul.mubr.f32.gmra.mrb[0].mxu0 %v1619
    %v1621 = vpop.f32.mrb[0].mxu0
    %v1622 = vadd.f32 %v1473, %v1621
    %v1623 = vpop.f32.mrb[0].mxu0
    %1624 = vmatprep.mubr.f32.mxu0 0.0
    %v1625 = vand.u32 %v927, 4294901760
    %1626 = vmatmul.mubr.f32.gmra.mrb[0].mxu0 %v1625
    %v1627 = vpop.f32.mrb[0].mxu0
    %v1628 = vadd.f32 %v1481, %v1627
    %v1629 = vpop.f32.mrb[0].mxu0
    %1630 = vmatprep.mubr.f32.mxu0 0.0
    %v1631 = vand.u32 %v930, 4294901760
    %1632 = vmatmul.mubr.f32.gmra.mrb[0].mxu0 %v1631
    %v1633 = vpop.f32.mrb[0].mxu0
    %v1634 = vadd.f32 %v1489, %v1633
    %v1635 = vpop.f32.mrb[0].mxu0
    %1636 = vmatprep.mubr.f32.mxu0 0.0
    %v1637 = vand.u32 %v933, 4294901760
    %1638 = vmatmul.mubr.f32.gmra.mrb[0].mxu0 %v1637
    %v1639 = vpop.f32.mrb[0].mxu0
    %v1640 = vadd.f32 %v1497, %v1639
    %v1641 = vpop.f32.mrb[0].mxu0
    %1642 = vmatprep.mubr.f32.mxu0 0.0
    %v1643 = vand.u32 %v936, 4294901760
    %1644 = vmatmul.mubr.f32.gmra.mrb[0].mxu0 %v1643
    %v1645 = vpop.f32.mrb[0].mxu0
    %v1646 = vadd.f32 %v1505, %v1645
    %v1647 = vpop.f32.mrb[0].mxu0
    %1648 = vmatprep.mubr.f32.mxu0 0.0
    %v1649 = vand.u32 %v939, 4294901760
    %1650 = vmatmul.mubr.f32.gmra.mrb[0].mxu0 %v1649
    %v1651 = vpop.f32.mrb[0].mxu0
    %v1652 = vadd.f32 %v1513, %v1651
    %v1653 = vpop.f32.mrb[0].mxu0
    %1654 = vmatprep.mubr.f32.mxu0 0.0
    %v1655 = vand.u32 %v942, 4294901760
    %1656 = vmatmul.mubr.f32.gmra.mrb[0].mxu0 %v1655
    %v1657 = vpop.f32.mrb[0].mxu0
    %v1658 = vadd.f32 %v1521, %v1657
    %v1659 = vpop.f32.mrb[0].mxu0
    %1660 = vdwg.mxu0
    %1661 = vmatprep.subr.mxu0 0.0
    %v1662 = vand.u32 %v879, 4294901760
    %1663 = vmatpush1.msra.mxu0 %v1662
    %1664 = vmatprep.subr.mxu0 0.0
    %v1665 = vand.u32 %v880, 4294901760
    %1666 = vmatpush1.msra.mxu0 %v1665
    %1667 = vmatprep.subr.mxu0 0.0
    %v1668 = vand.u32 %v881, 4294901760
    %1669 = vmatpush1.msra.mxu0 %v1668
    %1670 = vmatprep.subr.mxu0 0.0
    %v1671 = vand.u32 %v882, 4294901760
    %1672 = vmatpush1.msra.mxu0 %v1671
    %1673 = vmatprep.subr.mxu0 0.0
    %v1674 = vand.u32 %v883, 4294901760
    %1675 = vmatpush1.msra.mxu0 %v1674
    %1676 = vmatprep.subr.mxu0 0.0
    %v1677 = vand.u32 %v884, 4294901760
    %1678 = vmatpush1.msra.mxu0 %v1677
    %1679 = vmatprep.subr.mxu0 0.0
    %v1680 = vand.u32 %v885, 4294901760
    %1681 = vmatpush1.msra.mxu0 %v1680
    %1682 = vmatprep.subr.mxu0 0.0
    %v1683 = vand.u32 %v886, 4294901760
    %1684 = vmatpush1.msra.mxu0 %v1683
    %1685 = vmatprep.subr.mxu0 0.0
    %1686 = vmatpush1.msra.mxu0 0.0
    %1687 = vmatprep.subr.mxu0 0.0
    %1688 = vmatpush1.msra.mxu0 0.0
    %1689 = vmatprep.subr.mxu0 0.0
    %1690 = vmatpush1.msra.mxu0 0.0
    %1691 = vmatprep.subr.mxu0 0.0
    %1692 = vmatpush1.msra.mxu0 0.0
    %1693 = vmatprep.subr.mxu0 0.0
    %1694 = vmatpush1.msra.mxu0 0.0
    %1695 = vmatprep.subr.mxu0 0.0
    %1696 = vmatpush1.msra.mxu0 0.0
    %1697 = vmatprep.subr.mxu0 0.0
    %1698 = vmatpush1.msra.mxu0 0.0
    %1699 = vmatprep.subr.mxu0 0.0
    %1700 = vmatpush1.msra.mxu0 0.0
    %1701 = vmatprep.subr.mxu0 0.0
    %1702 = vmatpush1.msra.mxu0 0.0
    %1703 = vmatprep.subr.mxu0 0.0
    %1704 = vmatpush1.msra.mxu0 0.0
    %1705 = vmatprep.subr.mxu0 0.0
    %1706 = vmatpush1.msra.mxu0 0.0
    %1707 = vmatprep.subr.mxu0 0.0
    %1708 = vmatpush1.msra.mxu0 0.0
    %1709 = vmatprep.subr.mxu0 0.0
    %1710 = vmatpush1.msra.mxu0 0.0
    %1711 = vmatprep.subr.mxu0 0.0
    %1712 = vmatpush1.msra.mxu0 0.0
    %1713 = vmatprep.subr.mxu0 0.0
    %1714 = vmatpush1.msra.mxu0 0.0
    %1715 = vmatprep.subr.mxu0 0.0
    %1716 = vmatpush1.msra.mxu0 0.0
    %1717 = vmatprep.subr.mxu0 0.0
    %1718 = vmatpush1.msra.mxu0 0.0
    %1719 = vmatprep.subr.mxu0 0.0
    %1720 = vmatpush1.msra.mxu0 0.0
    %1721 = vmatprep.subr.mxu0 0.0
    %1722 = vmatpush1.msra.mxu0 0.0
    %1723 = vmatprep.subr.mxu0 0.0
    %1724 = vmatpush1.msra.mxu0 0.0
    %1725 = vmatprep.subr.mxu0 0.0
    %1726 = vmatpush1.msra.mxu0 0.0
    %1727 = vmatprep.subr.mxu0 0.0
    %1728 = vmatpush1.msra.mxu0 0.0
    %1729 = vmatprep.subr.mxu0 0.0
    %1730 = vmatpush1.msra.mxu0 0.0
    %1731 = vmatprep.subr.mxu0 0.0
    %1732 = vmatpush1.msra.mxu0 0.0
    %1733 = vmatprep.mubr.f32.mxu0 0.0
    %v1734 = vand.u32 %v921, 4294901760
    %1735 = vmatmul.mubr.f32.gmra.mrb[0].mxu0 %v1734
    %v1736 = vpop.f32.mrb[0].mxu0
    %v1737 = vadd.f32 %v1616, %v1736
    %v1738 = vpop.f32.mrb[0].mxu0
    %1739 = vmatprep.mubr.f32.mxu0 0.0
    %v1740 = vand.u32 %v924, 4294901760
    %1741 = vmatmul.mubr.f32.gmra.mrb[0].mxu0 %v1740
    %v1742 = vpop.f32.mrb[0].mxu0
    %v1743 = vadd.f32 %v1622, %v1742
    %v1744 = vpop.f32.mrb[0].mxu0
    %1745 = vmatprep.mubr.f32.mxu0 0.0
    %v1746 = vand.u32 %v927, 4294901760
    %1747 = vmatmul.mubr.f32.gmra.mrb[0].mxu0 %v1746
    %v1748 = vpop.f32.mrb[0].mxu0
    %v1749 = vadd.f32 %v1628, %v1748
    %v1750 = vpop.f32.mrb[0].mxu0
    %1751 = vmatprep.mubr.f32.mxu0 0.0
    %v1752 = vand.u32 %v930, 4294901760
    %1753 = vmatmul.mubr.f32.gmra.mrb[0].mxu0 %v1752
    %v1754 = vpop.f32.mrb[0].mxu0
    %v1755 = vadd.f32 %v1634, %v1754
    %v1756 = vpop.f32.mrb[0].mxu0
    %1757 = vmatprep.mubr.f32.mxu0 0.0
    %v1758 = vand.u32 %v933, 4294901760
    %1759 = vmatmul.mubr.f32.gmra.mrb[0].mxu0 %v1758
    %v1760 = vpop.f32.mrb[0].mxu0
    %v1761 = vadd.f32 %v1640, %v1760
    %v1762 = vpop.f32.mrb[0].mxu0
    %1763 = vmatprep.mubr.f32.mxu0 0.0
    %v1764 = vand.u32 %v936, 4294901760
    %1765 = vmatmul.mubr.f32.gmra.mrb[0].mxu0 %v1764
    %v1766 = vpop.f32.mrb[0].mxu0
    %v1767 = vadd.f32 %v1646, %v1766
    %v1768 = vpop.f32.mrb[0].mxu0
    %1769 = vmatprep.mubr.f32.mxu0 0.0
    %v1770 = vand.u32 %v939, 4294901760
    %1771 = vmatmul.mubr.f32.gmra.mrb[0].mxu0 %v1770
    %v1772 = vpop.f32.mrb[0].mxu0
    %v1773 = vadd.f32 %v1652, %v1772
    %v1774 = vpop.f32.mrb[0].mxu0
    %1775 = vmatprep.mubr.f32.mxu0 0.0
    %v1776 = vand.u32 %v942, 4294901760
    %1777 = vmatmul.mubr.f32.gmra.mrb[0].mxu0 %v1776
    %v1778 = vpop.f32.mrb[0].mxu0
    %v1779 = vadd.f32 %v1658, %v1778
    %v1780 = vpop.f32.mrb[0].mxu0
    %1781 = vdwg.mxu0
    %v1782 = vmax.f32 %v1737, 0.0
    %v1783 = vmax.f32 %v1743, 0.0
    %v1784 = vmax.f32 %v1749, 0.0
    %v1785 = vmax.f32 %v1755, 0.0
    %v1786 = vmax.f32 %v1761, 0.0
    %v1787 = vmax.f32 %v1767, 0.0
    %v1788 = vmax.f32 %v1773, 0.0
    %v1789 = vmax.f32 %v1779, 0.0
    %1790 = vset.pattern.permute.xlu0 2
    %1791 = vperm.xlu0 %1790, %v46
    %v1792 = vpop.permute.xlu0 %1791
    %1794 = vset.pattern.permute.xlu0 2
    %1795 = vperm.xlu0 %1794, %v47
    %v1796 = vpop.permute.xlu0 %1795
    %1798 = vset.pattern.permute.xlu0 2
    %1799 = vperm.xlu0 %1798, %v48
    %v1800 = vpop.permute.xlu0 %1799
    %1802 = vset.pattern.permute.xlu0 2
    %1803 = vperm.xlu0 %1802, %v49
    %v1804 = vpop.permute.xlu0 %1803
    %1806 = vset.pattern.permute.xlu0 2
    %1807 = vperm.xlu0 %1806, %v50
    %v1808 = vpop.permute.xlu0 %1807
    %1810 = vset.pattern.permute.xlu0 2
    %1811 = vperm.xlu0 %1810, %v51
    %v1812 = vpop.permute.xlu0 %1811
    %1814 = vset.pattern.permute.xlu0 2
    %1815 = vperm.xlu0 %1814, %v52
    %v1816 = vpop.permute.xlu0 %1815
    %1818 = vset.pattern.permute.xlu0 2
    %1819 = vperm.xlu0 %1818, %v53
    %v1820 = vpop.permute.xlu0 %1819
    %v1823 = vsel %vm919, %v37, 0
    %v1826 = vsel %vm919, %v38, 0
    %v1829 = vsel %vm919, %v39, 0
    %v1832 = vsel %vm919, %v40, 0
    %v1835 = vsel %vm919, %v41, 0
    %v1838 = vsel %vm919, %v42, 0
    %v1841 = vsel %vm919, %v43, 0
    %v1844 = vsel %vm919, %v44, 0
    %1846 = vmatprep.subr.mxu0 0.0
    %v1847 = vand.u32 %v1782, 4294901760
    %1848 = vmatpush1.msra.mxu0 %v1847
    %1849 = vmatprep.subr.mxu0 0.0
    %v1850 = vand.u32 %v1783, 4294901760
    %1851 = vmatpush1.msra.mxu0 %v1850
    %1852 = vmatprep.subr.mxu0 0.0
    %v1853 = vand.u32 %v1784, 4294901760
    %1854 = vmatpush1.msra.mxu0 %v1853
    %1855 = vmatprep.subr.mxu0 0.0
    %v1856 = vand.u32 %v1785, 4294901760
    %1857 = vmatpush1.msra.mxu0 %v1856
    %1858 = vmatprep.subr.mxu0 0.0
    %v1859 = vand.u32 %v1786, 4294901760
    %1860 = vmatpush1.msra.mxu0 %v1859
    %1861 = vmatprep.subr.mxu0 0.0
    %v1862 = vand.u32 %v1787, 4294901760
    %1863 = vmatpush1.msra.mxu0 %v1862
    %1864 = vmatprep.subr.mxu0 0.0
    %v1865 = vand.u32 %v1788, 4294901760
    %1866 = vmatpush1.msra.mxu0 %v1865
    %1867 = vmatprep.subr.mxu0 0.0
    %v1868 = vand.u32 %v1789, 4294901760
    %1869 = vmatpush1.msra.mxu0 %v1868
    %1870 = vmatprep.subr.mxu0 0.0
    %1871 = vmatpush1.msra.mxu0 0.0
    %1872 = vmatprep.subr.mxu0 0.0
    %1873 = vmatpush1.msra.mxu0 0.0
    %1874 = vmatprep.subr.mxu0 0.0
    %1875 = vmatpush1.msra.mxu0 0.0
    %1876 = vmatprep.subr.mxu0 0.0
    %1877 = vmatpush1.msra.mxu0 0.0
    %1878 = vmatprep.subr.mxu0 0.0
    %1879 = vmatpush1.msra.mxu0 0.0
    %1880 = vmatprep.subr.mxu0 0.0
    %1881 = vmatpush1.msra.mxu0 0.0
    %1882 = vmatprep.subr.mxu0 0.0
    %1883 = vmatpush1.msra.mxu0 0.0
    %1884 = vmatprep.subr.mxu0 0.0
    %1885 = vmatpush1.msra.mxu0 0.0
    %1886 = vmatprep.subr.mxu0 0.0
    %1887 = vmatpush1.msra.mxu0 0.0
    %1888 = vmatprep.subr.mxu0 0.0
    %1889 = vmatpush1.msra.mxu0 0.0
    %1890 = vmatprep.subr.mxu0 0.0
    %1891 = vmatpush1.msra.mxu0 0.0
    %1892 = vmatprep.subr.mxu0 0.0
    %1893 = vmatpush1.msra.mxu0 0.0
    %1894 = vmatprep.subr.mxu0 0.0
    %1895 = vmatpush1.msra.mxu0 0.0
    %1896 = vmatprep.subr.mxu0 0.0
    %1897 = vmatpush1.msra.mxu0 0.0
    %1898 = vmatprep.subr.mxu0 0.0
    %1899 = vmatpush1.msra.mxu0 0.0
    %1900 = vmatprep.subr.mxu0 0.0
    %1901 = vmatpush1.msra.mxu0 0.0
    %1902 = vmatprep.subr.mxu0 0.0
    %1903 = vmatpush1.msra.mxu0 0.0
    %1904 = vmatprep.subr.mxu0 0.0
    %1905 = vmatpush1.msra.mxu0 0.0
    %1906 = vmatprep.subr.mxu0 0.0
    %1907 = vmatpush1.msra.mxu0 0.0
    %1908 = vmatprep.subr.mxu0 0.0
    %1909 = vmatpush1.msra.mxu0 0.0
    %1910 = vmatprep.subr.mxu0 0.0
    %1911 = vmatpush1.msra.mxu0 0.0
    %1912 = vmatprep.subr.mxu0 0.0
    %1913 = vmatpush1.msra.mxu0 0.0
    %1914 = vmatprep.subr.mxu0 0.0
    %1915 = vmatpush1.msra.mxu0 0.0
    %1916 = vmatprep.subr.mxu0 0.0
    %1917 = vmatpush1.msra.mxu0 0.0
    %1918 = vmatprep.mubr.f32.mxu0 0.0
    %v1919 = vand.u32 %v1823, 4294901760
    %v1920 = vsub.f32 %v1823, %v1919
    %v1921 = vand.u32 %v1920, 4294901760
    %v1922 = vsub.f32 %v1920, %v1921
    %v1923 = vand.u32 %v1922, 4294901760
    %1924 = vmatmul.mubr.f32.gmra.mrb[0].mxu0 %v1923
    %v1925 = vpop.f32.mrb[0].mxu0
    %v1926 = vadd.f32 %v1792, %v1925
    %v1927 = vpop.f32.mrb[0].mxu0
    %1928 = vmatprep.mubr.f32.mxu0 0.0
    %v1929 = vand.u32 %v1826, 4294901760
    %v1930 = vsub.f32 %v1826, %v1929
    %v1931 = vand.u32 %v1930, 4294901760
    %v1932 = vsub.f32 %v1930, %v1931
    %v1933 = vand.u32 %v1932, 4294901760
    %1934 = vmatmul.mubr.f32.gmra.mrb[0].mxu0 %v1933
    %v1935 = vpop.f32.mrb[0].mxu0
    %v1936 = vadd.f32 %v1796, %v1935
    %v1937 = vpop.f32.mrb[0].mxu0
    %1938 = vmatprep.mubr.f32.mxu0 0.0
    %v1939 = vand.u32 %v1829, 4294901760
    %v1940 = vsub.f32 %v1829, %v1939
    %v1941 = vand.u32 %v1940, 4294901760
    %v1942 = vsub.f32 %v1940, %v1941
    %v1943 = vand.u32 %v1942, 4294901760
    %1944 = vmatmul.mubr.f32.gmra.mrb[0].mxu0 %v1943
    %v1945 = vpop.f32.mrb[0].mxu0
    %v1946 = vadd.f32 %v1800, %v1945
    %v1947 = vpop.f32.mrb[0].mxu0
    %1948 = vmatprep.mubr.f32.mxu0 0.0
    %v1949 = vand.u32 %v1832, 4294901760
    %v1950 = vsub.f32 %v1832, %v1949
    %v1951 = vand.u32 %v1950, 4294901760
    %v1952 = vsub.f32 %v1950, %v1951
    %v1953 = vand.u32 %v1952, 4294901760
    %1954 = vmatmul.mubr.f32.gmra.mrb[0].mxu0 %v1953
    %v1955 = vpop.f32.mrb[0].mxu0
    %v1956 = vadd.f32 %v1804, %v1955
    %v1957 = vpop.f32.mrb[0].mxu0
    %1958 = vmatprep.mubr.f32.mxu0 0.0
    %v1959 = vand.u32 %v1835, 4294901760
    %v1960 = vsub.f32 %v1835, %v1959
    %v1961 = vand.u32 %v1960, 4294901760
    %v1962 = vsub.f32 %v1960, %v1961
    %v1963 = vand.u32 %v1962, 4294901760
    %1964 = vmatmul.mubr.f32.gmra.mrb[0].mxu0 %v1963
    %v1965 = vpop.f32.mrb[0].mxu0
    %v1966 = vadd.f32 %v1808, %v1965
    %v1967 = vpop.f32.mrb[0].mxu0
    %1968 = vmatprep.mubr.f32.mxu0 0.0
    %v1969 = vand.u32 %v1838, 4294901760
    %v1970 = vsub.f32 %v1838, %v1969
    %v1971 = vand.u32 %v1970, 4294901760
    %v1972 = vsub.f32 %v1970, %v1971
    %v1973 = vand.u32 %v1972, 4294901760
    %1974 = vmatmul.mubr.f32.gmra.mrb[0].mxu0 %v1973
    %v1975 = vpop.f32.mrb[0].mxu0
    %v1976 = vadd.f32 %v1812, %v1975
    %v1977 = vpop.f32.mrb[0].mxu0
    %1978 = vmatprep.mubr.f32.mxu0 0.0
    %v1979 = vand.u32 %v1841, 4294901760
    %v1980 = vsub.f32 %v1841, %v1979
    %v1981 = vand.u32 %v1980, 4294901760
    %v1982 = vsub.f32 %v1980, %v1981
    %v1983 = vand.u32 %v1982, 4294901760
    %1984 = vmatmul.mubr.f32.gmra.mrb[0].mxu0 %v1983
    %v1985 = vpop.f32.mrb[0].mxu0
    %v1986 = vadd.f32 %v1816, %v1985
    %v1987 = vpop.f32.mrb[0].mxu0
    %1988 = vmatprep.mubr.f32.mxu0 0.0
    %v1989 = vand.u32 %v1844, 4294901760
    %v1990 = vsub.f32 %v1844, %v1989
    %v1991 = vand.u32 %v1990, 4294901760
    %v1992 = vsub.f32 %v1990, %v1991
    %v1993 = vand.u32 %v1992, 4294901760
    %1994 = vmatmul.mubr.f32.gmra.mrb[0].mxu0 %v1993
    %v1995 = vpop.f32.mrb[0].mxu0
    %v1996 = vadd.f32 %v1820, %v1995
    %v1997 = vpop.f32.mrb[0].mxu0
    %1998 = vdwg.mxu0
    %1999 = vmatprep.subr.mxu0 0.0
    %v2000 = vand.u32 %v1782, 4294901760
    %v2001 = vsub.f32 %v1782, %v2000
    %v2002 = vand.u32 %v2001, 4294901760
    %v2003 = vsub.f32 %v2001, %v2002
    %v2004 = vand.u32 %v2003, 4294901760
    %2005 = vmatpush1.msra.mxu0 %v2004
    %2006 = vmatprep.subr.mxu0 0.0
    %v2007 = vand.u32 %v1783, 4294901760
    %v2008 = vsub.f32 %v1783, %v2007
    %v2009 = vand.u32 %v2008, 4294901760
    %v2010 = vsub.f32 %v2008, %v2009
    %v2011 = vand.u32 %v2010, 4294901760
    %2012 = vmatpush1.msra.mxu0 %v2011
    %2013 = vmatprep.subr.mxu0 0.0
    %v2014 = vand.u32 %v1784, 4294901760
    %v2015 = vsub.f32 %v1784, %v2014
    %v2016 = vand.u32 %v2015, 4294901760
    %v2017 = vsub.f32 %v2015, %v2016
    %v2018 = vand.u32 %v2017, 4294901760
    %2019 = vmatpush1.msra.mxu0 %v2018
    %2020 = vmatprep.subr.mxu0 0.0
    %v2021 = vand.u32 %v1785, 4294901760
    %v2022 = vsub.f32 %v1785, %v2021
    %v2023 = vand.u32 %v2022, 4294901760
    %v2024 = vsub.f32 %v2022, %v2023
    %v2025 = vand.u32 %v2024, 4294901760
    %2026 = vmatpush1.msra.mxu0 %v2025
    %2027 = vmatprep.subr.mxu0 0.0
    %v2028 = vand.u32 %v1786, 4294901760
    %v2029 = vsub.f32 %v1786, %v2028
    %v2030 = vand.u32 %v2029, 4294901760
    %v2031 = vsub.f32 %v2029, %v2030
    %v2032 = vand.u32 %v2031, 4294901760
    %2033 = vmatpush1.msra.mxu0 %v2032
    %2034 = vmatprep.subr.mxu0 0.0
    %v2035 = vand.u32 %v1787, 4294901760
    %v2036 = vsub.f32 %v1787, %v2035
    %v2037 = vand.u32 %v2036, 4294901760
    %v2038 = vsub.f32 %v2036, %v2037
    %v2039 = vand.u32 %v2038, 4294901760
    %2040 = vmatpush1.msra.mxu0 %v2039
    %2041 = vmatprep.subr.mxu0 0.0
    %v2042 = vand.u32 %v1788, 4294901760
    %v2043 = vsub.f32 %v1788, %v2042
    %v2044 = vand.u32 %v2043, 4294901760
    %v2045 = vsub.f32 %v2043, %v2044
    %v2046 = vand.u32 %v2045, 4294901760
    %2047 = vmatpush1.msra.mxu0 %v2046
    %2048 = vmatprep.subr.mxu0 0.0
    %v2049 = vand.u32 %v1789, 4294901760
    %v2050 = vsub.f32 %v1789, %v2049
    %v2051 = vand.u32 %v2050, 4294901760
    %v2052 = vsub.f32 %v2050, %v2051
    %v2053 = vand.u32 %v2052, 4294901760
    %2054 = vmatpush1.msra.mxu0 %v2053
    %2055 = vmatprep.subr.mxu0 0.0
    %2056 = vmatpush1.msra.mxu0 0.0
    %2057 = vmatprep.subr.mxu0 0.0
    %2058 = vmatpush1.msra.mxu0 0.0
    %2059 = vmatprep.subr.mxu0 0.0
    %2060 = vmatpush1.msra.mxu0 0.0
    %2061 = vmatprep.subr.mxu0 0.0
    %2062 = vmatpush1.msra.mxu0 0.0
    %2063 = vmatprep.subr.mxu0 0.0
    %2064 = vmatpush1.msra.mxu0 0.0
    %2065 = vmatprep.subr.mxu0 0.0
    %2066 = vmatpush1.msra.mxu0 0.0
    %2067 = vmatprep.subr.mxu0 0.0
    %2068 = vmatpush1.msra.mxu0 0.0
    %2069 = vmatprep.subr.mxu0 0.0
    %2070 = vmatpush1.msra.mxu0 0.0
    %2071 = vmatprep.subr.mxu0 0.0
    %2072 = vmatpush1.msra.mxu0 0.0
    %2073 = vmatprep.subr.mxu0 0.0
    %2074 = vmatpush1.msra.mxu0 0.0
    %2075 = vmatprep.subr.mxu0 0.0
    %2076 = vmatpush1.msra.mxu0 0.0
    %2077 = vmatprep.subr.mxu0 0.0
    %2078 = vmatpush1.msra.mxu0 0.0
    %2079 = vmatprep.subr.mxu0 0.0
    %2080 = vmatpush1.msra.mxu0 0.0
    %2081 = vmatprep.subr.mxu0 0.0
    %2082 = vmatpush1.msra.mxu0 0.0
    %2083 = vmatprep.subr.mxu0 0.0
    %2084 = vmatpush1.msra.mxu0 0.0
    %2085 = vmatprep.subr.mxu0 0.0
    %2086 = vmatpush1.msra.mxu0 0.0
    %2087 = vmatprep.subr.mxu0 0.0
    %2088 = vmatpush1.msra.mxu0 0.0
    %2089 = vmatprep.subr.mxu0 0.0
    %2090 = vmatpush1.msra.mxu0 0.0
    %2091 = vmatprep.subr.mxu0 0.0
    %2092 = vmatpush1.msra.mxu0 0.0
    %2093 = vmatprep.subr.mxu0 0.0
    %2094 = vmatpush1.msra.mxu0 0.0
    %2095 = vmatprep.subr.mxu0 0.0
    %2096 = vmatpush1.msra.mxu0 0.0
    %2097 = vmatprep.subr.mxu0 0.0
    %2098 = vmatpush1.msra.mxu0 0.0
    %2099 = vmatprep.subr.mxu0 0.0
    %2100 = vmatpush1.msra.mxu0 0.0
    %2101 = vmatprep.subr.mxu0 0.0
    %2102 = vmatpush1.msra.mxu0 0.0
    %2103 = vmatprep.mubr.f32.mxu0 0.0
    %v2104 = vand.u32 %v1823, 4294901760
    %2105 = vmatmul.mubr.f32.gmra.mrb[0].mxu0 %v2104
    %v2106 = vpop.f32.mrb[0].mxu0
    %v2107 = vadd.f32 %v1926, %v2106
    %v2108 = vpop.f32.mrb[0].mxu0
    %2109 = vmatprep.mubr.f32.mxu0 0.0
    %v2110 = vand.u32 %v1826, 4294901760
    %2111 = vmatmul.mubr.f32.gmra.mrb[0].mxu0 %v2110
    %v2112 = vpop.f32.mrb[0].mxu0
    %v2113 = vadd.f32 %v1936, %v2112
    %v2114 = vpop.f32.mrb[0].mxu0
    %2115 = vmatprep.mubr.f32.mxu0 0.0
    %v2116 = vand.u32 %v1829, 4294901760
    %2117 = vmatmul.mubr.f32.gmra.mrb[0].mxu0 %v2116
    %v2118 = vpop.f32.mrb[0].mxu0
    %v2119 = vadd.f32 %v1946, %v2118
    %v2120 = vpop.f32.mrb[0].mxu0
    %2121 = vmatprep.mubr.f32.mxu0 0.0
    %v2122 = vand.u32 %v1832, 4294901760
    %2123 = vmatmul.mubr.f32.gmra.mrb[0].mxu0 %v2122
    %v2124 = vpop.f32.mrb[0].mxu0
    %v2125 = vadd.f32 %v1956, %v2124
    %v2126 = vpop.f32.mrb[0].mxu0
    %2127 = vmatprep.mubr.f32.mxu0 0.0
    %v2128 = vand.u32 %v1835, 4294901760
    %2129 = vmatmul.mubr.f32.gmra.mrb[0].mxu0 %v2128
    %v2130 = vpop.f32.mrb[0].mxu0
    %v2131 = vadd.f32 %v1966, %v2130
    %v2132 = vpop.f32.mrb[0].mxu0
    %2133 = vmatprep.mubr.f32.mxu0 0.0
    %v2134 = vand.u32 %v1838, 4294901760
    %2135 = vmatmul.mubr.f32.gmra.mrb[0].mxu0 %v2134
    %v2136 = vpop.f32.mrb[0].mxu0
    %v2137 = vadd.f32 %v1976, %v2136
    %v2138 = vpop.f32.mrb[0].mxu0
    %2139 = vmatprep.mubr.f32.mxu0 0.0
    %v2140 = vand.u32 %v1841, 4294901760
    %2141 = vmatmul.mubr.f32.gmra.mrb[0].mxu0 %v2140
    %v2142 = vpop.f32.mrb[0].mxu0
    %v2143 = vadd.f32 %v1986, %v2142
    %v2144 = vpop.f32.mrb[0].mxu0
    %2145 = vmatprep.mubr.f32.mxu0 0.0
    %v2146 = vand.u32 %v1844, 4294901760
    %2147 = vmatmul.mubr.f32.gmra.mrb[0].mxu0 %v2146
    %v2148 = vpop.f32.mrb[0].mxu0
    %v2149 = vadd.f32 %v1996, %v2148
    %v2150 = vpop.f32.mrb[0].mxu0
    %2151 = vdwg.mxu0
    %2152 = vmatprep.subr.mxu0 0.0
    %v2153 = vand.u32 %v1782, 4294901760
    %v2154 = vsub.f32 %v1782, %v2153
    %2155 = vmatpush1.msra.mxu0 %v2154
    %2156 = vmatprep.subr.mxu0 0.0
    %v2157 = vand.u32 %v1783, 4294901760
    %v2158 = vsub.f32 %v1783, %v2157
    %2159 = vmatpush1.msra.mxu0 %v2158
    %2160 = vmatprep.subr.mxu0 0.0
    %v2161 = vand.u32 %v1784, 4294901760
    %v2162 = vsub.f32 %v1784, %v2161
    %2163 = vmatpush1.msra.mxu0 %v2162
    %2164 = vmatprep.subr.mxu0 0.0
    %v2165 = vand.u32 %v1785, 4294901760
    %v2166 = vsub.f32 %v1785, %v2165
    %2167 = vmatpush1.msra.mxu0 %v2166
    %2168 = vmatprep.subr.mxu0 0.0
    %v2169 = vand.u32 %v1786, 4294901760
    %v2170 = vsub.f32 %v1786, %v2169
    %2171 = vmatpush1.msra.mxu0 %v2170
    %2172 = vmatprep.subr.mxu0 0.0
    %v2173 = vand.u32 %v1787, 4294901760
    %v2174 = vsub.f32 %v1787, %v2173
    %2175 = vmatpush1.msra.mxu0 %v2174
    %2176 = vmatprep.subr.mxu0 0.0
    %v2177 = vand.u32 %v1788, 4294901760
    %v2178 = vsub.f32 %v1788, %v2177
    %2179 = vmatpush1.msra.mxu0 %v2178
    %2180 = vmatprep.subr.mxu0 0.0
    %v2181 = vand.u32 %v1789, 4294901760
    %v2182 = vsub.f32 %v1789, %v2181
    %2183 = vmatpush1.msra.mxu0 %v2182
    %2184 = vmatprep.subr.mxu0 0.0
    %2185 = vmatpush1.msra.mxu0 0.0
    %2186 = vmatprep.subr.mxu0 0.0
    %2187 = vmatpush1.msra.mxu0 0.0
    %2188 = vmatprep.subr.mxu0 0.0
    %2189 = vmatpush1.msra.mxu0 0.0
    %2190 = vmatprep.subr.mxu0 0.0
    %2191 = vmatpush1.msra.mxu0 0.0
    %2192 = vmatprep.subr.mxu0 0.0
    %2193 = vmatpush1.msra.mxu0 0.0
    %2194 = vmatprep.subr.mxu0 0.0
    %2195 = vmatpush1.msra.mxu0 0.0
    %2196 = vmatprep.subr.mxu0 0.0
    %2197 = vmatpush1.msra.mxu0 0.0
    %2198 = vmatprep.subr.mxu0 0.0
    %2199 = vmatpush1.msra.mxu0 0.0
    %2200 = vmatprep.subr.mxu0 0.0
    %2201 = vmatpush1.msra.mxu0 0.0
    %2202 = vmatprep.subr.mxu0 0.0
    %2203 = vmatpush1.msra.mxu0 0.0
    %2204 = vmatprep.subr.mxu0 0.0
    %2205 = vmatpush1.msra.mxu0 0.0
    %2206 = vmatprep.subr.mxu0 0.0
    %2207 = vmatpush1.msra.mxu0 0.0
    %2208 = vmatprep.subr.mxu0 0.0
    %2209 = vmatpush1.msra.mxu0 0.0
    %2210 = vmatprep.subr.mxu0 0.0
    %2211 = vmatpush1.msra.mxu0 0.0
    %2212 = vmatprep.subr.mxu0 0.0
    %2213 = vmatpush1.msra.mxu0 0.0
    %2214 = vmatprep.subr.mxu0 0.0
    %2215 = vmatpush1.msra.mxu0 0.0
    %2216 = vmatprep.subr.mxu0 0.0
    %2217 = vmatpush1.msra.mxu0 0.0
    %2218 = vmatprep.subr.mxu0 0.0
    %2219 = vmatpush1.msra.mxu0 0.0
    %2220 = vmatprep.subr.mxu0 0.0
    %2221 = vmatpush1.msra.mxu0 0.0
    %2222 = vmatprep.subr.mxu0 0.0
    %2223 = vmatpush1.msra.mxu0 0.0
    %2224 = vmatprep.subr.mxu0 0.0
    %2225 = vmatpush1.msra.mxu0 0.0
    %2226 = vmatprep.subr.mxu0 0.0
    %2227 = vmatpush1.msra.mxu0 0.0
    %2228 = vmatprep.subr.mxu0 0.0
    %2229 = vmatpush1.msra.mxu0 0.0
    %2230 = vmatprep.subr.mxu0 0.0
    %2231 = vmatpush1.msra.mxu0 0.0
    %2232 = vmatprep.mubr.f32.mxu0 0.0
    %v2233 = vand.u32 %v1823, 4294901760
    %v2234 = vsub.f32 %v1823, %v2233
    %2235 = vmatmul.mubr.f32.gmra.mrb[0].mxu0 %v2234
    %v2236 = vpop.f32.mrb[0].mxu0
    %v2237 = vadd.f32 %v2107, %v2236
    %v2238 = vpop.f32.mrb[0].mxu0
    %2239 = vmatprep.mubr.f32.mxu0 0.0
    %v2240 = vand.u32 %v1826, 4294901760
    %v2241 = vsub.f32 %v1826, %v2240
    %2242 = vmatmul.mubr.f32.gmra.mrb[0].mxu0 %v2241
    %v2243 = vpop.f32.mrb[0].mxu0
    %v2244 = vadd.f32 %v2113, %v2243
    %v2245 = vpop.f32.mrb[0].mxu0
    %2246 = vmatprep.mubr.f32.mxu0 0.0
    %v2247 = vand.u32 %v1829, 4294901760
    %v2248 = vsub.f32 %v1829, %v2247
    %2249 = vmatmul.mubr.f32.gmra.mrb[0].mxu0 %v2248
    %v2250 = vpop.f32.mrb[0].mxu0
    %v2251 = vadd.f32 %v2119, %v2250
    %v2252 = vpop.f32.mrb[0].mxu0
    %2253 = vmatprep.mubr.f32.mxu0 0.0
    %v2254 = vand.u32 %v1832, 4294901760
    %v2255 = vsub.f32 %v1832, %v2254
    %2256 = vmatmul.mubr.f32.gmra.mrb[0].mxu0 %v2255
    %v2257 = vpop.f32.mrb[0].mxu0
    %v2258 = vadd.f32 %v2125, %v2257
    %v2259 = vpop.f32.mrb[0].mxu0
    %2260 = vmatprep.mubr.f32.mxu0 0.0
    %v2261 = vand.u32 %v1835, 4294901760
    %v2262 = vsub.f32 %v1835, %v2261
    %2263 = vmatmul.mubr.f32.gmra.mrb[0].mxu0 %v2262
    %v2264 = vpop.f32.mrb[0].mxu0
    %v2265 = vadd.f32 %v2131, %v2264
    %v2266 = vpop.f32.mrb[0].mxu0
    %2267 = vmatprep.mubr.f32.mxu0 0.0
    %v2268 = vand.u32 %v1838, 4294901760
    %v2269 = vsub.f32 %v1838, %v2268
    %2270 = vmatmul.mubr.f32.gmra.mrb[0].mxu0 %v2269
    %v2271 = vpop.f32.mrb[0].mxu0
    %v2272 = vadd.f32 %v2137, %v2271
    %v2273 = vpop.f32.mrb[0].mxu0
    %2274 = vmatprep.mubr.f32.mxu0 0.0
    %v2275 = vand.u32 %v1841, 4294901760
    %v2276 = vsub.f32 %v1841, %v2275
    %2277 = vmatmul.mubr.f32.gmra.mrb[0].mxu0 %v2276
    %v2278 = vpop.f32.mrb[0].mxu0
    %v2279 = vadd.f32 %v2143, %v2278
    %v2280 = vpop.f32.mrb[0].mxu0
    %2281 = vmatprep.mubr.f32.mxu0 0.0
    %v2282 = vand.u32 %v1844, 4294901760
    %v2283 = vsub.f32 %v1844, %v2282
    %2284 = vmatmul.mubr.f32.gmra.mrb[0].mxu0 %v2283
    %v2285 = vpop.f32.mrb[0].mxu0
    %v2286 = vadd.f32 %v2149, %v2285
    %v2287 = vpop.f32.mrb[0].mxu0
    %2288 = vdwg.mxu0
    %2289 = vmatprep.subr.mxu0 0.0
    %v2290 = vand.u32 %v1782, 4294901760
    %2291 = vmatpush1.msra.mxu0 %v2290
    %2292 = vmatprep.subr.mxu0 0.0
    %v2293 = vand.u32 %v1783, 4294901760
    %2294 = vmatpush1.msra.mxu0 %v2293
    %2295 = vmatprep.subr.mxu0 0.0
    %v2296 = vand.u32 %v1784, 4294901760
    %2297 = vmatpush1.msra.mxu0 %v2296
    %2298 = vmatprep.subr.mxu0 0.0
    %v2299 = vand.u32 %v1785, 4294901760
    %2300 = vmatpush1.msra.mxu0 %v2299
    %2301 = vmatprep.subr.mxu0 0.0
    %v2302 = vand.u32 %v1786, 4294901760
    %2303 = vmatpush1.msra.mxu0 %v2302
    %2304 = vmatprep.subr.mxu0 0.0
    %v2305 = vand.u32 %v1787, 4294901760
    %2306 = vmatpush1.msra.mxu0 %v2305
    %2307 = vmatprep.subr.mxu0 0.0
    %v2308 = vand.u32 %v1788, 4294901760
    %2309 = vmatpush1.msra.mxu0 %v2308
    %2310 = vmatprep.subr.mxu0 0.0
    %v2311 = vand.u32 %v1789, 4294901760
    %2312 = vmatpush1.msra.mxu0 %v2311
    %2313 = vmatprep.subr.mxu0 0.0
    %2314 = vmatpush1.msra.mxu0 0.0
    %2315 = vmatprep.subr.mxu0 0.0
    %2316 = vmatpush1.msra.mxu0 0.0
    %2317 = vmatprep.subr.mxu0 0.0
    %2318 = vmatpush1.msra.mxu0 0.0
    %2319 = vmatprep.subr.mxu0 0.0
    %2320 = vmatpush1.msra.mxu0 0.0
    %2321 = vmatprep.subr.mxu0 0.0
    %2322 = vmatpush1.msra.mxu0 0.0
    %2323 = vmatprep.subr.mxu0 0.0
    %2324 = vmatpush1.msra.mxu0 0.0
    %2325 = vmatprep.subr.mxu0 0.0
    %2326 = vmatpush1.msra.mxu0 0.0
    %2327 = vmatprep.subr.mxu0 0.0
    %2328 = vmatpush1.msra.mxu0 0.0
    %2329 = vmatprep.subr.mxu0 0.0
    %2330 = vmatpush1.msra.mxu0 0.0
    %2331 = vmatprep.subr.mxu0 0.0
    %2332 = vmatpush1.msra.mxu0 0.0
    %2333 = vmatprep.subr.mxu0 0.0
    %2334 = vmatpush1.msra.mxu0 0.0
    %2335 = vmatprep.subr.mxu0 0.0
    %2336 = vmatpush1.msra.mxu0 0.0
    %2337 = vmatprep.subr.mxu0 0.0
    %2338 = vmatpush1.msra.mxu0 0.0
    %2339 = vmatprep.subr.mxu0 0.0
    %2340 = vmatpush1.msra.mxu0 0.0
    %2341 = vmatprep.subr.mxu0 0.0
    %2342 = vmatpush1.msra.mxu0 0.0
    %2343 = vmatprep.subr.mxu0 0.0
    %2344 = vmatpush1.msra.mxu0 0.0
    %2345 = vmatprep.subr.mxu0 0.0
    %2346 = vmatpush1.msra.mxu0 0.0
    %2347 = vmatprep.subr.mxu0 0.0
    %2348 = vmatpush1.msra.mxu0 0.0
    %2349 = vmatprep.subr.mxu0 0.0
    %2350 = vmatpush1.msra.mxu0 0.0
    %2351 = vmatprep.subr.mxu0 0.0
    %2352 = vmatpush1.msra.mxu0 0.0
    %2353 = vmatprep.subr.mxu0 0.0
    %2354 = vmatpush1.msra.mxu0 0.0
    %2355 = vmatprep.subr.mxu0 0.0
    %2356 = vmatpush1.msra.mxu0 0.0
    %2357 = vmatprep.subr.mxu0 0.0
    %2358 = vmatpush1.msra.mxu0 0.0
    %2359 = vmatprep.subr.mxu0 0.0
    %2360 = vmatpush1.msra.mxu0 0.0
    %2361 = vmatprep.mubr.f32.mxu0 0.0
    %v2362 = vand.u32 %v1823, 4294901760
    %v2363 = vsub.f32 %v1823, %v2362
    %v2364 = vand.u32 %v2363, 4294901760
    %2365 = vmatmul.mubr.f32.gmra.mrb[0].mxu0 %v2364
    %v2366 = vpop.f32.mrb[0].mxu0
    %v2367 = vadd.f32 %v2237, %v2366
    %v2368 = vpop.f32.mrb[0].mxu0
    %2369 = vmatprep.mubr.f32.mxu0 0.0
    %v2370 = vand.u32 %v1826, 4294901760
    %v2371 = vsub.f32 %v1826, %v2370
    %v2372 = vand.u32 %v2371, 4294901760
    %2373 = vmatmul.mubr.f32.gmra.mrb[0].mxu0 %v2372
    %v2374 = vpop.f32.mrb[0].mxu0
    %v2375 = vadd.f32 %v2244, %v2374
    %v2376 = vpop.f32.mrb[0].mxu0
    %2377 = vmatprep.mubr.f32.mxu0 0.0
    %v2378 = vand.u32 %v1829, 4294901760
    %v2379 = vsub.f32 %v1829, %v2378
    %v2380 = vand.u32 %v2379, 4294901760
    %2381 = vmatmul.mubr.f32.gmra.mrb[0].mxu0 %v2380
    %v2382 = vpop.f32.mrb[0].mxu0
    %v2383 = vadd.f32 %v2251, %v2382
    %v2384 = vpop.f32.mrb[0].mxu0
    %2385 = vmatprep.mubr.f32.mxu0 0.0
    %v2386 = vand.u32 %v1832, 4294901760
    %v2387 = vsub.f32 %v1832, %v2386
    %v2388 = vand.u32 %v2387, 4294901760
    %2389 = vmatmul.mubr.f32.gmra.mrb[0].mxu0 %v2388
    %v2390 = vpop.f32.mrb[0].mxu0
    %v2391 = vadd.f32 %v2258, %v2390
    %v2392 = vpop.f32.mrb[0].mxu0
    %2393 = vmatprep.mubr.f32.mxu0 0.0
    %v2394 = vand.u32 %v1835, 4294901760
    %v2395 = vsub.f32 %v1835, %v2394
    %v2396 = vand.u32 %v2395, 4294901760
    %2397 = vmatmul.mubr.f32.gmra.mrb[0].mxu0 %v2396
    %v2398 = vpop.f32.mrb[0].mxu0
    %v2399 = vadd.f32 %v2265, %v2398
    %v2400 = vpop.f32.mrb[0].mxu0
    %2401 = vmatprep.mubr.f32.mxu0 0.0
    %v2402 = vand.u32 %v1838, 4294901760
    %v2403 = vsub.f32 %v1838, %v2402
    %v2404 = vand.u32 %v2403, 4294901760
    %2405 = vmatmul.mubr.f32.gmra.mrb[0].mxu0 %v2404
    %v2406 = vpop.f32.mrb[0].mxu0
    %v2407 = vadd.f32 %v2272, %v2406
    %v2408 = vpop.f32.mrb[0].mxu0
    %2409 = vmatprep.mubr.f32.mxu0 0.0
    %v2410 = vand.u32 %v1841, 4294901760
    %v2411 = vsub.f32 %v1841, %v2410
    %v2412 = vand.u32 %v2411, 4294901760
    %2413 = vmatmul.mubr.f32.gmra.mrb[0].mxu0 %v2412
    %v2414 = vpop.f32.mrb[0].mxu0
    %v2415 = vadd.f32 %v2279, %v2414
    %v2416 = vpop.f32.mrb[0].mxu0
    %2417 = vmatprep.mubr.f32.mxu0 0.0
    %v2418 = vand.u32 %v1844, 4294901760
    %v2419 = vsub.f32 %v1844, %v2418
    %v2420 = vand.u32 %v2419, 4294901760
    %2421 = vmatmul.mubr.f32.gmra.mrb[0].mxu0 %v2420
    %v2422 = vpop.f32.mrb[0].mxu0
    %v2423 = vadd.f32 %v2286, %v2422
    %v2424 = vpop.f32.mrb[0].mxu0
    %2425 = vdwg.mxu0
    %2426 = vmatprep.subr.mxu0 0.0
    %v2427 = vand.u32 %v1782, 4294901760
    %v2428 = vsub.f32 %v1782, %v2427
    %v2429 = vand.u32 %v2428, 4294901760
    %2430 = vmatpush1.msra.mxu0 %v2429
    %2431 = vmatprep.subr.mxu0 0.0
    %v2432 = vand.u32 %v1783, 4294901760
    %v2433 = vsub.f32 %v1783, %v2432
    %v2434 = vand.u32 %v2433, 4294901760
    %2435 = vmatpush1.msra.mxu0 %v2434
    %2436 = vmatprep.subr.mxu0 0.0
    %v2437 = vand.u32 %v1784, 4294901760
    %v2438 = vsub.f32 %v1784, %v2437
    %v2439 = vand.u32 %v2438, 4294901760
    %2440 = vmatpush1.msra.mxu0 %v2439
    %2441 = vmatprep.subr.mxu0 0.0
    %v2442 = vand.u32 %v1785, 4294901760
    %v2443 = vsub.f32 %v1785, %v2442
    %v2444 = vand.u32 %v2443, 4294901760
    %2445 = vmatpush1.msra.mxu0 %v2444
    %2446 = vmatprep.subr.mxu0 0.0
    %v2447 = vand.u32 %v1786, 4294901760
    %v2448 = vsub.f32 %v1786, %v2447
    %v2449 = vand.u32 %v2448, 4294901760
    %2450 = vmatpush1.msra.mxu0 %v2449
    %2451 = vmatprep.subr.mxu0 0.0
    %v2452 = vand.u32 %v1787, 4294901760
    %v2453 = vsub.f32 %v1787, %v2452
    %v2454 = vand.u32 %v2453, 4294901760
    %2455 = vmatpush1.msra.mxu0 %v2454
    %2456 = vmatprep.subr.mxu0 0.0
    %v2457 = vand.u32 %v1788, 4294901760
    %v2458 = vsub.f32 %v1788, %v2457
    %v2459 = vand.u32 %v2458, 4294901760
    %2460 = vmatpush1.msra.mxu0 %v2459
    %2461 = vmatprep.subr.mxu0 0.0
    %v2462 = vand.u32 %v1789, 4294901760
    %v2463 = vsub.f32 %v1789, %v2462
    %v2464 = vand.u32 %v2463, 4294901760
    %2465 = vmatpush1.msra.mxu0 %v2464
    %2466 = vmatprep.subr.mxu0 0.0
    %2467 = vmatpush1.msra.mxu0 0.0
    %2468 = vmatprep.subr.mxu0 0.0
    %2469 = vmatpush1.msra.mxu0 0.0
    %2470 = vmatprep.subr.mxu0 0.0
    %2471 = vmatpush1.msra.mxu0 0.0
    %2472 = vmatprep.subr.mxu0 0.0
    %2473 = vmatpush1.msra.mxu0 0.0
    %2474 = vmatprep.subr.mxu0 0.0
    %2475 = vmatpush1.msra.mxu0 0.0
    %2476 = vmatprep.subr.mxu0 0.0
    %2477 = vmatpush1.msra.mxu0 0.0
    %2478 = vmatprep.subr.mxu0 0.0
    %2479 = vmatpush1.msra.mxu0 0.0
    %2480 = vmatprep.subr.mxu0 0.0
    %2481 = vmatpush1.msra.mxu0 0.0
    %2482 = vmatprep.subr.mxu0 0.0
    %2483 = vmatpush1.msra.mxu0 0.0
    %2484 = vmatprep.subr.mxu0 0.0
    %2485 = vmatpush1.msra.mxu0 0.0
    %2486 = vmatprep.subr.mxu0 0.0
    %2487 = vmatpush1.msra.mxu0 0.0
    %2488 = vmatprep.subr.mxu0 0.0
    %2489 = vmatpush1.msra.mxu0 0.0
    %2490 = vmatprep.subr.mxu0 0.0
    %2491 = vmatpush1.msra.mxu0 0.0
    %2492 = vmatprep.subr.mxu0 0.0
    %2493 = vmatpush1.msra.mxu0 0.0
    %2494 = vmatprep.subr.mxu0 0.0
    %2495 = vmatpush1.msra.mxu0 0.0
    %2496 = vmatprep.subr.mxu0 0.0
    %2497 = vmatpush1.msra.mxu0 0.0
    %2498 = vmatprep.subr.mxu0 0.0
    %2499 = vmatpush1.msra.mxu0 0.0
    %2500 = vmatprep.subr.mxu0 0.0
    %2501 = vmatpush1.msra.mxu0 0.0
    %2502 = vmatprep.subr.mxu0 0.0
    %2503 = vmatpush1.msra.mxu0 0.0
    %2504 = vmatprep.subr.mxu0 0.0
    %2505 = vmatpush1.msra.mxu0 0.0
    %2506 = vmatprep.subr.mxu0 0.0
    %2507 = vmatpush1.msra.mxu0 0.0
    %2508 = vmatprep.subr.mxu0 0.0
    %2509 = vmatpush1.msra.mxu0 0.0
    %2510 = vmatprep.subr.mxu0 0.0
    %2511 = vmatpush1.msra.mxu0 0.0
    %2512 = vmatprep.subr.mxu0 0.0
    %2513 = vmatpush1.msra.mxu0 0.0
    %2514 = vmatprep.mubr.f32.mxu0 0.0
    %v2515 = vand.u32 %v1823, 4294901760
    %2516 = vmatmul.mubr.f32.gmra.mrb[0].mxu0 %v2515
    %v2517 = vpop.f32.mrb[0].mxu0
    %v2518 = vadd.f32 %v2367, %v2517
    %v2519 = vpop.f32.mrb[0].mxu0
    %2520 = vmatprep.mubr.f32.mxu0 0.0
    %v2521 = vand.u32 %v1826, 4294901760
    %2522 = vmatmul.mubr.f32.gmra.mrb[0].mxu0 %v2521
    %v2523 = vpop.f32.mrb[0].mxu0
    %v2524 = vadd.f32 %v2375, %v2523
    %v2525 = vpop.f32.mrb[0].mxu0
    %2526 = vmatprep.mubr.f32.mxu0 0.0
    %v2527 = vand.u32 %v1829, 4294901760
    %2528 = vmatmul.mubr.f32.gmra.mrb[0].mxu0 %v2527
    %v2529 = vpop.f32.mrb[0].mxu0
    %v2530 = vadd.f32 %v2383, %v2529
    %v2531 = vpop.f32.mrb[0].mxu0
    %2532 = vmatprep.mubr.f32.mxu0 0.0
    %v2533 = vand.u32 %v1832, 4294901760
    %2534 = vmatmul.mubr.f32.gmra.mrb[0].mxu0 %v2533
    %v2535 = vpop.f32.mrb[0].mxu0
    %v2536 = vadd.f32 %v2391, %v2535
    %v2537 = vpop.f32.mrb[0].mxu0
    %2538 = vmatprep.mubr.f32.mxu0 0.0
    %v2539 = vand.u32 %v1835, 4294901760
    %2540 = vmatmul.mubr.f32.gmra.mrb[0].mxu0 %v2539
    %v2541 = vpop.f32.mrb[0].mxu0
    %v2542 = vadd.f32 %v2399, %v2541
    %v2543 = vpop.f32.mrb[0].mxu0
    %2544 = vmatprep.mubr.f32.mxu0 0.0
    %v2545 = vand.u32 %v1838, 4294901760
    %2546 = vmatmul.mubr.f32.gmra.mrb[0].mxu0 %v2545
    %v2547 = vpop.f32.mrb[0].mxu0
    %v2548 = vadd.f32 %v2407, %v2547
    %v2549 = vpop.f32.mrb[0].mxu0
    %2550 = vmatprep.mubr.f32.mxu0 0.0
    %v2551 = vand.u32 %v1841, 4294901760
    %2552 = vmatmul.mubr.f32.gmra.mrb[0].mxu0 %v2551
    %v2553 = vpop.f32.mrb[0].mxu0
    %v2554 = vadd.f32 %v2415, %v2553
    %v2555 = vpop.f32.mrb[0].mxu0
    %2556 = vmatprep.mubr.f32.mxu0 0.0
    %v2557 = vand.u32 %v1844, 4294901760
    %2558 = vmatmul.mubr.f32.gmra.mrb[0].mxu0 %v2557
    %v2559 = vpop.f32.mrb[0].mxu0
    %v2560 = vadd.f32 %v2423, %v2559
    %v2561 = vpop.f32.mrb[0].mxu0
    %2562 = vdwg.mxu0
    %2563 = vmatprep.subr.mxu0 0.0
    %v2564 = vand.u32 %v1782, 4294901760
    %2565 = vmatpush1.msra.mxu0 %v2564
    %2566 = vmatprep.subr.mxu0 0.0
    %v2567 = vand.u32 %v1783, 4294901760
    %2568 = vmatpush1.msra.mxu0 %v2567
    %2569 = vmatprep.subr.mxu0 0.0
    %v2570 = vand.u32 %v1784, 4294901760
    %2571 = vmatpush1.msra.mxu0 %v2570
    %2572 = vmatprep.subr.mxu0 0.0
    %v2573 = vand.u32 %v1785, 4294901760
    %2574 = vmatpush1.msra.mxu0 %v2573
    %2575 = vmatprep.subr.mxu0 0.0
    %v2576 = vand.u32 %v1786, 4294901760
    %2577 = vmatpush1.msra.mxu0 %v2576
    %2578 = vmatprep.subr.mxu0 0.0
    %v2579 = vand.u32 %v1787, 4294901760
    %2580 = vmatpush1.msra.mxu0 %v2579
    %2581 = vmatprep.subr.mxu0 0.0
    %v2582 = vand.u32 %v1788, 4294901760
    %2583 = vmatpush1.msra.mxu0 %v2582
    %2584 = vmatprep.subr.mxu0 0.0
    %v2585 = vand.u32 %v1789, 4294901760
    %2586 = vmatpush1.msra.mxu0 %v2585
    %2587 = vmatprep.subr.mxu0 0.0
    %2588 = vmatpush1.msra.mxu0 0.0
    %2589 = vmatprep.subr.mxu0 0.0
    %2590 = vmatpush1.msra.mxu0 0.0
    %2591 = vmatprep.subr.mxu0 0.0
    %2592 = vmatpush1.msra.mxu0 0.0
    %2593 = vmatprep.subr.mxu0 0.0
    %2594 = vmatpush1.msra.mxu0 0.0
    %2595 = vmatprep.subr.mxu0 0.0
    %2596 = vmatpush1.msra.mxu0 0.0
    %2597 = vmatprep.subr.mxu0 0.0
    %2598 = vmatpush1.msra.mxu0 0.0
    %2599 = vmatprep.subr.mxu0 0.0
    %2600 = vmatpush1.msra.mxu0 0.0
    %2601 = vmatprep.subr.mxu0 0.0
    %2602 = vmatpush1.msra.mxu0 0.0
    %2603 = vmatprep.subr.mxu0 0.0
    %2604 = vmatpush1.msra.mxu0 0.0
    %2605 = vmatprep.subr.mxu0 0.0
    %2606 = vmatpush1.msra.mxu0 0.0
    %2607 = vmatprep.subr.mxu0 0.0
    %2608 = vmatpush1.msra.mxu0 0.0
    %2609 = vmatprep.subr.mxu0 0.0
    %2610 = vmatpush1.msra.mxu0 0.0
    %2611 = vmatprep.subr.mxu0 0.0
    %2612 = vmatpush1.msra.mxu0 0.0
    %2613 = vmatprep.subr.mxu0 0.0
    %2614 = vmatpush1.msra.mxu0 0.0
    %2615 = vmatprep.subr.mxu0 0.0
    %2616 = vmatpush1.msra.mxu0 0.0
    %2617 = vmatprep.subr.mxu0 0.0
    %2618 = vmatpush1.msra.mxu0 0.0
    %2619 = vmatprep.subr.mxu0 0.0
    %2620 = vmatpush1.msra.mxu0 0.0
    %2621 = vmatprep.subr.mxu0 0.0
    %2622 = vmatpush1.msra.mxu0 0.0
    %2623 = vmatprep.subr.mxu0 0.0
    %2624 = vmatpush1.msra.mxu0 0.0
    %2625 = vmatprep.subr.mxu0 0.0
    %2626 = vmatpush1.msra.mxu0 0.0
    %2627 = vmatprep.subr.mxu0 0.0
    %2628 = vmatpush1.msra.mxu0 0.0
    %2629 = vmatprep.subr.mxu0 0.0
    %2630 = vmatpush1.msra.mxu0 0.0
    %2631 = vmatprep.subr.mxu0 0.0
    %2632 = vmatpush1.msra.mxu0 0.0
    %2633 = vmatprep.subr.mxu0 0.0
    %2634 = vmatpush1.msra.mxu0 0.0
    %2635 = vmatprep.mubr.f32.mxu0 0.0
    %v2636 = vand.u32 %v1823, 4294901760
    %2637 = vmatmul.mubr.f32.gmra.mrb[0].mxu0 %v2636
    %v2638 = vpop.f32.mrb[0].mxu0
    %v2639 = vadd.f32 %v2518, %v2638
    %v2640 = vpop.f32.mrb[0].mxu0
    %2641 = vmatprep.mubr.f32.mxu0 0.0
    %v2642 = vand.u32 %v1826, 4294901760
    %2643 = vmatmul.mubr.f32.gmra.mrb[0].mxu0 %v2642
    %v2644 = vpop.f32.mrb[0].mxu0
    %v2645 = vadd.f32 %v2524, %v2644
    %v2646 = vpop.f32.mrb[0].mxu0
    %2647 = vmatprep.mubr.f32.mxu0 0.0
    %v2648 = vand.u32 %v1829, 4294901760
    %2649 = vmatmul.mubr.f32.gmra.mrb[0].mxu0 %v2648
    %v2650 = vpop.f32.mrb[0].mxu0
    %v2651 = vadd.f32 %v2530, %v2650
    %v2652 = vpop.f32.mrb[0].mxu0
    %2653 = vmatprep.mubr.f32.mxu0 0.0
    %v2654 = vand.u32 %v1832, 4294901760
    %2655 = vmatmul.mubr.f32.gmra.mrb[0].mxu0 %v2654
    %v2656 = vpop.f32.mrb[0].mxu0
    %v2657 = vadd.f32 %v2536, %v2656
    %v2658 = vpop.f32.mrb[0].mxu0
    %2659 = vmatprep.mubr.f32.mxu0 0.0
    %v2660 = vand.u32 %v1835, 4294901760
    %2661 = vmatmul.mubr.f32.gmra.mrb[0].mxu0 %v2660
    %v2662 = vpop.f32.mrb[0].mxu0
    %v2663 = vadd.f32 %v2542, %v2662
    %v2664 = vpop.f32.mrb[0].mxu0
    %2665 = vmatprep.mubr.f32.mxu0 0.0
    %v2666 = vand.u32 %v1838, 4294901760
    %2667 = vmatmul.mubr.f32.gmra.mrb[0].mxu0 %v2666
    %v2668 = vpop.f32.mrb[0].mxu0
    %v2669 = vadd.f32 %v2548, %v2668
    %v2670 = vpop.f32.mrb[0].mxu0
    %2671 = vmatprep.mubr.f32.mxu0 0.0
    %v2672 = vand.u32 %v1841, 4294901760
    %2673 = vmatmul.mubr.f32.gmra.mrb[0].mxu0 %v2672
    %v2674 = vpop.f32.mrb[0].mxu0
    %v2675 = vadd.f32 %v2554, %v2674
    %v2676 = vpop.f32.mrb[0].mxu0
    %2677 = vmatprep.mubr.f32.mxu0 0.0
    %v2678 = vand.u32 %v1844, 4294901760
    %2679 = vmatmul.mubr.f32.gmra.mrb[0].mxu0 %v2678
    %v2680 = vpop.f32.mrb[0].mxu0
    %v2681 = vadd.f32 %v2560, %v2680
    %v2682 = vpop.f32.mrb[0].mxu0
    %2683 = vdwg.mxu0
    %v2684 = vmax.f32 %v2639, 0.0
    %v2685 = vmax.f32 %v2645, 0.0
    %v2686 = vmax.f32 %v2651, 0.0
    %v2687 = vmax.f32 %v2657, 0.0
    %v2688 = vmax.f32 %v2663, 0.0
    %v2689 = vmax.f32 %v2669, 0.0
    %v2690 = vmax.f32 %v2675, 0.0
    %v2691 = vmax.f32 %v2681, 0.0
    %2692 = vset.pattern.permute.xlu0 3
    %2693 = vperm.xlu0 %2692, %v46
    %v2694 = vpop.permute.xlu0 %2693
    %v2697 = vsel %vm919, %v45, 0
    %2699 = vmatprep.subr.mxu0 0.0
    %v2700 = vand.u32 %v2684, 4294901760
    %2701 = vmatpush1.msra.mxu0 %v2700
    %2702 = vmatprep.subr.mxu0 0.0
    %v2703 = vand.u32 %v2685, 4294901760
    %2704 = vmatpush1.msra.mxu0 %v2703
    %2705 = vmatprep.subr.mxu0 0.0
    %v2706 = vand.u32 %v2686, 4294901760
    %2707 = vmatpush1.msra.mxu0 %v2706
    %2708 = vmatprep.subr.mxu0 0.0
    %v2709 = vand.u32 %v2687, 4294901760
    %2710 = vmatpush1.msra.mxu0 %v2709
    %2711 = vmatprep.subr.mxu0 0.0
    %v2712 = vand.u32 %v2688, 4294901760
    %2713 = vmatpush1.msra.mxu0 %v2712
    %2714 = vmatprep.subr.mxu0 0.0
    %v2715 = vand.u32 %v2689, 4294901760
    %2716 = vmatpush1.msra.mxu0 %v2715
    %2717 = vmatprep.subr.mxu0 0.0
    %v2718 = vand.u32 %v2690, 4294901760
    %2719 = vmatpush1.msra.mxu0 %v2718
    %2720 = vmatprep.subr.mxu0 0.0
    %v2721 = vand.u32 %v2691, 4294901760
    %2722 = vmatpush1.msra.mxu0 %v2721
    %2723 = vmatprep.subr.mxu0 0.0
    %2724 = vmatpush1.msra.mxu0 0.0
    %2725 = vmatprep.subr.mxu0 0.0
    %2726 = vmatpush1.msra.mxu0 0.0
    %2727 = vmatprep.subr.mxu0 0.0
    %2728 = vmatpush1.msra.mxu0 0.0
    %2729 = vmatprep.subr.mxu0 0.0
    %2730 = vmatpush1.msra.mxu0 0.0
    %2731 = vmatprep.subr.mxu0 0.0
    %2732 = vmatpush1.msra.mxu0 0.0
    %2733 = vmatprep.subr.mxu0 0.0
    %2734 = vmatpush1.msra.mxu0 0.0
    %2735 = vmatprep.subr.mxu0 0.0
    %2736 = vmatpush1.msra.mxu0 0.0
    %2737 = vmatprep.subr.mxu0 0.0
    %2738 = vmatpush1.msra.mxu0 0.0
    %2739 = vmatprep.subr.mxu0 0.0
    %2740 = vmatpush1.msra.mxu0 0.0
    %2741 = vmatprep.subr.mxu0 0.0
    %2742 = vmatpush1.msra.mxu0 0.0
    %2743 = vmatprep.subr.mxu0 0.0
    %2744 = vmatpush1.msra.mxu0 0.0
    %2745 = vmatprep.subr.mxu0 0.0
    %2746 = vmatpush1.msra.mxu0 0.0
    %2747 = vmatprep.subr.mxu0 0.0
    %2748 = vmatpush1.msra.mxu0 0.0
    %2749 = vmatprep.subr.mxu0 0.0
    %2750 = vmatpush1.msra.mxu0 0.0
    %2751 = vmatprep.subr.mxu0 0.0
    %2752 = vmatpush1.msra.mxu0 0.0
    %2753 = vmatprep.subr.mxu0 0.0
    %2754 = vmatpush1.msra.mxu0 0.0
    %2755 = vmatprep.subr.mxu0 0.0
    %2756 = vmatpush1.msra.mxu0 0.0
    %2757 = vmatprep.subr.mxu0 0.0
    %2758 = vmatpush1.msra.mxu0 0.0
    %2759 = vmatprep.subr.mxu0 0.0
    %2760 = vmatpush1.msra.mxu0 0.0
    %2761 = vmatprep.subr.mxu0 0.0
    %2762 = vmatpush1.msra.mxu0 0.0
    %2763 = vmatprep.subr.mxu0 0.0
    %2764 = vmatpush1.msra.mxu0 0.0
    %2765 = vmatprep.subr.mxu0 0.0
    %2766 = vmatpush1.msra.mxu0 0.0
    %2767 = vmatprep.subr.mxu0 0.0
    %2768 = vmatpush1.msra.mxu0 0.0
    %2769 = vmatprep.subr.mxu0 0.0
    %2770 = vmatpush1.msra.mxu0 0.0
    %2771 = vmatprep.mubr.f32.mxu0 0.0
    %v2772 = vand.u32 %v2697, 4294901760
    %v2773 = vsub.f32 %v2697, %v2772
    %v2774 = vand.u32 %v2773, 4294901760
    %v2775 = vsub.f32 %v2773, %v2774
    %v2776 = vand.u32 %v2775, 4294901760
    %2777 = vmatmul.mubr.f32.gmra.mrb[0].mxu0 %v2776
    %v2778 = vpop.f32.mrb[0].mxu0
    %v2779 = vadd.f32 %v2694, %v2778
    %v2780 = vpop.f32.mrb[0].mxu0
    %2781 = vdwg.mxu0
    %2782 = vmatprep.subr.mxu0 0.0
    %v2783 = vand.u32 %v2684, 4294901760
    %v2784 = vsub.f32 %v2684, %v2783
    %v2785 = vand.u32 %v2784, 4294901760
    %v2786 = vsub.f32 %v2784, %v2785
    %v2787 = vand.u32 %v2786, 4294901760
    %2788 = vmatpush1.msra.mxu0 %v2787
    %2789 = vmatprep.subr.mxu0 0.0
    %v2790 = vand.u32 %v2685, 4294901760
    %v2791 = vsub.f32 %v2685, %v2790
    %v2792 = vand.u32 %v2791, 4294901760
    %v2793 = vsub.f32 %v2791, %v2792
    %v2794 = vand.u32 %v2793, 4294901760
    %2795 = vmatpush1.msra.mxu0 %v2794
    %2796 = vmatprep.subr.mxu0 0.0
    %v2797 = vand.u32 %v2686, 4294901760
    %v2798 = vsub.f32 %v2686, %v2797
    %v2799 = vand.u32 %v2798, 4294901760
    %v2800 = vsub.f32 %v2798, %v2799
    %v2801 = vand.u32 %v2800, 4294901760
    %2802 = vmatpush1.msra.mxu0 %v2801
    %2803 = vmatprep.subr.mxu0 0.0
    %v2804 = vand.u32 %v2687, 4294901760
    %v2805 = vsub.f32 %v2687, %v2804
    %v2806 = vand.u32 %v2805, 4294901760
    %v2807 = vsub.f32 %v2805, %v2806
    %v2808 = vand.u32 %v2807, 4294901760
    %2809 = vmatpush1.msra.mxu0 %v2808
    %2810 = vmatprep.subr.mxu0 0.0
    %v2811 = vand.u32 %v2688, 4294901760
    %v2812 = vsub.f32 %v2688, %v2811
    %v2813 = vand.u32 %v2812, 4294901760
    %v2814 = vsub.f32 %v2812, %v2813
    %v2815 = vand.u32 %v2814, 4294901760
    %2816 = vmatpush1.msra.mxu0 %v2815
    %2817 = vmatprep.subr.mxu0 0.0
    %v2818 = vand.u32 %v2689, 4294901760
    %v2819 = vsub.f32 %v2689, %v2818
    %v2820 = vand.u32 %v2819, 4294901760
    %v2821 = vsub.f32 %v2819, %v2820
    %v2822 = vand.u32 %v2821, 4294901760
    %2823 = vmatpush1.msra.mxu0 %v2822
    %2824 = vmatprep.subr.mxu0 0.0
    %v2825 = vand.u32 %v2690, 4294901760
    %v2826 = vsub.f32 %v2690, %v2825
    %v2827 = vand.u32 %v2826, 4294901760
    %v2828 = vsub.f32 %v2826, %v2827
    %v2829 = vand.u32 %v2828, 4294901760
    %2830 = vmatpush1.msra.mxu0 %v2829
    %2831 = vmatprep.subr.mxu0 0.0
    %v2832 = vand.u32 %v2691, 4294901760
    %v2833 = vsub.f32 %v2691, %v2832
    %v2834 = vand.u32 %v2833, 4294901760
    %v2835 = vsub.f32 %v2833, %v2834
    %v2836 = vand.u32 %v2835, 4294901760
    %2837 = vmatpush1.msra.mxu0 %v2836
    %2838 = vmatprep.subr.mxu0 0.0
    %2839 = vmatpush1.msra.mxu0 0.0
    %2840 = vmatprep.subr.mxu0 0.0
    %2841 = vmatpush1.msra.mxu0 0.0
    %2842 = vmatprep.subr.mxu0 0.0
    %2843 = vmatpush1.msra.mxu0 0.0
    %2844 = vmatprep.subr.mxu0 0.0
    %2845 = vmatpush1.msra.mxu0 0.0
    %2846 = vmatprep.subr.mxu0 0.0
    %2847 = vmatpush1.msra.mxu0 0.0
    %2848 = vmatprep.subr.mxu0 0.0
    %2849 = vmatpush1.msra.mxu0 0.0
    %2850 = vmatprep.subr.mxu0 0.0
    %2851 = vmatpush1.msra.mxu0 0.0
    %2852 = vmatprep.subr.mxu0 0.0
    %2853 = vmatpush1.msra.mxu0 0.0
    %2854 = vmatprep.subr.mxu0 0.0
    %2855 = vmatpush1.msra.mxu0 0.0
    %2856 = vmatprep.subr.mxu0 0.0
    %2857 = vmatpush1.msra.mxu0 0.0
    %2858 = vmatprep.subr.mxu0 0.0
    %2859 = vmatpush1.msra.mxu0 0.0
    %2860 = vmatprep.subr.mxu0 0.0
    %2861 = vmatpush1.msra.mxu0 0.0
    %2862 = vmatprep.subr.mxu0 0.0
    %2863 = vmatpush1.msra.mxu0 0.0
    %2864 = vmatprep.subr.mxu0 0.0
    %2865 = vmatpush1.msra.mxu0 0.0
    %2866 = vmatprep.subr.mxu0 0.0
    %2867 = vmatpush1.msra.mxu0 0.0
    %2868 = vmatprep.subr.mxu0 0.0
    %2869 = vmatpush1.msra.mxu0 0.0
    %2870 = vmatprep.subr.mxu0 0.0
    %2871 = vmatpush1.msra.mxu0 0.0
    %2872 = vmatprep.subr.mxu0 0.0
    %2873 = vmatpush1.msra.mxu0 0.0
    %2874 = vmatprep.subr.mxu0 0.0
    %2875 = vmatpush1.msra.mxu0 0.0
    %2876 = vmatprep.subr.mxu0 0.0
    %2877 = vmatpush1.msra.mxu0 0.0
    %2878 = vmatprep.subr.mxu0 0.0
    %2879 = vmatpush1.msra.mxu0 0.0
    %2880 = vmatprep.subr.mxu0 0.0
    %2881 = vmatpush1.msra.mxu0 0.0
    %2882 = vmatprep.subr.mxu0 0.0
    %2883 = vmatpush1.msra.mxu0 0.0
    %2884 = vmatprep.subr.mxu0 0.0
    %2885 = vmatpush1.msra.mxu0 0.0
    %2886 = vmatprep.mubr.f32.mxu0 0.0
    %v2887 = vand.u32 %v2697, 4294901760
    %2888 = vmatmul.mubr.f32.gmra.mrb[0].mxu0 %v2887
    %v2889 = vpop.f32.mrb[0].mxu0
    %v2890 = vadd.f32 %v2779, %v2889
    %v2891 = vpop.f32.mrb[0].mxu0
    %2892 = vdwg.mxu0
    %2893 = vmatprep.subr.mxu0 0.0
    %v2894 = vand.u32 %v2684, 4294901760
    %v2895 = vsub.f32 %v2684, %v2894
    %2896 = vmatpush1.msra.mxu0 %v2895
    %2897 = vmatprep.subr.mxu0 0.0
    %v2898 = vand.u32 %v2685, 4294901760
    %v2899 = vsub.f32 %v2685, %v2898
    %2900 = vmatpush1.msra.mxu0 %v2899
    %2901 = vmatprep.subr.mxu0 0.0
    %v2902 = vand.u32 %v2686, 4294901760
    %v2903 = vsub.f32 %v2686, %v2902
    %2904 = vmatpush1.msra.mxu0 %v2903
    %2905 = vmatprep.subr.mxu0 0.0
    %v2906 = vand.u32 %v2687, 4294901760
    %v2907 = vsub.f32 %v2687, %v2906
    %2908 = vmatpush1.msra.mxu0 %v2907
    %2909 = vmatprep.subr.mxu0 0.0
    %v2910 = vand.u32 %v2688, 4294901760
    %v2911 = vsub.f32 %v2688, %v2910
    %2912 = vmatpush1.msra.mxu0 %v2911
    %2913 = vmatprep.subr.mxu0 0.0
    %v2914 = vand.u32 %v2689, 4294901760
    %v2915 = vsub.f32 %v2689, %v2914
    %2916 = vmatpush1.msra.mxu0 %v2915
    %2917 = vmatprep.subr.mxu0 0.0
    %v2918 = vand.u32 %v2690, 4294901760
    %v2919 = vsub.f32 %v2690, %v2918
    %2920 = vmatpush1.msra.mxu0 %v2919
    %2921 = vmatprep.subr.mxu0 0.0
    %v2922 = vand.u32 %v2691, 4294901760
    %v2923 = vsub.f32 %v2691, %v2922
    %2924 = vmatpush1.msra.mxu0 %v2923
    %2925 = vmatprep.subr.mxu0 0.0
    %2926 = vmatpush1.msra.mxu0 0.0
    %2927 = vmatprep.subr.mxu0 0.0
    %2928 = vmatpush1.msra.mxu0 0.0
    %2929 = vmatprep.subr.mxu0 0.0
    %2930 = vmatpush1.msra.mxu0 0.0
    %2931 = vmatprep.subr.mxu0 0.0
    %2932 = vmatpush1.msra.mxu0 0.0
    %2933 = vmatprep.subr.mxu0 0.0
    %2934 = vmatpush1.msra.mxu0 0.0
    %2935 = vmatprep.subr.mxu0 0.0
    %2936 = vmatpush1.msra.mxu0 0.0
    %2937 = vmatprep.subr.mxu0 0.0
    %2938 = vmatpush1.msra.mxu0 0.0
    %2939 = vmatprep.subr.mxu0 0.0
    %2940 = vmatpush1.msra.mxu0 0.0
    %2941 = vmatprep.subr.mxu0 0.0
    %2942 = vmatpush1.msra.mxu0 0.0
    %2943 = vmatprep.subr.mxu0 0.0
    %2944 = vmatpush1.msra.mxu0 0.0
    %2945 = vmatprep.subr.mxu0 0.0
    %2946 = vmatpush1.msra.mxu0 0.0
    %2947 = vmatprep.subr.mxu0 0.0
    %2948 = vmatpush1.msra.mxu0 0.0
    %2949 = vmatprep.subr.mxu0 0.0
    %2950 = vmatpush1.msra.mxu0 0.0
    %2951 = vmatprep.subr.mxu0 0.0
    %2952 = vmatpush1.msra.mxu0 0.0
    %2953 = vmatprep.subr.mxu0 0.0
    %2954 = vmatpush1.msra.mxu0 0.0
    %2955 = vmatprep.subr.mxu0 0.0
    %2956 = vmatpush1.msra.mxu0 0.0
    %2957 = vmatprep.subr.mxu0 0.0
    %2958 = vmatpush1.msra.mxu0 0.0
    %2959 = vmatprep.subr.mxu0 0.0
    %2960 = vmatpush1.msra.mxu0 0.0
    %2961 = vmatprep.subr.mxu0 0.0
    %2962 = vmatpush1.msra.mxu0 0.0
    %2963 = vmatprep.subr.mxu0 0.0
    %2964 = vmatpush1.msra.mxu0 0.0
    %2965 = vmatprep.subr.mxu0 0.0
    %2966 = vmatpush1.msra.mxu0 0.0
    %2967 = vmatprep.subr.mxu0 0.0
    %2968 = vmatpush1.msra.mxu0 0.0
    %2969 = vmatprep.subr.mxu0 0.0
    %2970 = vmatpush1.msra.mxu0 0.0
    %2971 = vmatprep.subr.mxu0 0.0
    %2972 = vmatpush1.msra.mxu0 0.0
    %2973 = vmatprep.mubr.f32.mxu0 0.0
    %v2974 = vand.u32 %v2697, 4294901760
    %v2975 = vsub.f32 %v2697, %v2974
    %2976 = vmatmul.mubr.f32.gmra.mrb[0].mxu0 %v2975
    %v2977 = vpop.f32.mrb[0].mxu0
    %v2978 = vadd.f32 %v2890, %v2977
    %v2979 = vpop.f32.mrb[0].mxu0
    %2980 = vdwg.mxu0
    %2981 = vmatprep.subr.mxu0 0.0
    %v2982 = vand.u32 %v2684, 4294901760
    %2983 = vmatpush1.msra.mxu0 %v2982
    %2984 = vmatprep.subr.mxu0 0.0
    %v2985 = vand.u32 %v2685, 4294901760
    %2986 = vmatpush1.msra.mxu0 %v2985
    %2987 = vmatprep.subr.mxu0 0.0
    %v2988 = vand.u32 %v2686, 4294901760
    %2989 = vmatpush1.msra.mxu0 %v2988
    %2990 = vmatprep.subr.mxu0 0.0
    %v2991 = vand.u32 %v2687, 4294901760
    %2992 = vmatpush1.msra.mxu0 %v2991
    %2993 = vmatprep.subr.mxu0 0.0
    %v2994 = vand.u32 %v2688, 4294901760
    %2995 = vmatpush1.msra.mxu0 %v2994
    %2996 = vmatprep.subr.mxu0 0.0
    %v2997 = vand.u32 %v2689, 4294901760
    %2998 = vmatpush1.msra.mxu0 %v2997
    %2999 = vmatprep.subr.mxu0 0.0
    %v3000 = vand.u32 %v2690, 4294901760
    %3001 = vmatpush1.msra.mxu0 %v3000
    %3002 = vmatprep.subr.mxu0 0.0
    %v3003 = vand.u32 %v2691, 4294901760
    %3004 = vmatpush1.msra.mxu0 %v3003
    %3005 = vmatprep.subr.mxu0 0.0
    %3006 = vmatpush1.msra.mxu0 0.0
    %3007 = vmatprep.subr.mxu0 0.0
    %3008 = vmatpush1.msra.mxu0 0.0
    %3009 = vmatprep.subr.mxu0 0.0
    %3010 = vmatpush1.msra.mxu0 0.0
    %3011 = vmatprep.subr.mxu0 0.0
    %3012 = vmatpush1.msra.mxu0 0.0
    %3013 = vmatprep.subr.mxu0 0.0
    %3014 = vmatpush1.msra.mxu0 0.0
    %3015 = vmatprep.subr.mxu0 0.0
    %3016 = vmatpush1.msra.mxu0 0.0
    %3017 = vmatprep.subr.mxu0 0.0
    %3018 = vmatpush1.msra.mxu0 0.0
    %3019 = vmatprep.subr.mxu0 0.0
    %3020 = vmatpush1.msra.mxu0 0.0
    %3021 = vmatprep.subr.mxu0 0.0
    %3022 = vmatpush1.msra.mxu0 0.0
    %3023 = vmatprep.subr.mxu0 0.0
    %3024 = vmatpush1.msra.mxu0 0.0
    %3025 = vmatprep.subr.mxu0 0.0
    %3026 = vmatpush1.msra.mxu0 0.0
    %3027 = vmatprep.subr.mxu0 0.0
    %3028 = vmatpush1.msra.mxu0 0.0
    %3029 = vmatprep.subr.mxu0 0.0
    %3030 = vmatpush1.msra.mxu0 0.0
    %3031 = vmatprep.subr.mxu0 0.0
    %3032 = vmatpush1.msra.mxu0 0.0
    %3033 = vmatprep.subr.mxu0 0.0
    %3034 = vmatpush1.msra.mxu0 0.0
    %3035 = vmatprep.subr.mxu0 0.0
    %3036 = vmatpush1.msra.mxu0 0.0
    %3037 = vmatprep.subr.mxu0 0.0
    %3038 = vmatpush1.msra.mxu0 0.0
    %3039 = vmatprep.subr.mxu0 0.0
    %3040 = vmatpush1.msra.mxu0 0.0
    %3041 = vmatprep.subr.mxu0 0.0
    %3042 = vmatpush1.msra.mxu0 0.0
    %3043 = vmatprep.subr.mxu0 0.0
    %3044 = vmatpush1.msra.mxu0 0.0
    %3045 = vmatprep.subr.mxu0 0.0
    %3046 = vmatpush1.msra.mxu0 0.0
    %3047 = vmatprep.subr.mxu0 0.0
    %3048 = vmatpush1.msra.mxu0 0.0
    %3049 = vmatprep.subr.mxu0 0.0
    %3050 = vmatpush1.msra.mxu0 0.0
    %3051 = vmatprep.subr.mxu0 0.0
    %3052 = vmatpush1.msra.mxu0 0.0
    %3053 = vmatprep.mubr.f32.mxu0 0.0
    %v3054 = vand.u32 %v2697, 4294901760
    %v3055 = vsub.f32 %v2697, %v3054
    %v3056 = vand.u32 %v3055, 4294901760
    %3057 = vmatmul.mubr.f32.gmra.mrb[0].mxu0 %v3056
    %v3058 = vpop.f32.mrb[0].mxu0
    %v3059 = vadd.f32 %v2978, %v3058
    %v3060 = vpop.f32.mrb[0].mxu0
    %3061 = vdwg.mxu0
    %3062 = vmatprep.subr.mxu0 0.0
    %v3063 = vand.u32 %v2684, 4294901760
    %v3064 = vsub.f32 %v2684, %v3063
    %v3065 = vand.u32 %v3064, 4294901760
    %3066 = vmatpush1.msra.mxu0 %v3065
    %3067 = vmatprep.subr.mxu0 0.0
    %v3068 = vand.u32 %v2685, 4294901760
    %v3069 = vsub.f32 %v2685, %v3068
    %v3070 = vand.u32 %v3069, 4294901760
    %3071 = vmatpush1.msra.mxu0 %v3070
    %3072 = vmatprep.subr.mxu0 0.0
    %v3073 = vand.u32 %v2686, 4294901760
    %v3074 = vsub.f32 %v2686, %v3073
    %v3075 = vand.u32 %v3074, 4294901760
    %3076 = vmatpush1.msra.mxu0 %v3075
    %3077 = vmatprep.subr.mxu0 0.0
    %v3078 = vand.u32 %v2687, 4294901760
    %v3079 = vsub.f32 %v2687, %v3078
    %v3080 = vand.u32 %v3079, 4294901760
    %3081 = vmatpush1.msra.mxu0 %v3080
    %3082 = vmatprep.subr.mxu0 0.0
    %v3083 = vand.u32 %v2688, 4294901760
    %v3084 = vsub.f32 %v2688, %v3083
    %v3085 = vand.u32 %v3084, 4294901760
    %3086 = vmatpush1.msra.mxu0 %v3085
    %3087 = vmatprep.subr.mxu0 0.0
    %v3088 = vand.u32 %v2689, 4294901760
    %v3089 = vsub.f32 %v2689, %v3088
    %v3090 = vand.u32 %v3089, 4294901760
    %3091 = vmatpush1.msra.mxu0 %v3090
    %3092 = vmatprep.subr.mxu0 0.0
    %v3093 = vand.u32 %v2690, 4294901760
    %v3094 = vsub.f32 %v2690, %v3093
    %v3095 = vand.u32 %v3094, 4294901760
    %3096 = vmatpush1.msra.mxu0 %v3095
    %3097 = vmatprep.subr.mxu0 0.0
    %v3098 = vand.u32 %v2691, 4294901760
    %v3099 = vsub.f32 %v2691, %v3098
    %v3100 = vand.u32 %v3099, 4294901760
    %3101 = vmatpush1.msra.mxu0 %v3100
    %3102 = vmatprep.subr.mxu0 0.0
    %3103 = vmatpush1.msra.mxu0 0.0
    %3104 = vmatprep.subr.mxu0 0.0
    %3105 = vmatpush1.msra.mxu0 0.0
    %3106 = vmatprep.subr.mxu0 0.0
    %3107 = vmatpush1.msra.mxu0 0.0
    %3108 = vmatprep.subr.mxu0 0.0
    %3109 = vmatpush1.msra.mxu0 0.0
    %3110 = vmatprep.subr.mxu0 0.0
    %3111 = vmatpush1.msra.mxu0 0.0
    %3112 = vmatprep.subr.mxu0 0.0
    %3113 = vmatpush1.msra.mxu0 0.0
    %3114 = vmatprep.subr.mxu0 0.0
    %3115 = vmatpush1.msra.mxu0 0.0
    %3116 = vmatprep.subr.mxu0 0.0
    %3117 = vmatpush1.msra.mxu0 0.0
    %3118 = vmatprep.subr.mxu0 0.0
    %3119 = vmatpush1.msra.mxu0 0.0
    %3120 = vmatprep.subr.mxu0 0.0
    %3121 = vmatpush1.msra.mxu0 0.0
    %3122 = vmatprep.subr.mxu0 0.0
    %3123 = vmatpush1.msra.mxu0 0.0
    %3124 = vmatprep.subr.mxu0 0.0
    %3125 = vmatpush1.msra.mxu0 0.0
    %3126 = vmatprep.subr.mxu0 0.0
    %3127 = vmatpush1.msra.mxu0 0.0
    %3128 = vmatprep.subr.mxu0 0.0
    %3129 = vmatpush1.msra.mxu0 0.0
    %3130 = vmatprep.subr.mxu0 0.0
    %3131 = vmatpush1.msra.mxu0 0.0
    %3132 = vmatprep.subr.mxu0 0.0
    %3133 = vmatpush1.msra.mxu0 0.0
    %3134 = vmatprep.subr.mxu0 0.0
    %3135 = vmatpush1.msra.mxu0 0.0
    %3136 = vmatprep.subr.mxu0 0.0
    %3137 = vmatpush1.msra.mxu0 0.0
    %3138 = vmatprep.subr.mxu0 0.0
    %3139 = vmatpush1.msra.mxu0 0.0
    %3140 = vmatprep.subr.mxu0 0.0
    %3141 = vmatpush1.msra.mxu0 0.0
    %3142 = vmatprep.subr.mxu0 0.0
    %3143 = vmatpush1.msra.mxu0 0.0
    %3144 = vmatprep.subr.mxu0 0.0
    %3145 = vmatpush1.msra.mxu0 0.0
    %3146 = vmatprep.subr.mxu0 0.0
    %3147 = vmatpush1.msra.mxu0 0.0
    %3148 = vmatprep.subr.mxu0 0.0
    %3149 = vmatpush1.msra.mxu0 0.0
    %3150 = vmatprep.mubr.f32.mxu0 0.0
    %v3151 = vand.u32 %v2697, 4294901760
    %3152 = vmatmul.mubr.f32.gmra.mrb[0].mxu0 %v3151
    %v3153 = vpop.f32.mrb[0].mxu0
    %v3154 = vadd.f32 %v3059, %v3153
    %v3155 = vpop.f32.mrb[0].mxu0
    %3156 = vdwg.mxu0
    %3157 = vmatprep.subr.mxu0 0.0
    %v3158 = vand.u32 %v2684, 4294901760
    %3159 = vmatpush1.msra.mxu0 %v3158
    %3160 = vmatprep.subr.mxu0 0.0
    %v3161 = vand.u32 %v2685, 4294901760
    %3162 = vmatpush1.msra.mxu0 %v3161
    %3163 = vmatprep.subr.mxu0 0.0
    %v3164 = vand.u32 %v2686, 4294901760
    %3165 = vmatpush1.msra.mxu0 %v3164
    %3166 = vmatprep.subr.mxu0 0.0
    %v3167 = vand.u32 %v2687, 4294901760
    %3168 = vmatpush1.msra.mxu0 %v3167
    %3169 = vmatprep.subr.mxu0 0.0
    %v3170 = vand.u32 %v2688, 4294901760
    %3171 = vmatpush1.msra.mxu0 %v3170
    %3172 = vmatprep.subr.mxu0 0.0
    %v3173 = vand.u32 %v2689, 4294901760
    %3174 = vmatpush1.msra.mxu0 %v3173
    %3175 = vmatprep.subr.mxu0 0.0
    %v3176 = vand.u32 %v2690, 4294901760
    %3177 = vmatpush1.msra.mxu0 %v3176
    %3178 = vmatprep.subr.mxu0 0.0
    %v3179 = vand.u32 %v2691, 4294901760
    %3180 = vmatpush1.msra.mxu0 %v3179
    %3181 = vmatprep.subr.mxu0 0.0
    %3182 = vmatpush1.msra.mxu0 0.0
    %3183 = vmatprep.subr.mxu0 0.0
    %3184 = vmatpush1.msra.mxu0 0.0
    %3185 = vmatprep.subr.mxu0 0.0
    %3186 = vmatpush1.msra.mxu0 0.0
    %3187 = vmatprep.subr.mxu0 0.0
    %3188 = vmatpush1.msra.mxu0 0.0
    %3189 = vmatprep.subr.mxu0 0.0
    %3190 = vmatpush1.msra.mxu0 0.0
    %3191 = vmatprep.subr.mxu0 0.0
    %3192 = vmatpush1.msra.mxu0 0.0
    %3193 = vmatprep.subr.mxu0 0.0
    %3194 = vmatpush1.msra.mxu0 0.0
    %3195 = vmatprep.subr.mxu0 0.0
    %3196 = vmatpush1.msra.mxu0 0.0
    %3197 = vmatprep.subr.mxu0 0.0
    %3198 = vmatpush1.msra.mxu0 0.0
    %3199 = vmatprep.subr.mxu0 0.0
    %3200 = vmatpush1.msra.mxu0 0.0
    %3201 = vmatprep.subr.mxu0 0.0
    %3202 = vmatpush1.msra.mxu0 0.0
    %3203 = vmatprep.subr.mxu0 0.0
    %3204 = vmatpush1.msra.mxu0 0.0
    %3205 = vmatprep.subr.mxu0 0.0
    %3206 = vmatpush1.msra.mxu0 0.0
    %3207 = vmatprep.subr.mxu0 0.0
    %3208 = vmatpush1.msra.mxu0 0.0
    %3209 = vmatprep.subr.mxu0 0.0
    %3210 = vmatpush1.msra.mxu0 0.0
    %3211 = vmatprep.subr.mxu0 0.0
    %3212 = vmatpush1.msra.mxu0 0.0
    %3213 = vmatprep.subr.mxu0 0.0
    %3214 = vmatpush1.msra.mxu0 0.0
    %3215 = vmatprep.subr.mxu0 0.0
    %3216 = vmatpush1.msra.mxu0 0.0
    %3217 = vmatprep.subr.mxu0 0.0
    %3218 = vmatpush1.msra.mxu0 0.0
    %3219 = vmatprep.subr.mxu0 0.0
    %3220 = vmatpush1.msra.mxu0 0.0
    %3221 = vmatprep.subr.mxu0 0.0
    %3222 = vmatpush1.msra.mxu0 0.0
    %3223 = vmatprep.subr.mxu0 0.0
    %3224 = vmatpush1.msra.mxu0 0.0
    %3225 = vmatprep.subr.mxu0 0.0
    %3226 = vmatpush1.msra.mxu0 0.0
    %3227 = vmatprep.subr.mxu0 0.0
    %3228 = vmatpush1.msra.mxu0 0.0
    %3229 = vmatprep.mubr.f32.mxu0 0.0
    %v3230 = vand.u32 %v2697, 4294901760
    %3231 = vmatmul.mubr.f32.gmra.mrb[0].mxu0 %v3230
    %v3232 = vpop.f32.mrb[0].mxu0
    %v3233 = vadd.f32 %v3154, %v3232
    %v3234 = vpop.f32.mrb[0].mxu0
    %3235 = vdwg.mxu0
    %v3236 = vmul.f32 %v3233, %v20
    %v3237 = vlaneseq
    %v3238 = vshrl.u32 %v3237, 7
    %vm3239 = vcmp.lt.s32.totalorder %v3238, 6
    %vm3240 = vcmp.eq.s32.totalorder %v3238, 6
    %v3241 = vsel %vm3239, %v3236, -1e+30
    %v3242 = vrot.slane %v3241, 4
    %v3243 = vmax.f32 %v3241, %v3242
    %v3244 = vrot.slane %v3243, 2
    %v3245 = vmax.f32 %v3243, %v3244
    %v3246 = vrot.slane %v3245, 1
    %v3247 = vmax.f32 %v3245, %v3246
    %v3248 = vsub.f32 %v3241, %v3247
    %v3249 = vmul.f32 %v3248, 1.442695
    %v3250 = vpow.pop %v3249
    %v3251 = vrot.slane %v3250, 4
    %v3252 = vadd.f32 %v3250, %v3251
    %v3253 = vrot.slane %v3252, 2
    %v3254 = vadd.f32 %v3252, %v3253
    %v3255 = vrot.slane %v3254, 1
    %v3256 = vadd.f32 %v3254, %v3255
    %v3257 = vrcp.pop %v3256
    %v3258 = vmul.f32 %v3250, %v3257
    %v3259 = vtanh.pop %v3236
    %v3260 = vsel %vm3240, %v3259, 0.0
    %v3261 = vsel %vm3239, %v3258, %v3260
    %3262 = vst [vmem:[#allocation2] sm:$0xff] %v3261
    // Predicated region
    $region18: #{tpu_custom_call.1} parent=1 // pred_check
      _
    $region19: #{tpu_custom_call.1} parent=1 // pred_check_branch
      %3264 = sbr.rel (0) target = $region21
    $region20: #{tpu_custom_call.1} parent=1 // pred_region
      %s3266 = ssub.s32 128, 128
      %3267 = vsyncadd [#allocation3], %s3266
      %s3269 = sshll.u32 [#allocation2], 4
      %s3270 = int_to_ptr.vmem [resolvable:$true] %s3269
      %3272 = dma.vmem_to_hbm [thread:$0]  %s3270, 128, %s4, [#allocation3]
    $region21: #{tpu_custom_call.1} parent=1 // pred_fallthru
      _
    // Predicated region
    $region22: #{tpu_custom_call.1} parent=1 // pred_check
      _
    $region23: #{tpu_custom_call.1} parent=1 // pred_check_branch
      %3274 = sbr.rel (0) target = $region25
    $region24: #{tpu_custom_call.1} parent=1 // pred_region
      %3275 = dma.done [#allocation3], 128
    $region25: #{tpu_custom_call.1} parent=1 // pred_fallthru
      _
    %3276 = vsyncpa [#allocation3], 1

</llo_original>
